<compile_context>
chip_gen: v5e
topology: v5e:2x2
jax: 0.10.0
libtpu: 0.0.40
codegen_flags: <defaults>
</compile_context>

<pallas_src>
import numpy as np
import jax
import jax.numpy as jnp
from jax.experimental import pallas as pl
from jax.experimental.pallas import tpu as pltpu


D_PE = 16                      # d_pe in the module
N_TS = D_PE // 2               # number of timescales (8)
D_K = 2 * (D_PE + 16 + 16)     # 96
D_LINMAP = 128                 # lin_map output width


# --------------------------------- kernel ----------------------------------

def seft_kernel(
    fea_ref, times_ref, static_ref,                       # batch-tiled inputs
    inv_ts_ref, w_sin_ref, w_cos_ref, w_sens_ref,         # resident weights
    w_emb_ref, w1a_ref, w1b_ref, w2_ref, smalls_ref,
    out_ref,
):
    f32 = jnp.float32
    fea = fea_ref[...].astype(f32)            # (TB, V, T)  -- T on lanes
    times = times_ref[...].astype(f32)        # (TB, T)
    static = static_ref[...].astype(f32)      # (TB, S)

    # ---- one-pass dense masked statistics (== the per-sample nonzero() loop) ----
    mask = (fea != 0.0).astype(f32)                              # (TB, V, T)
    count_t = jnp.sum(mask, axis=1)                              # obs per timestep (TB, T)
    count_v = jnp.sum(mask, axis=2)                              # obs per sensor   (TB, V)
    n_obs = jnp.sum(count_v, axis=1, keepdims=True)              # (TB, 1)
    val_sum = jnp.sum(jnp.sum(fea, axis=1), axis=1, keepdims=True)  # (TB, 1)

    # ---- time positional encoding: timescales on sublanes (8), T on lanes ----
    inv_ts = inv_ts_ref[...][None, :, :]                         # (1, 8, 1)
    scaled = times[:, None, :] * inv_ts                          # (TB, 8, T)
    wgt = count_t[:, None, :]                                    # (TB, 1, T)
    sum_sin = jnp.sum(jnp.sin(scaled) * wgt, axis=2)             # (TB, 8)
    sum_cos = jnp.sum(jnp.cos(scaled) * wgt, axis=2)             # (TB, 8)

    # ---- packed small parameters (one resident (8, PW) array) ----
    d_fi = w1a_ref.shape[1]
    n_cls = out_ref.shape[1]
    wv = smalls_ref[0:1, :D_LINMAP]          # w_val   @ W_lm48[16:32]   (1, 128)
    bv = smalls_ref[1:2, :D_LINMAP]          # b_val   @ W_lm48[16:32]   (1, 128)
    b_lm = smalls_ref[2:3, :D_LINMAP]        # lin_map bias              (1, 128)
    b1 = smalls_ref[3:4, :d_fi]              # mlp bias (+ b_emb @ W1b)  (1, 144)
    b2 = smalls_ref[4:5, :n_cls]             # classifier bias           (1, C)

    # ---- head: lin_map on concat(f', f') folded into split/summed weights ----
    inv_n = jnp.where(n_obs > 0.0, 1.0 / jnp.maximum(n_obs, 1.0), 0.0)   # (TB, 1)
    h = (jnp.dot(sum_sin, w_sin_ref[...], preferred_element_type=f32)
         + jnp.dot(sum_cos, w_cos_ref[...], preferred_element_type=f32)
         + jnp.dot(count_v, w_sens_ref[...], preferred_element_type=f32)
         + val_sum * wv + n_obs * bv)
    h = inv_n * h + b_lm                                                  # (TB, 128)

    emb = jnp.dot(static, w_emb_ref[...], preferred_element_type=f32)    # (TB, 16)

    # mlp layer 1 on concat([h, emb]) == h @ W1a + emb @ W1b  (b_emb folded into b1)
    a = (jnp.dot(h, w1a_ref[...], preferred_element_type=f32)
         + jnp.dot(emb, w1b_ref[...], preferred_element_type=f32)
         + b1)
    a = jnp.maximum(a, 0.0)
    out = jnp.dot(a, w2_ref[...], preferred_element_type=f32) + b2
    out_ref[...] = out.astype(out_ref.dtype)


# ------------------------------ preparation ---------------------------------

def seft_prepare(params, *, max_len, d_inp):
    """One-time parameter / constant preparation (hoisted out of the hot path)."""
    ts = max_len ** np.linspace(0.0, 1.0, N_TS)                       # float64, like torch
    inv_ts = np.asarray(1.0 / ts, np.float32).reshape(N_TS, 1)        # (8, 1)
    v = np.arange(d_inp, dtype=np.float64)[:, None] / ts[None, :]
    pe_sens = np.concatenate([np.sin(v), np.cos(v)], axis=-1)         # (V, 16)

    # lin_map on concat([f', f'])  ==  f' @ (W_top + W_bot)
    W_lm = np.asarray(params["W_lm"], np.float32)                     # (96, 128)
    W_lm48 = W_lm[: D_K // 2] + W_lm[D_K // 2:]                       # (48, 128)
    w_sin = np.ascontiguousarray(W_lm48[0:N_TS])                      # (8, 128)
    w_cos = np.ascontiguousarray(W_lm48[N_TS:2 * N_TS])               # (8, 128)
    W_val_blk = W_lm48[D_PE:D_PE + 16]                                # (16, 128)
    W_sens_blk = W_lm48[D_PE + 16:]                                   # (16, 128)

    w_val = np.asarray(params["w_val"], np.float32).reshape(1, D_PE)
    b_val = np.asarray(params["b_val"], np.float32).reshape(1, D_PE)
    wv = w_val @ W_val_blk                                            # (1, 128)
    bv = b_val @ W_val_blk                                            # (1, 128)
    w_sens = (pe_sens @ W_val_blk.astype(np.float64) * 0.0            # keep dtype path clear
              + pe_sens @ W_sens_blk.astype(np.float64)).astype(np.float32)  # (V, 128)

    W1 = np.asarray(params["W1"], np.float32)                         # (144, 144)
    W1a = np.ascontiguousarray(W1[:D_LINMAP])                         # (128, 144)
    W1b = np.ascontiguousarray(W1[D_LINMAP:])                         # (16, 144)
    b_emb = np.asarray(params["b_emb"], np.float32).reshape(1, -1)    # (1, 16)
    b1 = np.asarray(params["b1"], np.float32).reshape(1, -1) + b_emb @ W1b  # (1, 144)
    b_lm = np.asarray(params["b_lm"], np.float32).reshape(1, -1)      # (1, 128)
    W2 = np.asarray(params["W2"], np.float32)                         # (144, C)
    b2 = np.asarray(params["b2"], np.float32).reshape(1, -1)          # (1, C)

    d_fi = W1.shape[0]
    n_classes = W2.shape[1]
    pw = max(128, int(np.ceil(max(d_fi, n_classes) / 128.0)) * 128)   # packed lane width
    smalls = np.zeros((8, pw), np.float32)
    smalls[0, :D_LINMAP] = wv
    smalls[1, :D_LINMAP] = bv
    smalls[2, :D_LINMAP] = b_lm
    smalls[3, :d_fi] = b1
    smalls[4, :n_classes] = b2

    return {
        "inv_ts": jnp.asarray(inv_ts),
        "w_sin": jnp.asarray(w_sin),
        "w_cos": jnp.asarray(w_cos),
        "w_sens": jnp.asarray(w_sens),
        "w_emb": jnp.asarray(params["W_emb"], jnp.float32),
        "w1a": jnp.asarray(W1a),
        "w1b": jnp.asarray(W1b),
        "w2": jnp.asarray(W2),
        "smalls": jnp.asarray(smalls),
    }


# -------------------------------- wrapper ------------------------------------

def _choose_batch_tile(B, V, T, itemsize, vmem_budget_bytes=12 << 20):
    """Largest multiple-of-8 divisor of B whose double-buffered fea block fits the
    budget, preferring >= 2 grid steps (pipelining + megacore)."""
    pad_v = -(-V // 8) * 8
    pad_t = -(-T // 128) * 128
    per_row = pad_v * pad_t * itemsize
    cands = [c for c in range(8, B + 1, 8) if B % c == 0]
    if not cands:
        return B
    fits = [c for c in cands if 2 * c * per_row <= vmem_budget_bytes]
    pool = fits if fits else [cands[0]]
    multi = [c for c in pool if c < B]
    pool = multi if multi else pool
    return max(pool)


def _row_spec(shape, tb, buffers=None):
    nd = len(shape)
    idx = lambda i, _nd=nd: (i,) + (0,) * (_nd - 1)
    if buffers is not None and buffers != 2:
        return pl.BlockSpec((tb,) + tuple(shape[1:]), idx,
                            pipeline_mode=pl.Buffered(buffers))
    return pl.BlockSpec((tb,) + tuple(shape[1:]), idx)


def _resident_spec(arr):
    nd = arr.ndim
    return pl.BlockSpec(arr.shape, lambda i, _nd=nd: (0,) * _nd)


def seft_forward(src, static, times, prep, lengths=None, *,
                 batch_tile=None, stream_dtype=None,
                 vmem_limit_bytes=None, fea_buffers=2):
    """src: (T, B, 2*d_inp); static: (B, S); times: (T, B).

    `lengths` is unused (as in the torch forward).  `stream_dtype=jnp.bfloat16`
    halves the HBM stream on v5e/v6e (mask=(fea!=0) is unaffected except for f32
    subnormals); arithmetic stays f32 in-kernel.
    """
    del lengths
    T, B, D2 = src.shape
    V = D2 // 2
    # (B, V, T): put the long T axis on the 128-wide lane dimension.
    fea = jnp.transpose(src[:, :, :V], (1, 2, 0))      # (B, V, T)
    times_b = jnp.transpose(times, (1, 0))             # (B, T)
    static = static.astype(jnp.float32)
    if stream_dtype is not None:
        fea = fea.astype(stream_dtype)
        times_b = times_b.astype(stream_dtype)
    n_classes = prep["w2"].shape[-1]

    if batch_tile is None:
        batch_tile = _choose_batch_tile(B, V, T, jnp.dtype(fea.dtype).itemsize)
    tb = batch_tile
    assert B % tb == 0 and (tb == B or tb % 8 == 0), \
        "batch tile must divide B and be a multiple of 8 (or the full batch)"
    grid = (B // tb,)

    weights = (prep["inv_ts"], prep["w_sin"], prep["w_cos"], prep["w_sens"],
               prep["w_emb"], prep["w1a"], prep["w1b"], prep["w2"], prep["smalls"])

    cp_kwargs = dict(dimension_semantics=("parallel",))
    if vmem_limit_bytes is not None:
        cp_kwargs["vmem_limit_bytes"] = vmem_limit_bytes

    out = pl.pallas_call(
        seft_kernel,
        out_shape=jax.ShapeDtypeStruct((B, n_classes), jnp.float32),
        grid=grid,
        in_specs=[_row_spec(fea.shape, tb, buffers=fea_buffers),
                  _row_spec(times_b.shape, tb),
                  _row_spec(static.shape, tb)]
                 + [_resident_spec(w) for w in weights],
        out_specs=_row_spec((B, n_classes), tb),
        compiler_params=pltpu.CompilerParams(**cp_kwargs),
    )(fea, times_b, static, *weights)
    return out


# ----------------------------- reference & test -----------------------------

def reference(src, static, times, params, max_len):
    """Faithful numpy re-implementation of SEFT.forward (incl. the nonzero loop)."""
    src = np.asarray(src, np.float64)
    static = np.asarray(static, np.float64)
    times = np.asarray(times, np.float64)
    T, B, D2 = src.shape
    V = D2 // 2
    fea = np.transpose(src, (1, 0, 2))[:, :, :V]
    ts = max_len ** np.linspace(0.0, 1.0, N_TS)

    w_val = np.asarray(params["w_val"], np.float64)
    b_val = np.asarray(params["b_val"], np.float64)
    out = np.zeros((B, D_K), np.float64)
    for i in range(B):
        nz = np.argwhere(fea[i] != 0)
        if nz.shape[0] == 0:
            continue
        values = fea[i][nz[:, 0], nz[:, 1]]
        tp = times[nz[:, 0], i]
        pe_t = np.concatenate([np.sin(tp[:, None] / ts), np.cos(tp[:, None] / ts)], -1)
        var = nz[:, 1].astype(np.float64)
        pe_v = np.concatenate([np.sin(var[:, None] / ts), np.cos(var[:, None] / ts)], -1)
        vals_ = values[:, None] * w_val[None, :] + b_val[None, :]
        unit = np.concatenate([pe_t, vals_, pe_v], 1)
        f_prime = unit.mean(0)
        out[i] = np.concatenate([f_prime, f_prime])

    h = out @ np.asarray(params["W_lm"], np.float64) + np.asarray(params["b_lm"], np.float64)
    emb = static @ np.asarray(params["W_emb"], np.float64) + np.asarray(params["b_emb"], np.float64)
    feat = np.concatenate([h, emb], 1)
    a = np.maximum(feat @ np.asarray(params["W1"], np.float64)
                   + np.asarray(params["b1"], np.float64), 0.0)
    return (a @ np.asarray(params["W2"], np.float64)
            + np.asarray(params["b2"], np.float64)).astype(np.float32)


def init_params(key, d_static, n_classes, dtype=jnp.float32):
    ks = jax.random.split(key, 10)
    d_fi = D_LINMAP + D_PE

    def w(k, shape, scale=0.1):
        return scale * jax.random.normal(k, shape, dtype)

    return {
        "w_val": w(ks[0], (D_PE,)),          # linear_value weight (16,1) stored as (16,)
        "b_val": w(ks[1], (D_PE,)),
        "W_lm": w(ks[2], (D_K, D_LINMAP)),   # lin_map, stored (in, out)
        "b_lm": w(ks[3], (D_LINMAP,)),
        "W_emb": w(ks[4], (d_static, D_PE)),
        "b_emb": w(ks[5], (D_PE,)),
        "W1": w(ks[6], (d_fi, d_fi)),
        "b1": w(ks[7], (d_fi,)),
        "W2": w(ks[8], (d_fi, n_classes)),
        "b2": w(ks[9], (n_classes,)),
    }


if __name__ == "__main__":
    key = jax.random.PRNGKey(0)
    T, B = 40, 16
    d_inp, d_static, n_classes = 10, 5, 2
    max_len = 100

    k1, k2, k3, k4, k5 = jax.random.split(key, 5)
    vals = jax.random.normal(k1, (T, B, d_inp), jnp.float32)
    obs_mask = (jax.random.uniform(k2, (T, B, d_inp)) < 0.5).astype(jnp.float32)
    obs_mask = obs_mask.at[:, B - 1, :].set(0.0)      # fully-empty sample -> `continue` path
    fea_part = vals * obs_mask
    src = jnp.concatenate([fea_part, obs_mask], axis=-1)            # (T, B, 2*d_inp)
    times = jnp.cumsum(jax.random.uniform(k3, (T, B), jnp.float32, 0.1, 1.0), axis=0)
    static = jax.random.normal(k4, (B, d_static), jnp.float32)
    params = init_params(k5, d_static, n_classes)

    prep = seft_prepare(params, max_len=max_len, d_inp=d_inp)       # hoisted, once
    out = seft_forward(src, static, times, prep)                    # auto tile -> grid=(2,)
    out = jax.block_until_ready(out)

    ref = reference(src, static, times, params, max_len)
    assert out.shape == (B, n_classes)
    assert not jnp.isnan(out).any()
    err = float(jnp.abs(out - jnp.asarray(ref)).max())
    assert err < 2e-3, f"max err = {err}"
    print("KERNEL_OK")
</pallas_src>

<mosaic_0001>
module attributes {stable_mosaic.version = 11 : i64} {
  func.func @seft_kernel(%arg0: i32, %arg1: memref<8x10x40xf32, #tpu.memory_space<vmem>>, %arg2: memref<8x40xf32, #tpu.memory_space<vmem>>, %arg3: memref<8x5xf32, #tpu.memory_space<vmem>>, %arg4: memref<8x1xf32, #tpu.memory_space<vmem>>, %arg5: memref<8x128xf32, #tpu.memory_space<vmem>>, %arg6: memref<8x128xf32, #tpu.memory_space<vmem>>, %arg7: memref<10x128xf32, #tpu.memory_space<vmem>>, %arg8: memref<5x16xf32, #tpu.memory_space<vmem>>, %arg9: memref<128x144xf32, #tpu.memory_space<vmem>>, %arg10: memref<16x144xf32, #tpu.memory_space<vmem>>, %arg11: memref<144x2xf32, #tpu.memory_space<vmem>>, %arg12: memref<8x256xf32, #tpu.memory_space<vmem>>, %arg13: memref<8x2xf32, #tpu.memory_space<vmem>>) attributes {dimension_semantics = [#tpu.dimension_semantics<parallel>], iteration_bounds = array<i64: 2>, scalar_prefetch = 0 : i64, scratch_operands = 0 : i64, tpu.core_type = #tpu.core_type<tc>, window_params = [{transform_indices = @transform_0, window_bounds = array<i64: 8, 10, 40>}, {transform_indices = @transform_1, window_bounds = array<i64: 8, 40>}, {transform_indices = @transform_2, window_bounds = array<i64: 8, 5>}, {pipeline_mode = #tpu.pipeline_mode<synchronous>, transform_indices = @transform_3, window_bounds = array<i64: 8, 1>}, {pipeline_mode = #tpu.pipeline_mode<synchronous>, transform_indices = @transform_4, window_bounds = array<i64: 8, 128>}, {pipeline_mode = #tpu.pipeline_mode<synchronous>, transform_indices = @transform_5, window_bounds = array<i64: 8, 128>}, {pipeline_mode = #tpu.pipeline_mode<synchronous>, transform_indices = @transform_6, window_bounds = array<i64: 10, 128>}, {pipeline_mode = #tpu.pipeline_mode<synchronous>, transform_indices = @transform_7, window_bounds = array<i64: 5, 16>}, {pipeline_mode = #tpu.pipeline_mode<synchronous>, transform_indices = @transform_8, window_bounds = array<i64: 128, 144>}, {pipeline_mode = #tpu.pipeline_mode<synchronous>, transform_indices = @transform_9, window_bounds = array<i64: 16, 144>}, {pipeline_mode = #tpu.pipeline_mode<synchronous>, transform_indices = @transform_10, window_bounds = array<i64: 144, 2>}, {pipeline_mode = #tpu.pipeline_mode<synchronous>, transform_indices = @transform_11, window_bounds = array<i64: 8, 256>}, {transform_indices = @transform_12, window_bounds = array<i64: 8, 2>}]} {
    %c0 = arith.constant 0 : index
    %c0_0 = arith.constant 0 : index
    %c0_1 = arith.constant 0 : index
    %0 = vector.load %arg1[%c0, %c0_0, %c0_1] : memref<8x10x40xf32, #tpu.memory_space<vmem>>, vector<8x10x40xf32>
    %c0_2 = arith.constant 0 : index
    %c0_3 = arith.constant 0 : index
    %1 = vector.load %arg2[%c0_2, %c0_3] : memref<8x40xf32, #tpu.memory_space<vmem>>, vector<8x40xf32>
    %c0_4 = arith.constant 0 : index
    %c0_5 = arith.constant 0 : index
    %2 = vector.load %arg3[%c0_4, %c0_5] : memref<8x5xf32, #tpu.memory_space<vmem>>, vector<8x5xf32>
    %cst = arith.constant 0.000000e+00 : f32
    %3 = vector.broadcast %cst : f32 to vector<8x10x40xf32>
    %4 = arith.cmpf one, %0, %3 : vector<8x10x40xf32>
    %5 = arith.extui %4 : vector<8x10x40xi1> to vector<8x10x40xi32>
    %6 = arith.sitofp %5 : vector<8x10x40xi32> to vector<8x10x40xf32>
    %cst_6 = arith.constant dense<0.000000e+00> : vector<8x40xf32>
    %7 = vector.multi_reduction <add>, %6, %cst_6 [1] : vector<8x10x40xf32> to vector<8x40xf32>
    %cst_7 = arith.constant dense<0.000000e+00> : vector<8x10xf32>
    %8 = vector.multi_reduction <add>, %6, %cst_7 [2] : vector<8x10x40xf32> to vector<8x10xf32>
    %cst_8 = arith.constant dense<0.000000e+00> : vector<8xf32>
    %9 = vector.multi_reduction <add>, %8, %cst_8 [1] : vector<8x10xf32> to vector<8xf32>
    %10 = vector.shape_cast %9 : vector<8xf32> to vector<8x1xf32>
    %cst_9 = arith.constant dense<0.000000e+00> : vector<8x40xf32>
    %11 = vector.multi_reduction <add>, %0, %cst_9 [1] : vector<8x10x40xf32> to vector<8x40xf32>
    %cst_10 = arith.constant dense<0.000000e+00> : vector<8xf32>
    %12 = vector.multi_reduction <add>, %11, %cst_10 [1] : vector<8x40xf32> to vector<8xf32>
    %13 = vector.shape_cast %12 : vector<8xf32> to vector<8x1xf32>
    %c0_11 = arith.constant 0 : index
    %c0_12 = arith.constant 0 : index
    %14 = vector.load %arg4[%c0_11, %c0_12] : memref<8x1xf32, #tpu.memory_space<vmem>>, vector<8x1xf32>
    %15 = vector.shape_cast %14 : vector<8x1xf32> to vector<1x8x1xf32>
    %16 = vector.shape_cast %1 : vector<8x40xf32> to vector<8x1x40xf32>
    %17 = vector.broadcast %16 : vector<8x1x40xf32> to vector<8x8x40xf32>
    %18 = vector.broadcast %15 : vector<1x8x1xf32> to vector<8x8x40xf32>
    %19 = arith.mulf %17, %18 : vector<8x8x40xf32>
    %20 = vector.shape_cast %7 : vector<8x40xf32> to vector<8x1x40xf32>
    %21 = math.sin %19 : vector<8x8x40xf32>
    %22 = vector.broadcast %20 : vector<8x1x40xf32> to vector<8x8x40xf32>
    %23 = arith.mulf %21, %22 : vector<8x8x40xf32>
    %cst_13 = arith.constant dense<0.000000e+00> : vector<8x8xf32>
    %24 = vector.multi_reduction <add>, %23, %cst_13 [2] : vector<8x8x40xf32> to vector<8x8xf32>
    %25 = math.cos %19 : vector<8x8x40xf32>
    %26 = vector.broadcast %20 : vector<8x1x40xf32> to vector<8x8x40xf32>
    %27 = arith.mulf %25, %26 : vector<8x8x40xf32>
    %cst_14 = arith.constant dense<0.000000e+00> : vector<8x8xf32>
    %28 = vector.multi_reduction <add>, %27, %cst_14 [2] : vector<8x8x40xf32> to vector<8x8xf32>
    %c0_15 = arith.constant 0 : index
    %c0_16 = arith.constant 0 : index
    %29 = vector.load %arg12[%c0_15, %c0_16] : memref<8x256xf32, #tpu.memory_space<vmem>>, vector<1x128xf32>
    %c1 = arith.constant 1 : index
    %c0_17 = arith.constant 0 : index
    %30 = vector.load %arg12[%c1, %c0_17] : memref<8x256xf32, #tpu.memory_space<vmem>>, vector<1x128xf32>
    %c2 = arith.constant 2 : index
    %c0_18 = arith.constant 0 : index
    %31 = vector.load %arg12[%c2, %c0_18] : memref<8x256xf32, #tpu.memory_space<vmem>>, vector<1x128xf32>
    %c3 = arith.constant 3 : index
    %c0_19 = arith.constant 0 : index
    %32 = vector.load %arg12[%c3, %c0_19] : memref<8x256xf32, #tpu.memory_space<vmem>>, vector<1x144xf32>
    %c4 = arith.constant 4 : index
    %c0_20 = arith.constant 0 : index
    %33 = vector.load %arg12[%c4, %c0_20] : memref<8x256xf32, #tpu.memory_space<vmem>>, vector<1x2xf32>
    %cst_21 = arith.constant 0.000000e+00 : f32
    %34 = vector.broadcast %cst_21 : f32 to vector<8x1xf32>
    %35 = arith.cmpf ogt, %10, %34 : vector<8x1xf32>
    %cst_22 = arith.constant 1.000000e+00 : f32
    %36 = vector.broadcast %cst_22 : f32 to vector<8x1xf32>
    %37 = arith.maximumf %10, %36 : vector<8x1xf32>
    %cst_23 = arith.constant 1.000000e+00 : f32
    %38 = vector.broadcast %cst_23 : f32 to vector<8x1xf32>
    %39 = arith.divf %38, %37 : vector<8x1xf32>
    %cst_24 = arith.constant 0.000000e+00 : f32
    %40 = vector.broadcast %cst_24 : f32 to vector<8x1xf32>
    %41 = arith.select %35, %39, %40 : vector<8x1xi1>, vector<8x1xf32>
    %c0_25 = arith.constant 0 : index
    %c0_26 = arith.constant 0 : index
    %42 = vector.load %arg5[%c0_25, %c0_26] : memref<8x128xf32, #tpu.memory_space<vmem>>, vector<8x128xf32>
    %cst_27 = arith.constant dense<0.000000e+00> : vector<8x128xf32>
    %43 = tpu.matmul %24, %42, %cst_27 {dimension_numbers = #tpu.dot_dimension_numbers<[1], [0], [0], [1], [0, 0, 1, 1], [], []>} : vector<8x8xf32>, vector<8x128xf32>, vector<8x128xf32> -> vector<8x128xf32>
    %c0_28 = arith.constant 0 : index
    %c0_29 = arith.constant 0 : index
    %44 = vector.load %arg6[%c0_28, %c0_29] : memref<8x128xf32, #tpu.memory_space<vmem>>, vector<8x128xf32>
    %cst_30 = arith.constant dense<0.000000e+00> : vector<8x128xf32>
    %45 = tpu.matmul %28, %44, %cst_30 {dimension_numbers = #tpu.dot_dimension_numbers<[1], [0], [0], [1], [0, 0, 1, 1], [], []>} : vector<8x8xf32>, vector<8x128xf32>, vector<8x128xf32> -> vector<8x128xf32>
    %46 = arith.addf %43, %45 : vector<8x128xf32>
    %c0_31 = arith.constant 0 : index
    %c0_32 = arith.constant 0 : index
    %47 = vector.load %arg7[%c0_31, %c0_32] : memref<10x128xf32, #tpu.memory_space<vmem>>, vector<10x128xf32>
    %cst_33 = arith.constant dense<0.000000e+00> : vector<8x128xf32>
    %48 = tpu.matmul %8, %47, %cst_33 {dimension_numbers = #tpu.dot_dimension_numbers<[1], [0], [0], [1], [0, 0, 1, 1], [], []>} : vector<8x10xf32>, vector<10x128xf32>, vector<8x128xf32> -> vector<8x128xf32>
    %49 = arith.addf %46, %48 : vector<8x128xf32>
    %50 = vector.broadcast %13 : vector<8x1xf32> to vector<8x128xf32>
    %51 = vector.broadcast %29 : vector<1x128xf32> to vector<8x128xf32>
    %52 = arith.mulf %50, %51 : vector<8x128xf32>
    %53 = arith.addf %49, %52 : vector<8x128xf32>
    %54 = vector.broadcast %10 : vector<8x1xf32> to vector<8x128xf32>
    %55 = vector.broadcast %30 : vector<1x128xf32> to vector<8x128xf32>
    %56 = arith.mulf %54, %55 : vector<8x128xf32>
    %57 = arith.addf %53, %56 : vector<8x128xf32>
    %58 = vector.broadcast %41 : vector<8x1xf32> to vector<8x128xf32>
    %59 = arith.mulf %58, %57 : vector<8x128xf32>
    %60 = vector.broadcast %31 : vector<1x128xf32> to vector<8x128xf32>
    %61 = arith.addf %59, %60 : vector<8x128xf32>
    %c0_34 = arith.constant 0 : index
    %c0_35 = arith.constant 0 : index
    %62 = vector.load %arg8[%c0_34, %c0_35] : memref<5x16xf32, #tpu.memory_space<vmem>>, vector<5x16xf32>
    %cst_36 = arith.constant dense<0.000000e+00> : vector<8x16xf32>
    %63 = tpu.matmul %2, %62, %cst_36 {dimension_numbers = #tpu.dot_dimension_numbers<[1], [0], [0], [1], [0, 0, 1, 1], [], []>} : vector<8x5xf32>, vector<5x16xf32>, vector<8x16xf32> -> vector<8x16xf32>
    %c0_37 = arith.constant 0 : index
    %c0_38 = arith.constant 0 : index
    %64 = vector.load %arg9[%c0_37, %c0_38] : memref<128x144xf32, #tpu.memory_space<vmem>>, vector<128x144xf32>
    %cst_39 = arith.constant dense<0.000000e+00> : vector<8x144xf32>
    %65 = tpu.matmul %61, %64, %cst_39 {dimension_numbers = #tpu.dot_dimension_numbers<[1], [0], [0], [1], [0, 0, 1, 1], [], []>} : vector<8x128xf32>, vector<128x144xf32>, vector<8x144xf32> -> vector<8x144xf32>
    %c0_40 = arith.constant 0 : index
    %c0_41 = arith.constant 0 : index
    %66 = vector.load %arg10[%c0_40, %c0_41] : memref<16x144xf32, #tpu.memory_space<vmem>>, vector<16x144xf32>
    %cst_42 = arith.constant dense<0.000000e+00> : vector<8x144xf32>
    %67 = tpu.matmul %63, %66, %cst_42 {dimension_numbers = #tpu.dot_dimension_numbers<[1], [0], [0], [1], [0, 0, 1, 1], [], []>} : vector<8x16xf32>, vector<16x144xf32>, vector<8x144xf32> -> vector<8x144xf32>
    %68 = arith.addf %65, %67 : vector<8x144xf32>
    %69 = vector.broadcast %32 : vector<1x144xf32> to vector<8x144xf32>
    %70 = arith.addf %68, %69 : vector<8x144xf32>
    %cst_43 = arith.constant 0.000000e+00 : f32
    %71 = vector.broadcast %cst_43 : f32 to vector<8x144xf32>
    %72 = arith.maximumf %70, %71 : vector<8x144xf32>
    %c0_44 = arith.constant 0 : index
    %c0_45 = arith.constant 0 : index
    %73 = vector.load %arg11[%c0_44, %c0_45] : memref<144x2xf32, #tpu.memory_space<vmem>>, vector<144x2xf32>
    %cst_46 = arith.constant dense<0.000000e+00> : vector<8x2xf32>
    %74 = tpu.matmul %72, %73, %cst_46 {dimension_numbers = #tpu.dot_dimension_numbers<[1], [0], [0], [1], [0, 0, 1, 1], [], []>} : vector<8x144xf32>, vector<144x2xf32>, vector<8x2xf32> -> vector<8x2xf32>
    %75 = vector.broadcast %33 : vector<1x2xf32> to vector<8x2xf32>
    %76 = arith.addf %74, %75 : vector<8x2xf32>
    %c0_47 = arith.constant 0 : index
    %c0_48 = arith.constant 0 : index
    %77 = vector.load %arg13[%c0_47, %c0_48] : memref<8x2xf32, #tpu.memory_space<vmem>>, vector<8x2xf32>
    tpu.vector_store %arg13[%c0_47, %c0_48], %76 {strides = array<i32>} : memref<8x2xf32, #tpu.memory_space<vmem>>, vector<8x2xf32>,
    return
  }
  func.func @transform_0(%arg0: i32) -> (i32, i32, i32) {
    %c0_i32 = arith.constant 0 : i32
    %c0_i32_0 = arith.constant 0 : i32
    %c0_i32_1 = arith.constant 0 : i32
    return %arg0, %c0_i32, %c0_i32_0 : i32, i32, i32
  }
  func.func @transform_1(%arg0: i32) -> (i32, i32) {
    %c0_i32 = arith.constant 0 : i32
    %c0_i32_0 = arith.constant 0 : i32
    return %arg0, %c0_i32 : i32, i32
  }
  func.func @transform_2(%arg0: i32) -> (i32, i32) {
    %c0_i32 = arith.constant 0 : i32
    %c0_i32_0 = arith.constant 0 : i32
    return %arg0, %c0_i32 : i32, i32
  }
  func.func @transform_3(%arg0: i32) -> (i32, i32) {
    %c0_i32 = arith.constant 0 : i32
    %c0_i32_0 = arith.constant 0 : i32
    %c0_i32_1 = arith.constant 0 : i32
    return %c0_i32, %c0_i32_0 : i32, i32
  }
  func.func @transform_4(%arg0: i32) -> (i32, i32) {
    %c0_i32 = arith.constant 0 : i32
    %c0_i32_0 = arith.constant 0 : i32
    %c0_i32_1 = arith.constant 0 : i32
    return %c0_i32, %c0_i32_0 : i32, i32
  }
  func.func @transform_5(%arg0: i32) -> (i32, i32) {
    %c0_i32 = arith.constant 0 : i32
    %c0_i32_0 = arith.constant 0 : i32
    %c0_i32_1 = arith.constant 0 : i32
    return %c0_i32, %c0_i32_0 : i32, i32
  }
  func.func @transform_6(%arg0: i32) -> (i32, i32) {
    %c0_i32 = arith.constant 0 : i32
    %c0_i32_0 = arith.constant 0 : i32
    %c0_i32_1 = arith.constant 0 : i32
    return %c0_i32, %c0_i32_0 : i32, i32
  }
  func.func @transform_7(%arg0: i32) -> (i32, i32) {
    %c0_i32 = arith.constant 0 : i32
    %c0_i32_0 = arith.constant 0 : i32
    %c0_i32_1 = arith.constant 0 : i32
    return %c0_i32, %c0_i32_0 : i32, i32
  }
  func.func @transform_8(%arg0: i32) -> (i32, i32) {
    %c0_i32 = arith.constant 0 : i32
    %c0_i32_0 = arith.constant 0 : i32
    %c0_i32_1 = arith.constant 0 : i32
    return %c0_i32, %c0_i32_0 : i32, i32
  }
  func.func @transform_9(%arg0: i32) -> (i32, i32) {
    %c0_i32 = arith.constant 0 : i32
    %c0_i32_0 = arith.constant 0 : i32
    %c0_i32_1 = arith.constant 0 : i32
    return %c0_i32, %c0_i32_0 : i32, i32
  }
  func.func @transform_10(%arg0: i32) -> (i32, i32) {
    %c0_i32 = arith.constant 0 : i32
    %c0_i32_0 = arith.constant 0 : i32
    %c0_i32_1 = arith.constant 0 : i32
    return %c0_i32, %c0_i32_0 : i32, i32
  }
  func.func @transform_11(%arg0: i32) -> (i32, i32) {
    %c0_i32 = arith.constant 0 : i32
    %c0_i32_0 = arith.constant 0 : i32
    %c0_i32_1 = arith.constant 0 : i32
    return %c0_i32, %c0_i32_0 : i32, i32
  }
  func.func @transform_12(%arg0: i32) -> (i32, i32) {
    %c0_i32 = arith.constant 0 : i32
    %c0_i32_0 = arith.constant 0 : i32
    return %arg0, %c0_i32 : i32, i32
  }
}

</mosaic_0001>

<llo_original>
// kernel: tpu_custom_call.1
$region0: #{tpu_custom_call.1}
  #allocation0 [shape = 'u32[]', space=smem, size = 0x4, offset = 0x4, fixed_abs, tag = 'smem constant byte address 0x4 - core index']
  #allocation1 [shape = 'u32[72,128]{1,0:T(1,128)}', space=vmem, size = 0x9000, scoped, tag = 'internal scratch']
  %s0 = inlined_call_operand.vmem [shape: f32[16,10,40], index: 0, kind: input, shape index: {}]
  %s1 = inlined_call_operand.vmem [shape: f32[16,40], index: 1, kind: input, shape index: {}]
  %s2 = inlined_call_operand.vmem [shape: f32[16,5], index: 2, kind: input, shape index: {}]
  %s3 = inlined_call_operand.vmem [shape: f32[8,1], index: 3, kind: input, shape index: {}]
  %s4 = inlined_call_operand.vmem [shape: f32[8,128], index: 4, kind: input, shape index: {}]
  %s5 = inlined_call_operand.vmem [shape: f32[8,128], index: 5, kind: input, shape index: {}]
  %s6 = inlined_call_operand.vmem [shape: f32[10,128], index: 6, kind: input, shape index: {}]
  %s7 = inlined_call_operand.vmem [shape: f32[5,16], index: 7, kind: input, shape index: {}]
  %s8 = inlined_call_operand.vmem [shape: f32[128,144], index: 8, kind: input, shape index: {}]
  %s9 = inlined_call_operand.vmem [shape: f32[16,144], index: 9, kind: input, shape index: {}]
  %s10 = inlined_call_operand.vmem [shape: f32[144,2], index: 10, kind: input, shape index: {}]
  %s11 = inlined_call_operand.vmem [shape: f32[8,256], index: 11, kind: input, shape index: {}]
  %s12 = inlined_call_operand.vmem [shape: f32[16,2], index: 12, kind: output, shape index: {}]
  %s13 = sld [smem:[#allocation0]]
  $region81: #{tpu_custom_call.1} parent=0
    _
  %s15 = ssub.s32 1, %s13
  %s16 = scalar_select 0, %s15, %s13
  loop: start=0, step=1, limit=4
  $region2: #{tpu_custom_call.1} parent=0 // loop_pre_header
    _
  $region3: #{tpu_custom_call.1} parent=0 // loop_header
    %s18 = sphi 0, %s22
    %p19 = scmp.ge.s32.totalorder %s18, 4
    %s28 = sphi 0, %s30
    %s31 = sphi 0, %s28
    %s32 = sphi 0, %s31
    %s48 = sphi 0, %s32
    %s54 = sphi 0, %s56
    %s57 = sphi 0, %s54
    %s58 = sphi 0, %s57
    %s74 = sphi 0, %s58
    %s80 = sphi 0, %s82
    %s83 = sphi 0, %s80
    %s84 = sphi 0, %s83
    %s100 = sphi 0, %s84
    %s104 = sphi 0, %s104
    %s106 = sphi 0, %s104
    %s107 = sphi 0, %s106
    %s121 = sphi 0, %s107
    %s125 = sphi 0, %s125
    %s127 = sphi 0, %s125
    %s128 = sphi 0, %s127
    %s142 = sphi 0, %s128
    %s146 = sphi 0, %s146
    %s148 = sphi 0, %s146
    %s149 = sphi 0, %s148
    %s163 = sphi 0, %s149
    %s167 = sphi 0, %s167
    %s169 = sphi 0, %s167
    %s170 = sphi 0, %s169
    %s184 = sphi 0, %s170
    %s188 = sphi 0, %s188
    %s190 = sphi 0, %s188
    %s191 = sphi 0, %s190
    %s205 = sphi 0, %s191
    %s209 = sphi 0, %s209
    %s211 = sphi 0, %s209
    %s212 = sphi 0, %s211
    %s226 = sphi 0, %s212
    %s230 = sphi 0, %s230
    %s232 = sphi 0, %s230
    %s233 = sphi 0, %s232
    %s247 = sphi 0, %s233
    %s251 = sphi 0, %s251
    %s253 = sphi 0, %s251
    %s254 = sphi 0, %s253
    %s268 = sphi 0, %s254
    %s272 = sphi 0, %s272
    %s274 = sphi 0, %s272
    %s275 = sphi 0, %s274
    %s289 = sphi 0, %s275
    %s295 = sphi 0, %s297
    %s298 = sphi 0, %s295
    %s299 = sphi 0, %s298
    %s315 = sphi 0, %s299
  $region4: #{tpu_custom_call.1} parent=0 // loop_header_branch
    %21 = sbr.rel (%p19) target = $region8
  $region5: #{tpu_custom_call.1} parent=0 // loop_body
    %s23 = ssub.s32 %s18, 1
    %s24 = ssub.s32 %s18, 2
    %s25 = sadd.s32 %s18, 1
    %s26 = ssub.s32 %s18, %s25
    %p27 = scmp.eq.s32.totalorder %s26, 0
    %s29 = sadd.s32 %s28, 1
    %s30 = scalar_select %p27, %s28, %s29
    %p33 = pneg %p27
    %p34 = scmp.eq.s32.totalorder %s18, 1
    %p35 = por %p33, %p34
    %p36 = scmp.ne.s32.totalorder %s28, %s31
    %p37 = scmp.eq.s32.totalorder %s18, 0
    %p38 = por %p36, %p37
    %p39 = scmp.ne.s32.totalorder %s28, %s31
    %p40 = scmp.eq.s32.totalorder %s23, 1
    %p41 = por %p39, %p40
    %p42 = scmp.ne.s32.totalorder %s31, %s32
    %p43 = scmp.eq.s32.totalorder %s23, 0
    %p44 = por %p42, %p43
    %p45 = scmp.ne.s32.totalorder %s31, %s32
    %p46 = scmp.eq.s32.totalorder %s24, 1
    %p47 = por %p45, %p46
    %p49 = scmp.ne.s32.totalorder %s32, %s48
    %p50 = scmp.eq.s32.totalorder %s24, 0
    %p51 = por %p49, %p50
    %s52 = ssub.s32 %s18, %s25
    %p53 = scmp.eq.s32.totalorder %s52, 0
    %s55 = sadd.s32 %s54, 1
    %s56 = scalar_select %p53, %s54, %s55
    %p59 = pneg %p53
    %p60 = scmp.eq.s32.totalorder %s18, 1
    %p61 = por %p59, %p60
    %p62 = scmp.ne.s32.totalorder %s54, %s57
    %p63 = scmp.eq.s32.totalorder %s18, 0
    %p64 = por %p62, %p63
    %p65 = scmp.ne.s32.totalorder %s54, %s57
    %p66 = scmp.eq.s32.totalorder %s23, 1
    %p67 = por %p65, %p66
    %p68 = scmp.ne.s32.totalorder %s57, %s58
    %p69 = scmp.eq.s32.totalorder %s23, 0
    %p70 = por %p68, %p69
    %p71 = scmp.ne.s32.totalorder %s57, %s58
    %p72 = scmp.eq.s32.totalorder %s24, 1
    %p73 = por %p71, %p72
    %p75 = scmp.ne.s32.totalorder %s58, %s74
    %p76 = scmp.eq.s32.totalorder %s24, 0
    %p77 = por %p75, %p76
    %s78 = ssub.s32 %s18, %s25
    %p79 = scmp.eq.s32.totalorder %s78, 0
    %s81 = sadd.s32 %s80, 1
    %s82 = scalar_select %p79, %s80, %s81
    %p85 = pneg %p79
    %p86 = scmp.eq.s32.totalorder %s18, 1
    %p87 = por %p85, %p86
    %p88 = scmp.ne.s32.totalorder %s80, %s83
    %p89 = scmp.eq.s32.totalorder %s18, 0
    %p90 = por %p88, %p89
    %p91 = scmp.ne.s32.totalorder %s80, %s83
    %p92 = scmp.eq.s32.totalorder %s23, 1
    %p93 = por %p91, %p92
    %p94 = scmp.ne.s32.totalorder %s83, %s84
    %p95 = scmp.eq.s32.totalorder %s23, 0
    %p96 = por %p94, %p95
    %p97 = scmp.ne.s32.totalorder %s83, %s84
    %p98 = scmp.eq.s32.totalorder %s24, 1
    %p99 = por %p97, %p98
    %p101 = scmp.ne.s32.totalorder %s84, %s100
    %p102 = scmp.eq.s32.totalorder %s24, 0
    %p103 = por %p101, %p102
    %s105 = sadd.s32 %s104, 1
    %p108 = scmp.eq.s32.totalorder %s18, 1
    %p109 = scmp.ne.s32.totalorder %s104, %s106
    %p110 = scmp.eq.s32.totalorder %s18, 0
    %p111 = por %p109, %p110
    %p112 = scmp.ne.s32.totalorder %s104, %s106
    %p113 = scmp.eq.s32.totalorder %s23, 1
    %p114 = por %p112, %p113
    %p115 = scmp.ne.s32.totalorder %s106, %s107
    %p116 = scmp.eq.s32.totalorder %s23, 0
    %p117 = por %p115, %p116
    %p118 = scmp.ne.s32.totalorder %s106, %s107
    %p119 = scmp.eq.s32.totalorder %s24, 1
    %p120 = por %p118, %p119
    %p122 = scmp.ne.s32.totalorder %s107, %s121
    %p123 = scmp.eq.s32.totalorder %s24, 0
    %p124 = por %p122, %p123
    %s126 = sadd.s32 %s125, 1
    %p129 = scmp.eq.s32.totalorder %s18, 1
    %p130 = scmp.ne.s32.totalorder %s125, %s127
    %p131 = scmp.eq.s32.totalorder %s18, 0
    %p132 = por %p130, %p131
    %p133 = scmp.ne.s32.totalorder %s125, %s127
    %p134 = scmp.eq.s32.totalorder %s23, 1
    %p135 = por %p133, %p134
    %p136 = scmp.ne.s32.totalorder %s127, %s128
    %p137 = scmp.eq.s32.totalorder %s23, 0
    %p138 = por %p136, %p137
    %p139 = scmp.ne.s32.totalorder %s127, %s128
    %p140 = scmp.eq.s32.totalorder %s24, 1
    %p141 = por %p139, %p140
    %p143 = scmp.ne.s32.totalorder %s128, %s142
    %p144 = scmp.eq.s32.totalorder %s24, 0
    %p145 = por %p143, %p144
    %s147 = sadd.s32 %s146, 1
    %p150 = scmp.eq.s32.totalorder %s18, 1
    %p151 = scmp.ne.s32.totalorder %s146, %s148
    %p152 = scmp.eq.s32.totalorder %s18, 0
    %p153 = por %p151, %p152
    %p154 = scmp.ne.s32.totalorder %s146, %s148
    %p155 = scmp.eq.s32.totalorder %s23, 1
    %p156 = por %p154, %p155
    %p157 = scmp.ne.s32.totalorder %s148, %s149
    %p158 = scmp.eq.s32.totalorder %s23, 0
    %p159 = por %p157, %p158
    %p160 = scmp.ne.s32.totalorder %s148, %s149
    %p161 = scmp.eq.s32.totalorder %s24, 1
    %p162 = por %p160, %p161
    %p164 = scmp.ne.s32.totalorder %s149, %s163
    %p165 = scmp.eq.s32.totalorder %s24, 0
    %p166 = por %p164, %p165
    %s168 = sadd.s32 %s167, 1
    %p171 = scmp.eq.s32.totalorder %s18, 1
    %p172 = scmp.ne.s32.totalorder %s167, %s169
    %p173 = scmp.eq.s32.totalorder %s18, 0
    %p174 = por %p172, %p173
    %p175 = scmp.ne.s32.totalorder %s167, %s169
    %p176 = scmp.eq.s32.totalorder %s23, 1
    %p177 = por %p175, %p176
    %p178 = scmp.ne.s32.totalorder %s169, %s170
    %p179 = scmp.eq.s32.totalorder %s23, 0
    %p180 = por %p178, %p179
    %p181 = scmp.ne.s32.totalorder %s169, %s170
    %p182 = scmp.eq.s32.totalorder %s24, 1
    %p183 = por %p181, %p182
    %p185 = scmp.ne.s32.totalorder %s170, %s184
    %p186 = scmp.eq.s32.totalorder %s24, 0
    %p187 = por %p185, %p186
    %s189 = sadd.s32 %s188, 1
    %p192 = scmp.eq.s32.totalorder %s18, 1
    %p193 = scmp.ne.s32.totalorder %s188, %s190
    %p194 = scmp.eq.s32.totalorder %s18, 0
    %p195 = por %p193, %p194
    %p196 = scmp.ne.s32.totalorder %s188, %s190
    %p197 = scmp.eq.s32.totalorder %s23, 1
    %p198 = por %p196, %p197
    %p199 = scmp.ne.s32.totalorder %s190, %s191
    %p200 = scmp.eq.s32.totalorder %s23, 0
    %p201 = por %p199, %p200
    %p202 = scmp.ne.s32.totalorder %s190, %s191
    %p203 = scmp.eq.s32.totalorder %s24, 1
    %p204 = por %p202, %p203
    %p206 = scmp.ne.s32.totalorder %s191, %s205
    %p207 = scmp.eq.s32.totalorder %s24, 0
    %p208 = por %p206, %p207
    %s210 = sadd.s32 %s209, 1
    %p213 = scmp.eq.s32.totalorder %s18, 1
    %p214 = scmp.ne.s32.totalorder %s209, %s211
    %p215 = scmp.eq.s32.totalorder %s18, 0
    %p216 = por %p214, %p215
    %p217 = scmp.ne.s32.totalorder %s209, %s211
    %p218 = scmp.eq.s32.totalorder %s23, 1
    %p219 = por %p217, %p218
    %p220 = scmp.ne.s32.totalorder %s211, %s212
    %p221 = scmp.eq.s32.totalorder %s23, 0
    %p222 = por %p220, %p221
    %p223 = scmp.ne.s32.totalorder %s211, %s212
    %p224 = scmp.eq.s32.totalorder %s24, 1
    %p225 = por %p223, %p224
    %p227 = scmp.ne.s32.totalorder %s212, %s226
    %p228 = scmp.eq.s32.totalorder %s24, 0
    %p229 = por %p227, %p228
    %s231 = sadd.s32 %s230, 1
    %p234 = scmp.eq.s32.totalorder %s18, 1
    %p235 = scmp.ne.s32.totalorder %s230, %s232
    %p236 = scmp.eq.s32.totalorder %s18, 0
    %p237 = por %p235, %p236
    %p238 = scmp.ne.s32.totalorder %s230, %s232
    %p239 = scmp.eq.s32.totalorder %s23, 1
    %p240 = por %p238, %p239
    %p241 = scmp.ne.s32.totalorder %s232, %s233
    %p242 = scmp.eq.s32.totalorder %s23, 0
    %p243 = por %p241, %p242
    %p244 = scmp.ne.s32.totalorder %s232, %s233
    %p245 = scmp.eq.s32.totalorder %s24, 1
    %p246 = por %p244, %p245
    %p248 = scmp.ne.s32.totalorder %s233, %s247
    %p249 = scmp.eq.s32.totalorder %s24, 0
    %p250 = por %p248, %p249
    %s252 = sadd.s32 %s251, 1
    %p255 = scmp.eq.s32.totalorder %s18, 1
    %p256 = scmp.ne.s32.totalorder %s251, %s253
    %p257 = scmp.eq.s32.totalorder %s18, 0
    %p258 = por %p256, %p257
    %p259 = scmp.ne.s32.totalorder %s251, %s253
    %p260 = scmp.eq.s32.totalorder %s23, 1
    %p261 = por %p259, %p260
    %p262 = scmp.ne.s32.totalorder %s253, %s254
    %p263 = scmp.eq.s32.totalorder %s23, 0
    %p264 = por %p262, %p263
    %p265 = scmp.ne.s32.totalorder %s253, %s254
    %p266 = scmp.eq.s32.totalorder %s24, 1
    %p267 = por %p265, %p266
    %p269 = scmp.ne.s32.totalorder %s254, %s268
    %p270 = scmp.eq.s32.totalorder %s24, 0
    %p271 = por %p269, %p270
    %s273 = sadd.s32 %s272, 1
    %p276 = scmp.eq.s32.totalorder %s18, 1
    %p277 = scmp.ne.s32.totalorder %s272, %s274
    %p278 = scmp.eq.s32.totalorder %s18, 0
    %p279 = por %p277, %p278
    %p280 = scmp.ne.s32.totalorder %s272, %s274
    %p281 = scmp.eq.s32.totalorder %s23, 1
    %p282 = por %p280, %p281
    %p283 = scmp.ne.s32.totalorder %s274, %s275
    %p284 = scmp.eq.s32.totalorder %s23, 0
    %p285 = por %p283, %p284
    %p286 = scmp.ne.s32.totalorder %s274, %s275
    %p287 = scmp.eq.s32.totalorder %s24, 1
    %p288 = por %p286, %p287
    %p290 = scmp.ne.s32.totalorder %s275, %s289
    %p291 = scmp.eq.s32.totalorder %s24, 0
    %p292 = por %p290, %p291
    %s293 = ssub.s32 %s18, %s25
    %p294 = scmp.eq.s32.totalorder %s293, 0
    %s296 = sadd.s32 %s295, 1
    %s297 = scalar_select %p294, %s295, %s296
    %p300 = pneg %p294
    %p301 = scmp.eq.s32.totalorder %s18, 1
    %p302 = por %p300, %p301
    %p303 = scmp.ne.s32.totalorder %s295, %s298
    %p304 = scmp.eq.s32.totalorder %s18, 0
    %p305 = por %p303, %p304
    %p306 = scmp.ne.s32.totalorder %s295, %s298
    %p307 = scmp.eq.s32.totalorder %s23, 1
    %p308 = por %p306, %p307
    %p309 = scmp.ne.s32.totalorder %s298, %s299
    %p310 = scmp.eq.s32.totalorder %s23, 0
    %p311 = por %p309, %p310
    %p312 = scmp.ne.s32.totalorder %s298, %s299
    %p313 = scmp.eq.s32.totalorder %s24, 1
    %p314 = por %p312, %p313
    %p316 = scmp.ne.s32.totalorder %s299, %s315
    %p317 = scmp.eq.s32.totalorder %s24, 0
    %p318 = por %p316, %p317
    %p319 = scmp.le.s32.totalorder 1, %s18
    %p320 = scmp.lt.s32.totalorder %s18, 3
    %p321 = pnand %p319, %p320
    %p322 = pneg %p321
    // Predicated region
    $region9: #{tpu_custom_call.1} parent=5 // pred_check
      _
    $region10: #{tpu_custom_call.1} parent=5 // pred_check_branch
      %324 = sbr.rel (%p321) target = $region12
    $region11: #{tpu_custom_call.1} parent=5 // pred_region
      %s325 = ssub.s32 %s18, 1
      // Predicated region
      $region13: #{tpu_custom_call.1} parent=11 // pred_check
        %p326 = pneg %p117
      $region14: #{tpu_custom_call.1} parent=11 // pred_check_branch
        %328 = sbr.rel (%p326) target = $region16
      $region15: #{tpu_custom_call.1} parent=11 // pred_region
        _
      $region16: #{tpu_custom_call.1} parent=11 // pred_fallthru
        _
      // Predicated region
      $region17: #{tpu_custom_call.1} parent=11 // pred_check
        %p329 = pneg %p138
      $region18: #{tpu_custom_call.1} parent=11 // pred_check_branch
        %331 = sbr.rel (%p329) target = $region20
      $region19: #{tpu_custom_call.1} parent=11 // pred_region
        _
      $region20: #{tpu_custom_call.1} parent=11 // pred_fallthru
        _
      // Predicated region
      $region21: #{tpu_custom_call.1} parent=11 // pred_check
        %p332 = pneg %p159
      $region22: #{tpu_custom_call.1} parent=11 // pred_check_branch
        %334 = sbr.rel (%p332) target = $region24
      $region23: #{tpu_custom_call.1} parent=11 // pred_region
        _
      $region24: #{tpu_custom_call.1} parent=11 // pred_fallthru
        _
      // Predicated region
      $region25: #{tpu_custom_call.1} parent=11 // pred_check
        %p335 = pneg %p180
      $region26: #{tpu_custom_call.1} parent=11 // pred_check_branch
        %337 = sbr.rel (%p335) target = $region28
      $region27: #{tpu_custom_call.1} parent=11 // pred_region
        _
      $region28: #{tpu_custom_call.1} parent=11 // pred_fallthru
        _
      // Predicated region
      $region29: #{tpu_custom_call.1} parent=11 // pred_check
        %p338 = pneg %p201
      $region30: #{tpu_custom_call.1} parent=11 // pred_check_branch
        %340 = sbr.rel (%p338) target = $region32
      $region31: #{tpu_custom_call.1} parent=11 // pred_region
        _
      $region32: #{tpu_custom_call.1} parent=11 // pred_fallthru
        _
      // Predicated region
      $region33: #{tpu_custom_call.1} parent=11 // pred_check
        %p341 = pneg %p222
      $region34: #{tpu_custom_call.1} parent=11 // pred_check_branch
        %343 = sbr.rel (%p341) target = $region36
      $region35: #{tpu_custom_call.1} parent=11 // pred_region
        _
      $region36: #{tpu_custom_call.1} parent=11 // pred_fallthru
        _
      // Predicated region
      $region37: #{tpu_custom_call.1} parent=11 // pred_check
        %p344 = pneg %p243
      $region38: #{tpu_custom_call.1} parent=11 // pred_check_branch
        %346 = sbr.rel (%p344) target = $region40
      $region39: #{tpu_custom_call.1} parent=11 // pred_region
        _
      $region40: #{tpu_custom_call.1} parent=11 // pred_fallthru
        _
      // Predicated region
      $region41: #{tpu_custom_call.1} parent=11 // pred_check
        %p347 = pneg %p264
      $region42: #{tpu_custom_call.1} parent=11 // pred_check_branch
        %349 = sbr.rel (%p347) target = $region44
      $region43: #{tpu_custom_call.1} parent=11 // pred_region
        _
      $region44: #{tpu_custom_call.1} parent=11 // pred_fallthru
        _
      // Predicated region
      $region45: #{tpu_custom_call.1} parent=11 // pred_check
        %p350 = pneg %p285
      $region46: #{tpu_custom_call.1} parent=11 // pred_check_branch
        %352 = sbr.rel (%p350) target = $region48
      $region47: #{tpu_custom_call.1} parent=11 // pred_region
        _
      $region48: #{tpu_custom_call.1} parent=11 // pred_fallthru
        _
    $region12: #{tpu_custom_call.1} parent=5 // pred_fallthru
      _
    %p353 = scmp.lt.s32.totalorder %s18, 2
    // Predicated region
    $region49: #{tpu_custom_call.1} parent=5 // pred_check
      %p354 = pneg %p353
    $region50: #{tpu_custom_call.1} parent=5 // pred_check_branch
      %356 = sbr.rel (%p354) target = $region52
    $region51: #{tpu_custom_call.1} parent=5 // pred_region
      // Predicated region
      $region53: #{tpu_custom_call.1} parent=51 // pred_check
        %p357 = pneg %p38
      $region54: #{tpu_custom_call.1} parent=51 // pred_check_branch
        %359 = sbr.rel (%p357) target = $region56
      $region55: #{tpu_custom_call.1} parent=51 // pred_region
        %s360 = smul.u32 8, %s18
        %p361 = scmp.lt.s32.totalorder %s360, 15
        %s362 = scalar_select %p361, %s360, 15
        %s363 = smul.addr %s362, 2
        %s364 = smul.addr %s363, 8
        %s365 = scalar_lea.vmem %s0, %s364
        %s366 = smul.u32 8, %s18
      $region56: #{tpu_custom_call.1} parent=51 // pred_fallthru
        _
      // Predicated region
      $region57: #{tpu_custom_call.1} parent=51 // pred_check
        %p367 = pneg %p64
      $region58: #{tpu_custom_call.1} parent=51 // pred_check_branch
        %369 = sbr.rel (%p367) target = $region60
      $region59: #{tpu_custom_call.1} parent=51 // pred_region
        %p370 = scmp.lt.s32.totalorder %s18, 1
        %s371 = scalar_select %p370, %s18, 1
        %s372 = smul.addr %s371, 8
        %s373 = scalar_lea.vmem %s1, %s372
      $region60: #{tpu_custom_call.1} parent=51 // pred_fallthru
        _
      // Predicated region
      $region61: #{tpu_custom_call.1} parent=51 // pred_check
        %p374 = pneg %p90
      $region62: #{tpu_custom_call.1} parent=51 // pred_check_branch
        %376 = sbr.rel (%p374) target = $region64
      $region63: #{tpu_custom_call.1} parent=51 // pred_region
        %p377 = scmp.lt.s32.totalorder %s18, 1
        %s378 = scalar_select %p377, %s18, 1
        %s379 = smul.addr %s378, 8
        %s380 = scalar_lea.vmem %s2, %s379
      $region64: #{tpu_custom_call.1} parent=51 // pred_fallthru
        _
    $region52: #{tpu_custom_call.1} parent=5 // pred_fallthru
      _
    %p381 = scmp.le.s32.totalorder 1, %s18
    %p382 = scmp.lt.s32.totalorder %s18, 3
    %p383 = pnand %p381, %p382
    %p384 = pneg %p383
    // Predicated region
    $region65: #{tpu_custom_call.1} parent=5 // pred_check
      _
    $region66: #{tpu_custom_call.1} parent=5 // pred_check_branch
      %386 = sbr.rel (%p383) target = $region68
    $region67: #{tpu_custom_call.1} parent=5 // pred_region
      %s387 = ssub.s32 %s18, 1
      %s388 = smul.u32 8, %s23
      %p389 = scmp.lt.s32.totalorder %s388, 15
      %s390 = scalar_select %p389, %s388, 15
      %s391 = smul.addr %s390, 2
      %s392 = smul.addr %s391, 8
      %s393 = scalar_lea.vmem %s0, %s392
      %p394 = pneg %p44
      %p395 = pneg %p41
      %p396 = scmp.lt.s32.totalorder %s23, 1
      %s397 = scalar_select %p396, %s23, 1
      %s398 = smul.addr %s397, 8
      %s399 = scalar_lea.vmem %s1, %s398
      %p400 = pneg %p70
      %p401 = pneg %p67
      %p402 = scmp.lt.s32.totalorder %s23, 1
      %s403 = scalar_select %p402, %s23, 1
      %s404 = smul.addr %s403, 8
      %s405 = scalar_lea.vmem %s2, %s404
      %p406 = pneg %p96
      %p407 = pneg %p93
      %p408 = pneg %p117
      %p409 = pneg %p114
      %p410 = pneg %p138
      %p411 = pneg %p135
      %p412 = pneg %p159
      %p413 = pneg %p156
      %p414 = pneg %p180
      %p415 = pneg %p177
      %p416 = pneg %p201
      %p417 = pneg %p198
      %p418 = pneg %p222
      %p419 = pneg %p219
      %p420 = pneg %p243
      %p421 = pneg %p240
      %p422 = pneg %p264
      %p423 = pneg %p261
      %p424 = pneg %p285
      %p425 = pneg %p282
      %p426 = pneg %p311
      %p427 = pneg %p308
      %p428 = scmp.lt.s32.totalorder %s23, 1
      %s429 = scalar_select %p428, %s23, 1
      %s430 = smul.addr %s429, 8
      %s431 = scalar_lea.vmem %s12, %s430
      %s432 = smul.u32 8, %s23
      %p433 = scmp.lt.s32.totalorder %s432, 15
      %s434 = scalar_select %p433, %s432, 15
      %s435 = smul.addr %s434, 2
      %s436 = smul.addr %s435, 8
      %s437 = scalar_lea.vmem %s0, %s436
      %s438 = smul.u32 8, %s23
      %p439 = scmp.lt.s32.totalorder %s23, 1
      %s440 = scalar_select %p439, %s23, 1
      %s441 = smul.addr %s440, 8
      %s442 = scalar_lea.vmem %s1, %s441
      %p443 = scmp.lt.s32.totalorder %s23, 1
      %s444 = scalar_select %p443, %s23, 1
      %s445 = smul.addr %s444, 8
      %s446 = scalar_lea.vmem %s2, %s445
      %p447 = scmp.lt.s32.totalorder %s23, 1
      %s448 = scalar_select %p447, %s23, 1
      %s449 = smul.addr %s448, 8
      %s450 = scalar_lea.vmem %s12, %s449
      %v451 = vld [vmem:[%s437] sm:$0xff]
      %v452 = vld [vmem:[%s437 + $0x8] sm:$0x3]
      %v453 = vld [vmem:[%s437 + $0x10] sm:$0xff]
      %v454 = vld [vmem:[%s437 + $0x18] sm:$0x3]
      %v455 = vld [vmem:[%s437 + $0x20] sm:$0xff]
      %v456 = vld [vmem:[%s437 + $0x28] sm:$0x3]
      %v457 = vld [vmem:[%s437 + $0x30] sm:$0xff]
      %v458 = vld [vmem:[%s437 + $0x38] sm:$0x3]
      %v459 = vld [vmem:[%s437 + $0x40] sm:$0xff]
      %v460 = vld [vmem:[%s437 + $0x48] sm:$0x3]
      %v461 = vld [vmem:[%s437 + $0x50] sm:$0xff]
      %v462 = vld [vmem:[%s437 + $0x58] sm:$0x3]
      %v463 = vld [vmem:[%s437 + $0x60] sm:$0xff]
      %v464 = vld [vmem:[%s437 + $0x68] sm:$0x3]
      %v465 = vld [vmem:[%s437 + $0x70] sm:$0xff]
      %v466 = vld [vmem:[%s437 + $0x78] sm:$0x3]
      %v467 = vld [vmem:[%s442] sm:$0xff]
      %v468 = vld [vmem:[%s446] sm:$0xff]
      %vm469 = vcmp.ne.f32.partialorder %v451, 0.0
      %vm470 = vcmp.ne.f32.partialorder %v452, 0.0
      %vm471 = vcmp.ne.f32.partialorder %v453, 0.0
      %vm472 = vcmp.ne.f32.partialorder %v454, 0.0
      %vm473 = vcmp.ne.f32.partialorder %v455, 0.0
      %vm474 = vcmp.ne.f32.partialorder %v456, 0.0
      %vm475 = vcmp.ne.f32.partialorder %v457, 0.0
      %vm476 = vcmp.ne.f32.partialorder %v458, 0.0
      %vm477 = vcmp.ne.f32.partialorder %v459, 0.0
      %vm478 = vcmp.ne.f32.partialorder %v460, 0.0
      %vm479 = vcmp.ne.f32.partialorder %v461, 0.0
      %vm480 = vcmp.ne.f32.partialorder %v462, 0.0
      %vm481 = vcmp.ne.f32.partialorder %v463, 0.0
      %vm482 = vcmp.ne.f32.partialorder %v464, 0.0
      %vm483 = vcmp.ne.f32.partialorder %v465, 0.0
      %vm484 = vcmp.ne.f32.partialorder %v466, 0.0
      %v485 = vsel %vm469, 1, 0
      %v486 = vsel %vm470, 1, 0
      %v487 = vsel %vm471, 1, 0
      %v488 = vsel %vm472, 1, 0
      %v489 = vsel %vm473, 1, 0
      %v490 = vsel %vm474, 1, 0
      %v491 = vsel %vm475, 1, 0
      %v492 = vsel %vm476, 1, 0
      %v493 = vsel %vm477, 1, 0
      %v494 = vsel %vm478, 1, 0
      %v495 = vsel %vm479, 1, 0
      %v496 = vsel %vm480, 1, 0
      %v497 = vsel %vm481, 1, 0
      %v498 = vsel %vm482, 1, 0
      %v499 = vsel %vm483, 1, 0
      %v500 = vsel %vm484, 1, 0
      %v501 = vcvt.s32.f32 %v485
      %v502 = vcvt.s32.f32 %v486
      %v503 = vcvt.s32.f32 %v487
      %v504 = vcvt.s32.f32 %v488
      %v505 = vcvt.s32.f32 %v489
      %v506 = vcvt.s32.f32 %v490
      %v507 = vcvt.s32.f32 %v491
      %v508 = vcvt.s32.f32 %v492
      %v509 = vcvt.s32.f32 %v493
      %v510 = vcvt.s32.f32 %v494
      %v511 = vcvt.s32.f32 %v495
      %v512 = vcvt.s32.f32 %v496
      %v513 = vcvt.s32.f32 %v497
      %v514 = vcvt.s32.f32 %v498
      %v515 = vcvt.s32.f32 %v499
      %v516 = vcvt.s32.f32 %v500
      %vm517 = vcmask 326656
      %v518 = vsel %vm517, %v501, 0.0
      %vm519 = vcmask 320512
      %v520 = vsel %vm519, %v502, 0.0
      %v521 = vadd.f32 %v518, %v520
      %v522 = vrot.slane %v521, 4
      %v523 = vadd.f32 %v521, %v522
      %v524 = vrot.slane %v523, 2
      %v525 = vadd.f32 %v523, %v524
      %v526 = vrot.slane %v525, 1
      %v527 = vadd.f32 %v525, %v526
      %v528 = vsel %vm517, %v503, 0.0
      %v529 = vsel %vm519, %v504, 0.0
      %v530 = vadd.f32 %v528, %v529
      %v531 = vrot.slane %v530, 4
      %v532 = vadd.f32 %v530, %v531
      %v533 = vrot.slane %v532, 2
      %v534 = vadd.f32 %v532, %v533
      %v535 = vrot.slane %v534, 1
      %v536 = vadd.f32 %v534, %v535
      %v537 = vsel %vm517, %v505, 0.0
      %v538 = vsel %vm519, %v506, 0.0
      %v539 = vadd.f32 %v537, %v538
      %v540 = vrot.slane %v539, 4
      %v541 = vadd.f32 %v539, %v540
      %v542 = vrot.slane %v541, 2
      %v543 = vadd.f32 %v541, %v542
      %v544 = vrot.slane %v543, 1
      %v545 = vadd.f32 %v543, %v544
      %v546 = vsel %vm517, %v507, 0.0
      %v547 = vsel %vm519, %v508, 0.0
      %v548 = vadd.f32 %v546, %v547
      %v549 = vrot.slane %v548, 4
      %v550 = vadd.f32 %v548, %v549
      %v551 = vrot.slane %v550, 2
      %v552 = vadd.f32 %v550, %v551
      %v553 = vrot.slane %v552, 1
      %v554 = vadd.f32 %v552, %v553
      %v555 = vsel %vm517, %v509, 0.0
      %v556 = vsel %vm519, %v510, 0.0
      %v557 = vadd.f32 %v555, %v556
      %v558 = vrot.slane %v557, 4
      %v559 = vadd.f32 %v557, %v558
      %v560 = vrot.slane %v559, 2
      %v561 = vadd.f32 %v559, %v560
      %v562 = vrot.slane %v561, 1
      %v563 = vadd.f32 %v561, %v562
      %v564 = vsel %vm517, %v511, 0.0
      %v565 = vsel %vm519, %v512, 0.0
      %v566 = vadd.f32 %v564, %v565
      %v567 = vrot.slane %v566, 4
      %v568 = vadd.f32 %v566, %v567
      %v569 = vrot.slane %v568, 2
      %v570 = vadd.f32 %v568, %v569
      %v571 = vrot.slane %v570, 1
      %v572 = vadd.f32 %v570, %v571
      %v573 = vsel %vm517, %v513, 0.0
      %v574 = vsel %vm519, %v514, 0.0
      %v575 = vadd.f32 %v573, %v574
      %v576 = vrot.slane %v575, 4
      %v577 = vadd.f32 %v575, %v576
      %v578 = vrot.slane %v577, 2
      %v579 = vadd.f32 %v577, %v578
      %v580 = vrot.slane %v579, 1
      %v581 = vadd.f32 %v579, %v580
      %v582 = vsel %vm517, %v515, 0.0
      %v583 = vsel %vm519, %v516, 0.0
      %v584 = vadd.f32 %v582, %v583
      %v585 = vrot.slane %v584, 4
      %v586 = vadd.f32 %v584, %v585
      %v587 = vrot.slane %v586, 2
      %v588 = vadd.f32 %v586, %v587
      %v589 = vrot.slane %v588, 1
      %v590 = vadd.f32 %v588, %v589
      %591 = vadd.xlane.f32.xlu0 %v518
      %v592 = vpop.xlane.xlu0 %591
      %593 = vadd.xlane.f32.xlu0 %v520
      %v594 = vpop.xlane.xlu0 %593
      %595 = vadd.xlane.f32.xlu0 %v528
      %v596 = vpop.xlane.xlu0 %595
      %597 = vadd.xlane.f32.xlu0 %v529
      %v598 = vpop.xlane.xlu0 %597
      %599 = vadd.xlane.f32.xlu0 %v537
      %v600 = vpop.xlane.xlu0 %599
      %601 = vadd.xlane.f32.xlu0 %v538
      %v602 = vpop.xlane.xlu0 %601
      %603 = vadd.xlane.f32.xlu0 %v546
      %v604 = vpop.xlane.xlu0 %603
      %605 = vadd.xlane.f32.xlu0 %v547
      %v606 = vpop.xlane.xlu0 %605
      %607 = vadd.xlane.f32.xlu0 %v555
      %v608 = vpop.xlane.xlu0 %607
      %609 = vadd.xlane.f32.xlu0 %v556
      %v610 = vpop.xlane.xlu0 %609
      %611 = vadd.xlane.f32.xlu0 %v564
      %v612 = vpop.xlane.xlu0 %611
      %613 = vadd.xlane.f32.xlu0 %v565
      %v614 = vpop.xlane.xlu0 %613
      %615 = vadd.xlane.f32.xlu0 %v573
      %v616 = vpop.xlane.xlu0 %615
      %617 = vadd.xlane.f32.xlu0 %v574
      %v618 = vpop.xlane.xlu0 %617
      %619 = vadd.xlane.f32.xlu0 %v582
      %v620 = vpop.xlane.xlu0 %619
      %621 = vadd.xlane.f32.xlu0 %v583
      %v622 = vpop.xlane.xlu0 %621
      %v639 = vlaneseq
      %v640 = vand.u32 %v639, 127
      %v641 = vperm.slane %v592, %v640
      %v642 = vadd.s32 %v640, 4294967288
      %v643 = vperm.slane %v594, %v642
      %vm644 = vcmask 130112
      %v645 = vsel %vm644, %v643, %v641
      %v646 = vperm.slane %v596, %v640
      %v647 = vperm.slane %v598, %v642
      %v648 = vsel %vm644, %v647, %v646
      %v649 = vperm.slane %v600, %v640
      %v650 = vperm.slane %v602, %v642
      %v651 = vsel %vm644, %v650, %v649
      %v652 = vperm.slane %v604, %v640
      %v653 = vperm.slane %v606, %v642
      %v654 = vsel %vm644, %v653, %v652
      %v655 = vperm.slane %v608, %v640
      %v656 = vperm.slane %v610, %v642
      %v657 = vsel %vm644, %v656, %v655
      %v658 = vperm.slane %v612, %v640
      %v659 = vperm.slane %v614, %v642
      %v660 = vsel %vm644, %v659, %v658
      %v661 = vperm.slane %v616, %v640
      %v662 = vperm.slane %v618, %v642
      %v663 = vsel %vm644, %v662, %v661
      %v664 = vperm.slane %v620, %v640
      %v665 = vperm.slane %v622, %v642
      %v666 = vsel %vm644, %v665, %v664
      %vm667 = vcmask 1041409
      %v668 = vsel %vm667, %v648, %v645
      %vm669 = vcmask 1042434
      %v670 = vsel %vm669, %v651, %v668
      %vm671 = vcmask 1043459
      %v672 = vsel %vm671, %v654, %v670
      %vm673 = vcmask 1044484
      %v674 = vsel %vm673, %v657, %v672
      %vm675 = vcmask 1045509
      %v676 = vsel %vm675, %v660, %v674
      %vm677 = vcmask 1046534
      %v678 = vsel %vm677, %v663, %v676
      %vm679 = vcmask 1047559
      %v680 = vsel %vm679, %v666, %v678
      %vm682 = vcmask 80896
      %v683 = vsel %vm682, %v680, 0.0
      %684 = vadd.xlane.f32.xlu0 %v683
      %v685 = vpop.xlane.xlu0 %684
      %v686 = vsel %vm517, %v451, 0.0
      %v687 = vsel %vm519, %v452, 0.0
      %v688 = vadd.f32 %v686, %v687
      %v689 = vrot.slane %v688, 4
      %v690 = vadd.f32 %v688, %v689
      %v691 = vrot.slane %v690, 2
      %v692 = vadd.f32 %v690, %v691
      %v693 = vrot.slane %v692, 1
      %v694 = vadd.f32 %v692, %v693
      %v695 = vsel %vm517, %v453, 0.0
      %v696 = vsel %vm519, %v454, 0.0
      %v697 = vadd.f32 %v695, %v696
      %v698 = vrot.slane %v697, 4
      %v699 = vadd.f32 %v697, %v698
      %v700 = vrot.slane %v699, 2
      %v701 = vadd.f32 %v699, %v700
      %v702 = vrot.slane %v701, 1
      %v703 = vadd.f32 %v701, %v702
      %v704 = vsel %vm517, %v455, 0.0
      %v705 = vsel %vm519, %v456, 0.0
      %v706 = vadd.f32 %v704, %v705
      %v707 = vrot.slane %v706, 4
      %v708 = vadd.f32 %v706, %v707
      %v709 = vrot.slane %v708, 2
      %v710 = vadd.f32 %v708, %v709
      %v711 = vrot.slane %v710, 1
      %v712 = vadd.f32 %v710, %v711
      %v713 = vsel %vm517, %v457, 0.0
      %v714 = vsel %vm519, %v458, 0.0
      %v715 = vadd.f32 %v713, %v714
      %v716 = vrot.slane %v715, 4
      %v717 = vadd.f32 %v715, %v716
      %v718 = vrot.slane %v717, 2
      %v719 = vadd.f32 %v717, %v718
      %v720 = vrot.slane %v719, 1
      %v721 = vadd.f32 %v719, %v720
      %v722 = vsel %vm517, %v459, 0.0
      %v723 = vsel %vm519, %v460, 0.0
      %v724 = vadd.f32 %v722, %v723
      %v725 = vrot.slane %v724, 4
      %v726 = vadd.f32 %v724, %v725
      %v727 = vrot.slane %v726, 2
      %v728 = vadd.f32 %v726, %v727
      %v729 = vrot.slane %v728, 1
      %v730 = vadd.f32 %v728, %v729
      %v731 = vsel %vm517, %v461, 0.0
      %v732 = vsel %vm519, %v462, 0.0
      %v733 = vadd.f32 %v731, %v732
      %v734 = vrot.slane %v733, 4
      %v735 = vadd.f32 %v733, %v734
      %v736 = vrot.slane %v735, 2
      %v737 = vadd.f32 %v735, %v736
      %v738 = vrot.slane %v737, 1
      %v739 = vadd.f32 %v737, %v738
      %v740 = vsel %vm517, %v463, 0.0
      %v741 = vsel %vm519, %v464, 0.0
      %v742 = vadd.f32 %v740, %v741
      %v743 = vrot.slane %v742, 4
      %v744 = vadd.f32 %v742, %v743
      %v745 = vrot.slane %v744, 2
      %v746 = vadd.f32 %v744, %v745
      %v747 = vrot.slane %v746, 1
      %v748 = vadd.f32 %v746, %v747
      %v749 = vsel %vm517, %v465, 0.0
      %v750 = vsel %vm519, %v466, 0.0
      %v751 = vadd.f32 %v749, %v750
      %v752 = vrot.slane %v751, 4
      %v753 = vadd.f32 %v751, %v752
      %v754 = vrot.slane %v753, 2
      %v755 = vadd.f32 %v753, %v754
      %v756 = vrot.slane %v755, 1
      %v757 = vadd.f32 %v755, %v756
      %v766 = vsel %vm667, %v703, %v694
      %v767 = vsel %vm669, %v712, %v766
      %v768 = vsel %vm671, %v721, %v767
      %v769 = vsel %vm673, %v730, %v768
      %v770 = vsel %vm675, %v739, %v769
      %v771 = vsel %vm677, %v748, %v770
      %v772 = vsel %vm679, %v757, %v771
      %v774 = vsel %vm517, %v772, 0.0
      %775 = vadd.xlane.f32.xlu0 %v774
      %v776 = vpop.xlane.xlu0 %775
      %v777 = vld [vmem:[%s3] sm:$0xff]
      %v779 = vrot.slane %v467, 1
      %v780 = vrot.slane %v467, 2
      %v781 = vrot.slane %v467, 3
      %v782 = vrot.slane %v467, 4
      %v783 = vrot.slane %v467, 5
      %v784 = vrot.slane %v467, 6
      %v785 = vrot.slane %v467, 7
      %v786 = vperm.slane %v467, 0
      %v787 = vperm.slane %v779, 0
      %v788 = vperm.slane %v780, 0
      %v789 = vperm.slane %v781, 0
      %v790 = vperm.slane %v782, 0
      %v791 = vperm.slane %v783, 0
      %v792 = vperm.slane %v784, 0
      %v793 = vperm.slane %v785, 0
      %803 = vset.pattern.permute.xlu0 0
      %804 = vperm.xlu0 %803, %v777
      %v805 = vpop.permute.xlu0 %804
      %v807 = vmul.f32 %v786, %v805
      %v808 = vmul.f32 %v787, %v805
      %v809 = vmul.f32 %v788, %v805
      %v810 = vmul.f32 %v789, %v805
      %v811 = vmul.f32 %v790, %v805
      %v812 = vmul.f32 %v791, %v805
      %v813 = vmul.f32 %v792, %v805
      %v814 = vmul.f32 %v793, %v805
      %v815 = vand.u32 2147483647, %v807
      %vm816 = vcmp.le.f32.partialorder %v815, 0.7853982
      %vm817 = vcmp.lt.s32.totalorder %v807, 0
      %v818 = vand.u32 %v807, 2139095040
      %v819 = vshrl.u32 %v818, 23
      %v820 = vsub.s32 %v819, 127
      %v821 = vand.u32 2147483647, %v807
      %v822 = vand.u32 %v821, 8388607
      %v823 = vor.u32 %v822, 8388608
      %v824 = vsub.s32 0, %v823
      %v825 = vadd.s32 %v820, 1
      %vm826 = vcmp.gt.s32.totalorder %v825, 0
      %v827 = vsel %vm826, %v825, 0
      %v828 = vshrl.u32 %v827, 5
      %v829 = vand.u32 %v827, 31
      %v830 = vsub.s32 32, %v829
      %v831 = vshrl.u32 683565275, %v830
      %v832 = vshll.u32 683565275, %v829
      %v833 = vshrl.u32 2475754826, %v830
      %v834 = vor.u32 %v832, %v833
      %v835 = vshll.u32 2475754826, %v829
      %v836 = vshrl.u32 2131351028, %v830
      %v837 = vor.u32 %v835, %v836
      %v838 = vshll.u32 2131351028, %v829
      %v839 = vshrl.u32 2102212464, %v830
      %v840 = vor.u32 %v838, %v839
      %v841 = vshll.u32 2102212464, %v829
      %v842 = vshrl.u32 920167782, %v830
      %v843 = vor.u32 %v841, %v842
      %v844 = vshll.u32 920167782, %v829
      %v845 = vshrl.u32 1326507024, %v830
      %v846 = vor.u32 %v844, %v845
      %vm847 = vcmp.lt.s32.totalorder %v828, 1
      %vm848 = vcmp.lt.s32.totalorder %v828, 2
      %vm849 = vcmp.lt.s32.totalorder %v828, 3
      %vm850 = vcmp.lt.s32.totalorder %v828, 4
      %v851 = vsel %vm847, %v831, %v834
      %v852 = vsel %vm850, %v840, 2102212464
      %v853 = vsel %vm849, %v837, %v852
      %v854 = vsel %vm848, %v851, %v853
      %v855 = vsel %vm847, %v834, %v837
      %v856 = vsel %vm850, %v843, 920167782
      %v857 = vsel %vm849, %v840, %v856
      %v858 = vsel %vm848, %v855, %v857
      %v859 = vsel %vm847, %v837, %v840
      %v860 = vsel %vm850, %v846, 1326507024
      %v861 = vsel %vm849, %v843, %v860
      %v862 = vsel %vm848, %v859, %v861
      %v863 = vshll.u32 %v823, 8
      %v864 = vand.u32 %v863, 65535
      %v865 = vshrl.u32 %v863, 16
      %v866 = vand.u32 %v862, 65535
      %v867 = vshrl.u32 %v862, 16
      %v868 = vmul.u32 %v864, %v866
      %v869 = vmul.u32 %v864, %v867
      %v870 = vmul.u32 %v865, %v866
      %v871 = vmul.u32 %v865, %v867
      %v872 = vshll.u32 %v869, 16
      %v873 = vshrl.u32 %v869, 16
      %v874 = vshll.u32 %v870, 16
      %v875 = vshrl.u32 %v870, 16
      %vm876 = vc.u32 %v868, %v872
      %v877 = vsel %vm876, 1, 0
      %v878 = vadd.s32 %v868, %v872
      %v879 = vadd.s32 %v871, %v877
      %vm880 = vc.u32 %v878, %v874
      %v881 = vsel %vm880, 1, 0
      %v882 = vadd.s32 %v878, %v874
      %v883 = vadd.s32 %v879, %v881
      %v884 = vadd.s32 %v883, %v873
      %v885 = vadd.s32 %v884, %v875
      %v886 = vand.u32 %v863, 65535
      %v887 = vshrl.u32 %v863, 16
      %v888 = vand.u32 %v858, 65535
      %v889 = vshrl.u32 %v858, 16
      %v890 = vmul.u32 %v886, %v888
      %v891 = vmul.u32 %v886, %v889
      %v892 = vmul.u32 %v887, %v888
      %v893 = vmul.u32 %v887, %v889
      %v894 = vshll.u32 %v891, 16
      %v895 = vshrl.u32 %v891, 16
      %v896 = vshll.u32 %v892, 16
      %v897 = vshrl.u32 %v892, 16
      %vm898 = vc.u32 %v890, %v894
      %v899 = vsel %vm898, 1, 0
      %v900 = vadd.s32 %v890, %v894
      %v901 = vadd.s32 %v893, %v899
      %vm902 = vc.u32 %v900, %v896
      %v903 = vsel %vm902, 1, 0
      %v904 = vadd.s32 %v900, %v896
      %v905 = vadd.s32 %v901, %v903
      %v906 = vadd.s32 %v905, %v895
      %v907 = vadd.s32 %v906, %v897
      %v908 = vmul.u32 %v863, %v854
      %v909 = vadd.s32 %v885, %v904
      %vm910 = vc.u32 %v885, %v904
      %v911 = vadd.s32 %v907, 1
      %v912 = vsel %vm910, %v911, %v907
      %v913 = vadd.s32 %v908, %v912
      %v914 = vadd.s32 %v913, 536870912
      %v915 = vshrl.u32 %v914, 30
      %v916 = vshll.u32 %v915, 30
      %v917 = vsub.s32 %v913, %v916
      %vm918 = vcmp.lt.s32.totalorder %v917, 0
      %v919 = vsub.s32 0, %v917
      %v920 = vsel %vm918, %v919, %v917
      %v921 = vclz %v920
      %v922 = vsub.s32 %v921, 2
      %vm923 = vcmp.gt.s32.totalorder 0, %v922
      %v924 = vsel %vm923, 0, %v922
      %v925 = vsub.s32 32, %v924
      %v926 = vshll.u32 %v917, %v924
      %v927 = vshrl.u32 %v909, %v925
      %v928 = vor.u32 %v926, %v927
      %v929 = vsub.s32 4294967266, %v924
      %v930 = vadd.s32 %v929, 127
      %v931 = vshll.u32 %v930, 23
      %v932 = vor.u32 4788187, %v931
      %v933 = vand.u32 2147483647, %v932
      %v935 = vcvt.s32.f32 %v928
      %v936 = vmul.f32 %v935, %v933
      %v937 = vxor.u32 %v936, 2147483648
      %v938 = vsel %vm817, %v937, %v936
      %v939 = vsub.s32 4, %v915
      %v940 = vsel %vm817, %v939, %v915
      %v941 = vsel %vm816, %v807, %v938
      %v942 = vsel %vm816, 0, %v940
      %v943 = vmul.f32 %v941, %v941
      %v944 = vmul.f32 %v943, -0.001358992
      %v945 = vadd.f32 %v944, 0.041655596
      %v946 = vmul.f32 %v943, %v945
      %v947 = vadd.f32 %v946, -0.4999988
      %v948 = vmul.f32 %v943, %v947
      %v949 = vadd.f32 1.0, %v948
      %v950 = vmul.f32 %v941, %v941
      %v951 = vmul.f32 %v950, -0.00019511016
      %v952 = vadd.f32 %v951, 0.008332121
      %v953 = vmul.f32 %v950, %v952
      %v954 = vadd.f32 %v953, -0.16666654
      %v955 = vmul.f32 %v950, %v954
      %v956 = vadd.f32 %v955, 1.0
      %v957 = vmul.f32 %v956, %v941
      %vm958 = vweird.f32 %v807
      %v959 = vadd.s32 %v942, 3
      %v960 = vand.u32 %v959, 3
      %vm961 = vcmp.lt.s32.totalorder %v960, 2
      %vm962 = vcmp.eq.s32.totalorder %v960, 0
      %v963 = vxor.u32 %v957, 2147483648
      %v964 = vsel %vm962, %v949, %v963
      %vm965 = vcmp.eq.s32.totalorder %v960, 2
      %v966 = vxor.u32 %v949, 2147483648
      %v967 = vsel %vm965, %v966, %v957
      %v968 = vsel %vm961, %v964, %v967
      %v969 = vsel %vm958, nan, %v968
      %v970 = vand.u32 2147483647, %v808
      %vm971 = vcmp.le.f32.partialorder %v970, 0.7853982
      %vm972 = vcmp.lt.s32.totalorder %v808, 0
      %v973 = vand.u32 %v808, 2139095040
      %v974 = vshrl.u32 %v973, 23
      %v975 = vsub.s32 %v974, 127
      %v976 = vand.u32 2147483647, %v808
      %v977 = vand.u32 %v976, 8388607
      %v978 = vor.u32 %v977, 8388608
      %v979 = vsub.s32 0, %v978
      %v980 = vadd.s32 %v975, 1
      %vm981 = vcmp.gt.s32.totalorder %v980, 0
      %v982 = vsel %vm981, %v980, 0
      %v983 = vshrl.u32 %v982, 5
      %v984 = vand.u32 %v982, 31
      %v985 = vsub.s32 32, %v984
      %v986 = vshrl.u32 683565275, %v985
      %v987 = vshll.u32 683565275, %v984
      %v988 = vshrl.u32 2475754826, %v985
      %v989 = vor.u32 %v987, %v988
      %v990 = vshll.u32 2475754826, %v984
      %v991 = vshrl.u32 2131351028, %v985
      %v992 = vor.u32 %v990, %v991
      %v993 = vshll.u32 2131351028, %v984
      %v994 = vshrl.u32 2102212464, %v985
      %v995 = vor.u32 %v993, %v994
      %v996 = vshll.u32 2102212464, %v984
      %v997 = vshrl.u32 920167782, %v985
      %v998 = vor.u32 %v996, %v997
      %v999 = vshll.u32 920167782, %v984
      %v1000 = vshrl.u32 1326507024, %v985
      %v1001 = vor.u32 %v999, %v1000
      %vm1002 = vcmp.lt.s32.totalorder %v983, 1
      %vm1003 = vcmp.lt.s32.totalorder %v983, 2
      %vm1004 = vcmp.lt.s32.totalorder %v983, 3
      %vm1005 = vcmp.lt.s32.totalorder %v983, 4
      %v1006 = vsel %vm1002, %v986, %v989
      %v1007 = vsel %vm1005, %v995, 2102212464
      %v1008 = vsel %vm1004, %v992, %v1007
      %v1009 = vsel %vm1003, %v1006, %v1008
      %v1010 = vsel %vm1002, %v989, %v992
      %v1011 = vsel %vm1005, %v998, 920167782
      %v1012 = vsel %vm1004, %v995, %v1011
      %v1013 = vsel %vm1003, %v1010, %v1012
      %v1014 = vsel %vm1002, %v992, %v995
      %v1015 = vsel %vm1005, %v1001, 1326507024
      %v1016 = vsel %vm1004, %v998, %v1015
      %v1017 = vsel %vm1003, %v1014, %v1016
      %v1018 = vshll.u32 %v978, 8
      %v1019 = vand.u32 %v1018, 65535
      %v1020 = vshrl.u32 %v1018, 16
      %v1021 = vand.u32 %v1017, 65535
      %v1022 = vshrl.u32 %v1017, 16
      %v1023 = vmul.u32 %v1019, %v1021
      %v1024 = vmul.u32 %v1019, %v1022
      %v1025 = vmul.u32 %v1020, %v1021
      %v1026 = vmul.u32 %v1020, %v1022
      %v1027 = vshll.u32 %v1024, 16
      %v1028 = vshrl.u32 %v1024, 16
      %v1029 = vshll.u32 %v1025, 16
      %v1030 = vshrl.u32 %v1025, 16
      %vm1031 = vc.u32 %v1023, %v1027
      %v1032 = vsel %vm1031, 1, 0
      %v1033 = vadd.s32 %v1023, %v1027
      %v1034 = vadd.s32 %v1026, %v1032
      %vm1035 = vc.u32 %v1033, %v1029
      %v1036 = vsel %vm1035, 1, 0
      %v1037 = vadd.s32 %v1033, %v1029
      %v1038 = vadd.s32 %v1034, %v1036
      %v1039 = vadd.s32 %v1038, %v1028
      %v1040 = vadd.s32 %v1039, %v1030
      %v1041 = vand.u32 %v1018, 65535
      %v1042 = vshrl.u32 %v1018, 16
      %v1043 = vand.u32 %v1013, 65535
      %v1044 = vshrl.u32 %v1013, 16
      %v1045 = vmul.u32 %v1041, %v1043
      %v1046 = vmul.u32 %v1041, %v1044
      %v1047 = vmul.u32 %v1042, %v1043
      %v1048 = vmul.u32 %v1042, %v1044
      %v1049 = vshll.u32 %v1046, 16
      %v1050 = vshrl.u32 %v1046, 16
      %v1051 = vshll.u32 %v1047, 16
      %v1052 = vshrl.u32 %v1047, 16
      %vm1053 = vc.u32 %v1045, %v1049
      %v1054 = vsel %vm1053, 1, 0
      %v1055 = vadd.s32 %v1045, %v1049
      %v1056 = vadd.s32 %v1048, %v1054
      %vm1057 = vc.u32 %v1055, %v1051
      %v1058 = vsel %vm1057, 1, 0
      %v1059 = vadd.s32 %v1055, %v1051
      %v1060 = vadd.s32 %v1056, %v1058
      %v1061 = vadd.s32 %v1060, %v1050
      %v1062 = vadd.s32 %v1061, %v1052
      %v1063 = vmul.u32 %v1018, %v1009
      %v1064 = vadd.s32 %v1040, %v1059
      %vm1065 = vc.u32 %v1040, %v1059
      %v1066 = vadd.s32 %v1062, 1
      %v1067 = vsel %vm1065, %v1066, %v1062
      %v1068 = vadd.s32 %v1063, %v1067
      %v1069 = vadd.s32 %v1068, 536870912
      %v1070 = vshrl.u32 %v1069, 30
      %v1071 = vshll.u32 %v1070, 30
      %v1072 = vsub.s32 %v1068, %v1071
      %vm1073 = vcmp.lt.s32.totalorder %v1072, 0
      %v1074 = vsub.s32 0, %v1072
      %v1075 = vsel %vm1073, %v1074, %v1072
      %v1076 = vclz %v1075
      %v1077 = vsub.s32 %v1076, 2
      %vm1078 = vcmp.gt.s32.totalorder 0, %v1077
      %v1079 = vsel %vm1078, 0, %v1077
      %v1080 = vsub.s32 32, %v1079
      %v1081 = vshll.u32 %v1072, %v1079
      %v1082 = vshrl.u32 %v1064, %v1080
      %v1083 = vor.u32 %v1081, %v1082
      %v1084 = vsub.s32 4294967266, %v1079
      %v1085 = vadd.s32 %v1084, 127
      %v1086 = vshll.u32 %v1085, 23
      %v1087 = vor.u32 4788187, %v1086
      %v1088 = vand.u32 2147483647, %v1087
      %v1090 = vcvt.s32.f32 %v1083
      %v1091 = vmul.f32 %v1090, %v1088
      %v1092 = vxor.u32 %v1091, 2147483648
      %v1093 = vsel %vm972, %v1092, %v1091
      %v1094 = vsub.s32 4, %v1070
      %v1095 = vsel %vm972, %v1094, %v1070
      %v1096 = vsel %vm971, %v808, %v1093
      %v1097 = vsel %vm971, 0, %v1095
      %v1098 = vmul.f32 %v1096, %v1096
      %v1099 = vmul.f32 %v1098, -0.001358992
      %v1100 = vadd.f32 %v1099, 0.041655596
      %v1101 = vmul.f32 %v1098, %v1100
      %v1102 = vadd.f32 %v1101, -0.4999988
      %v1103 = vmul.f32 %v1098, %v1102
      %v1104 = vadd.f32 1.0, %v1103
      %v1105 = vmul.f32 %v1096, %v1096
      %v1106 = vmul.f32 %v1105, -0.00019511016
      %v1107 = vadd.f32 %v1106, 0.008332121
      %v1108 = vmul.f32 %v1105, %v1107
      %v1109 = vadd.f32 %v1108, -0.16666654
      %v1110 = vmul.f32 %v1105, %v1109
      %v1111 = vadd.f32 %v1110, 1.0
      %v1112 = vmul.f32 %v1111, %v1096
      %vm1113 = vweird.f32 %v808
      %v1114 = vadd.s32 %v1097, 3
      %v1115 = vand.u32 %v1114, 3
      %vm1116 = vcmp.lt.s32.totalorder %v1115, 2
      %vm1117 = vcmp.eq.s32.totalorder %v1115, 0
      %v1118 = vxor.u32 %v1112, 2147483648
      %v1119 = vsel %vm1117, %v1104, %v1118
      %vm1120 = vcmp.eq.s32.totalorder %v1115, 2
      %v1121 = vxor.u32 %v1104, 2147483648
      %v1122 = vsel %vm1120, %v1121, %v1112
      %v1123 = vsel %vm1116, %v1119, %v1122
      %v1124 = vsel %vm1113, nan, %v1123
      %v1125 = vand.u32 2147483647, %v809
      %vm1126 = vcmp.le.f32.partialorder %v1125, 0.7853982
      %vm1127 = vcmp.lt.s32.totalorder %v809, 0
      %v1128 = vand.u32 %v809, 2139095040
      %v1129 = vshrl.u32 %v1128, 23
      %v1130 = vsub.s32 %v1129, 127
      %v1131 = vand.u32 2147483647, %v809
      %v1132 = vand.u32 %v1131, 8388607
      %v1133 = vor.u32 %v1132, 8388608
      %v1134 = vsub.s32 0, %v1133
      %v1135 = vadd.s32 %v1130, 1
      %vm1136 = vcmp.gt.s32.totalorder %v1135, 0
      %v1137 = vsel %vm1136, %v1135, 0
      %v1138 = vshrl.u32 %v1137, 5
      %v1139 = vand.u32 %v1137, 31
      %v1140 = vsub.s32 32, %v1139
      %v1141 = vshrl.u32 683565275, %v1140
      %v1142 = vshll.u32 683565275, %v1139
      %v1143 = vshrl.u32 2475754826, %v1140
      %v1144 = vor.u32 %v1142, %v1143
      %v1145 = vshll.u32 2475754826, %v1139
      %v1146 = vshrl.u32 2131351028, %v1140
      %v1147 = vor.u32 %v1145, %v1146
      %v1148 = vshll.u32 2131351028, %v1139
      %v1149 = vshrl.u32 2102212464, %v1140
      %v1150 = vor.u32 %v1148, %v1149
      %v1151 = vshll.u32 2102212464, %v1139
      %v1152 = vshrl.u32 920167782, %v1140
      %v1153 = vor.u32 %v1151, %v1152
      %v1154 = vshll.u32 920167782, %v1139
      %v1155 = vshrl.u32 1326507024, %v1140
      %v1156 = vor.u32 %v1154, %v1155
      %vm1157 = vcmp.lt.s32.totalorder %v1138, 1
      %vm1158 = vcmp.lt.s32.totalorder %v1138, 2
      %vm1159 = vcmp.lt.s32.totalorder %v1138, 3
      %vm1160 = vcmp.lt.s32.totalorder %v1138, 4
      %v1161 = vsel %vm1157, %v1141, %v1144
      %v1162 = vsel %vm1160, %v1150, 2102212464
      %v1163 = vsel %vm1159, %v1147, %v1162
      %v1164 = vsel %vm1158, %v1161, %v1163
      %v1165 = vsel %vm1157, %v1144, %v1147
      %v1166 = vsel %vm1160, %v1153, 920167782
      %v1167 = vsel %vm1159, %v1150, %v1166
      %v1168 = vsel %vm1158, %v1165, %v1167
      %v1169 = vsel %vm1157, %v1147, %v1150
      %v1170 = vsel %vm1160, %v1156, 1326507024
      %v1171 = vsel %vm1159, %v1153, %v1170
      %v1172 = vsel %vm1158, %v1169, %v1171
      %v1173 = vshll.u32 %v1133, 8
      %v1174 = vand.u32 %v1173, 65535
      %v1175 = vshrl.u32 %v1173, 16
      %v1176 = vand.u32 %v1172, 65535
      %v1177 = vshrl.u32 %v1172, 16
      %v1178 = vmul.u32 %v1174, %v1176
      %v1179 = vmul.u32 %v1174, %v1177
      %v1180 = vmul.u32 %v1175, %v1176
      %v1181 = vmul.u32 %v1175, %v1177
      %v1182 = vshll.u32 %v1179, 16
      %v1183 = vshrl.u32 %v1179, 16
      %v1184 = vshll.u32 %v1180, 16
      %v1185 = vshrl.u32 %v1180, 16
      %vm1186 = vc.u32 %v1178, %v1182
      %v1187 = vsel %vm1186, 1, 0
      %v1188 = vadd.s32 %v1178, %v1182
      %v1189 = vadd.s32 %v1181, %v1187
      %vm1190 = vc.u32 %v1188, %v1184
      %v1191 = vsel %vm1190, 1, 0
      %v1192 = vadd.s32 %v1188, %v1184
      %v1193 = vadd.s32 %v1189, %v1191
      %v1194 = vadd.s32 %v1193, %v1183
      %v1195 = vadd.s32 %v1194, %v1185
      %v1196 = vand.u32 %v1173, 65535
      %v1197 = vshrl.u32 %v1173, 16
      %v1198 = vand.u32 %v1168, 65535
      %v1199 = vshrl.u32 %v1168, 16
      %v1200 = vmul.u32 %v1196, %v1198
      %v1201 = vmul.u32 %v1196, %v1199
      %v1202 = vmul.u32 %v1197, %v1198
      %v1203 = vmul.u32 %v1197, %v1199
      %v1204 = vshll.u32 %v1201, 16
      %v1205 = vshrl.u32 %v1201, 16
      %v1206 = vshll.u32 %v1202, 16
      %v1207 = vshrl.u32 %v1202, 16
      %vm1208 = vc.u32 %v1200, %v1204
      %v1209 = vsel %vm1208, 1, 0
      %v1210 = vadd.s32 %v1200, %v1204
      %v1211 = vadd.s32 %v1203, %v1209
      %vm1212 = vc.u32 %v1210, %v1206
      %v1213 = vsel %vm1212, 1, 0
      %v1214 = vadd.s32 %v1210, %v1206
      %v1215 = vadd.s32 %v1211, %v1213
      %v1216 = vadd.s32 %v1215, %v1205
      %v1217 = vadd.s32 %v1216, %v1207
      %v1218 = vmul.u32 %v1173, %v1164
      %v1219 = vadd.s32 %v1195, %v1214
      %vm1220 = vc.u32 %v1195, %v1214
      %v1221 = vadd.s32 %v1217, 1
      %v1222 = vsel %vm1220, %v1221, %v1217
      %v1223 = vadd.s32 %v1218, %v1222
      %v1224 = vadd.s32 %v1223, 536870912
      %v1225 = vshrl.u32 %v1224, 30
      %v1226 = vshll.u32 %v1225, 30
      %v1227 = vsub.s32 %v1223, %v1226
      %vm1228 = vcmp.lt.s32.totalorder %v1227, 0
      %v1229 = vsub.s32 0, %v1227
      %v1230 = vsel %vm1228, %v1229, %v1227
      %v1231 = vclz %v1230
      %v1232 = vsub.s32 %v1231, 2
      %vm1233 = vcmp.gt.s32.totalorder 0, %v1232
      %v1234 = vsel %vm1233, 0, %v1232
      %v1235 = vsub.s32 32, %v1234
      %v1236 = vshll.u32 %v1227, %v1234
      %v1237 = vshrl.u32 %v1219, %v1235
      %v1238 = vor.u32 %v1236, %v1237
      %v1239 = vsub.s32 4294967266, %v1234
      %v1240 = vadd.s32 %v1239, 127
      %v1241 = vshll.u32 %v1240, 23
      %v1242 = vor.u32 4788187, %v1241
      %v1243 = vand.u32 2147483647, %v1242
      %v1245 = vcvt.s32.f32 %v1238
      %v1246 = vmul.f32 %v1245, %v1243
      %v1247 = vxor.u32 %v1246, 2147483648
      %v1248 = vsel %vm1127, %v1247, %v1246
      %v1249 = vsub.s32 4, %v1225
      %v1250 = vsel %vm1127, %v1249, %v1225
      %v1251 = vsel %vm1126, %v809, %v1248
      %v1252 = vsel %vm1126, 0, %v1250
      %v1253 = vmul.f32 %v1251, %v1251
      %v1254 = vmul.f32 %v1253, -0.001358992
      %v1255 = vadd.f32 %v1254, 0.041655596
      %v1256 = vmul.f32 %v1253, %v1255
      %v1257 = vadd.f32 %v1256, -0.4999988
      %v1258 = vmul.f32 %v1253, %v1257
      %v1259 = vadd.f32 1.0, %v1258
      %v1260 = vmul.f32 %v1251, %v1251
      %v1261 = vmul.f32 %v1260, -0.00019511016
      %v1262 = vadd.f32 %v1261, 0.008332121
      %v1263 = vmul.f32 %v1260, %v1262
      %v1264 = vadd.f32 %v1263, -0.16666654
      %v1265 = vmul.f32 %v1260, %v1264
      %v1266 = vadd.f32 %v1265, 1.0
      %v1267 = vmul.f32 %v1266, %v1251
      %vm1268 = vweird.f32 %v809
      %v1269 = vadd.s32 %v1252, 3
      %v1270 = vand.u32 %v1269, 3
      %vm1271 = vcmp.lt.s32.totalorder %v1270, 2
      %vm1272 = vcmp.eq.s32.totalorder %v1270, 0
      %v1273 = vxor.u32 %v1267, 2147483648
      %v1274 = vsel %vm1272, %v1259, %v1273
      %vm1275 = vcmp.eq.s32.totalorder %v1270, 2
      %v1276 = vxor.u32 %v1259, 2147483648
      %v1277 = vsel %vm1275, %v1276, %v1267
      %v1278 = vsel %vm1271, %v1274, %v1277
      %v1279 = vsel %vm1268, nan, %v1278
      %v1280 = vand.u32 2147483647, %v810
      %vm1281 = vcmp.le.f32.partialorder %v1280, 0.7853982
      %vm1282 = vcmp.lt.s32.totalorder %v810, 0
      %v1283 = vand.u32 %v810, 2139095040
      %v1284 = vshrl.u32 %v1283, 23
      %v1285 = vsub.s32 %v1284, 127
      %v1286 = vand.u32 2147483647, %v810
      %v1287 = vand.u32 %v1286, 8388607
      %v1288 = vor.u32 %v1287, 8388608
      %v1289 = vsub.s32 0, %v1288
      %v1290 = vadd.s32 %v1285, 1
      %vm1291 = vcmp.gt.s32.totalorder %v1290, 0
      %v1292 = vsel %vm1291, %v1290, 0
      %v1293 = vshrl.u32 %v1292, 5
      %v1294 = vand.u32 %v1292, 31
      %v1295 = vsub.s32 32, %v1294
      %v1296 = vshrl.u32 683565275, %v1295
      %v1297 = vshll.u32 683565275, %v1294
      %v1298 = vshrl.u32 2475754826, %v1295
      %v1299 = vor.u32 %v1297, %v1298
      %v1300 = vshll.u32 2475754826, %v1294
      %v1301 = vshrl.u32 2131351028, %v1295
      %v1302 = vor.u32 %v1300, %v1301
      %v1303 = vshll.u32 2131351028, %v1294
      %v1304 = vshrl.u32 2102212464, %v1295
      %v1305 = vor.u32 %v1303, %v1304
      %v1306 = vshll.u32 2102212464, %v1294
      %v1307 = vshrl.u32 920167782, %v1295
      %v1308 = vor.u32 %v1306, %v1307
      %v1309 = vshll.u32 920167782, %v1294
      %v1310 = vshrl.u32 1326507024, %v1295
      %v1311 = vor.u32 %v1309, %v1310
      %vm1312 = vcmp.lt.s32.totalorder %v1293, 1
      %vm1313 = vcmp.lt.s32.totalorder %v1293, 2
      %vm1314 = vcmp.lt.s32.totalorder %v1293, 3
      %vm1315 = vcmp.lt.s32.totalorder %v1293, 4
      %v1316 = vsel %vm1312, %v1296, %v1299
      %v1317 = vsel %vm1315, %v1305, 2102212464
      %v1318 = vsel %vm1314, %v1302, %v1317
      %v1319 = vsel %vm1313, %v1316, %v1318
      %v1320 = vsel %vm1312, %v1299, %v1302
      %v1321 = vsel %vm1315, %v1308, 920167782
      %v1322 = vsel %vm1314, %v1305, %v1321
      %v1323 = vsel %vm1313, %v1320, %v1322
      %v1324 = vsel %vm1312, %v1302, %v1305
      %v1325 = vsel %vm1315, %v1311, 1326507024
      %v1326 = vsel %vm1314, %v1308, %v1325
      %v1327 = vsel %vm1313, %v1324, %v1326
      %v1328 = vshll.u32 %v1288, 8
      %v1329 = vand.u32 %v1328, 65535
      %v1330 = vshrl.u32 %v1328, 16
      %v1331 = vand.u32 %v1327, 65535
      %v1332 = vshrl.u32 %v1327, 16
      %v1333 = vmul.u32 %v1329, %v1331
      %v1334 = vmul.u32 %v1329, %v1332
      %v1335 = vmul.u32 %v1330, %v1331
      %v1336 = vmul.u32 %v1330, %v1332
      %v1337 = vshll.u32 %v1334, 16
      %v1338 = vshrl.u32 %v1334, 16
      %v1339 = vshll.u32 %v1335, 16
      %v1340 = vshrl.u32 %v1335, 16
      %vm1341 = vc.u32 %v1333, %v1337
      %v1342 = vsel %vm1341, 1, 0
      %v1343 = vadd.s32 %v1333, %v1337
      %v1344 = vadd.s32 %v1336, %v1342
      %vm1345 = vc.u32 %v1343, %v1339
      %v1346 = vsel %vm1345, 1, 0
      %v1347 = vadd.s32 %v1343, %v1339
      %v1348 = vadd.s32 %v1344, %v1346
      %v1349 = vadd.s32 %v1348, %v1338
      %v1350 = vadd.s32 %v1349, %v1340
      %v1351 = vand.u32 %v1328, 65535
      %v1352 = vshrl.u32 %v1328, 16
      %v1353 = vand.u32 %v1323, 65535
      %v1354 = vshrl.u32 %v1323, 16
      %v1355 = vmul.u32 %v1351, %v1353
      %v1356 = vmul.u32 %v1351, %v1354
      %v1357 = vmul.u32 %v1352, %v1353
      %v1358 = vmul.u32 %v1352, %v1354
      %v1359 = vshll.u32 %v1356, 16
      %v1360 = vshrl.u32 %v1356, 16
      %v1361 = vshll.u32 %v1357, 16
      %v1362 = vshrl.u32 %v1357, 16
      %vm1363 = vc.u32 %v1355, %v1359
      %v1364 = vsel %vm1363, 1, 0
      %v1365 = vadd.s32 %v1355, %v1359
      %v1366 = vadd.s32 %v1358, %v1364
      %vm1367 = vc.u32 %v1365, %v1361
      %v1368 = vsel %vm1367, 1, 0
      %v1369 = vadd.s32 %v1365, %v1361
      %v1370 = vadd.s32 %v1366, %v1368
      %v1371 = vadd.s32 %v1370, %v1360
      %v1372 = vadd.s32 %v1371, %v1362
      %v1373 = vmul.u32 %v1328, %v1319
      %v1374 = vadd.s32 %v1350, %v1369
      %vm1375 = vc.u32 %v1350, %v1369
      %v1376 = vadd.s32 %v1372, 1
      %v1377 = vsel %vm1375, %v1376, %v1372
      %v1378 = vadd.s32 %v1373, %v1377
      %v1379 = vadd.s32 %v1378, 536870912
      %v1380 = vshrl.u32 %v1379, 30
      %v1381 = vshll.u32 %v1380, 30
      %v1382 = vsub.s32 %v1378, %v1381
      %vm1383 = vcmp.lt.s32.totalorder %v1382, 0
      %v1384 = vsub.s32 0, %v1382
      %v1385 = vsel %vm1383, %v1384, %v1382
      %v1386 = vclz %v1385
      %v1387 = vsub.s32 %v1386, 2
      %vm1388 = vcmp.gt.s32.totalorder 0, %v1387
      %v1389 = vsel %vm1388, 0, %v1387
      %v1390 = vsub.s32 32, %v1389
      %v1391 = vshll.u32 %v1382, %v1389
      %v1392 = vshrl.u32 %v1374, %v1390
      %v1393 = vor.u32 %v1391, %v1392
      %v1394 = vsub.s32 4294967266, %v1389
      %v1395 = vadd.s32 %v1394, 127
      %v1396 = vshll.u32 %v1395, 23
      %v1397 = vor.u32 4788187, %v1396
      %v1398 = vand.u32 2147483647, %v1397
      %v1400 = vcvt.s32.f32 %v1393
      %v1401 = vmul.f32 %v1400, %v1398
      %v1402 = vxor.u32 %v1401, 2147483648
      %v1403 = vsel %vm1282, %v1402, %v1401
      %v1404 = vsub.s32 4, %v1380
      %v1405 = vsel %vm1282, %v1404, %v1380
      %v1406 = vsel %vm1281, %v810, %v1403
      %v1407 = vsel %vm1281, 0, %v1405
      %v1408 = vmul.f32 %v1406, %v1406
      %v1409 = vmul.f32 %v1408, -0.001358992
      %v1410 = vadd.f32 %v1409, 0.041655596
      %v1411 = vmul.f32 %v1408, %v1410
      %v1412 = vadd.f32 %v1411, -0.4999988
      %v1413 = vmul.f32 %v1408, %v1412
      %v1414 = vadd.f32 1.0, %v1413
      %v1415 = vmul.f32 %v1406, %v1406
      %v1416 = vmul.f32 %v1415, -0.00019511016
      %v1417 = vadd.f32 %v1416, 0.008332121
      %v1418 = vmul.f32 %v1415, %v1417
      %v1419 = vadd.f32 %v1418, -0.16666654
      %v1420 = vmul.f32 %v1415, %v1419
      %v1421 = vadd.f32 %v1420, 1.0
      %v1422 = vmul.f32 %v1421, %v1406
      %vm1423 = vweird.f32 %v810
      %v1424 = vadd.s32 %v1407, 3
      %v1425 = vand.u32 %v1424, 3
      %vm1426 = vcmp.lt.s32.totalorder %v1425, 2
      %vm1427 = vcmp.eq.s32.totalorder %v1425, 0
      %v1428 = vxor.u32 %v1422, 2147483648
      %v1429 = vsel %vm1427, %v1414, %v1428
      %vm1430 = vcmp.eq.s32.totalorder %v1425, 2
      %v1431 = vxor.u32 %v1414, 2147483648
      %v1432 = vsel %vm1430, %v1431, %v1422
      %v1433 = vsel %vm1426, %v1429, %v1432
      %v1434 = vsel %vm1423, nan, %v1433
      %v1435 = vand.u32 2147483647, %v811
      %vm1436 = vcmp.le.f32.partialorder %v1435, 0.7853982
      %vm1437 = vcmp.lt.s32.totalorder %v811, 0
      %v1438 = vand.u32 %v811, 2139095040
      %v1439 = vshrl.u32 %v1438, 23
      %v1440 = vsub.s32 %v1439, 127
      %v1441 = vand.u32 2147483647, %v811
      %v1442 = vand.u32 %v1441, 8388607
      %v1443 = vor.u32 %v1442, 8388608
      %v1444 = vsub.s32 0, %v1443
      %v1445 = vadd.s32 %v1440, 1
      %vm1446 = vcmp.gt.s32.totalorder %v1445, 0
      %v1447 = vsel %vm1446, %v1445, 0
      %v1448 = vshrl.u32 %v1447, 5
      %v1449 = vand.u32 %v1447, 31
      %v1450 = vsub.s32 32, %v1449
      %v1451 = vshrl.u32 683565275, %v1450
      %v1452 = vshll.u32 683565275, %v1449
      %v1453 = vshrl.u32 2475754826, %v1450
      %v1454 = vor.u32 %v1452, %v1453
      %v1455 = vshll.u32 2475754826, %v1449
      %v1456 = vshrl.u32 2131351028, %v1450
      %v1457 = vor.u32 %v1455, %v1456
      %v1458 = vshll.u32 2131351028, %v1449
      %v1459 = vshrl.u32 2102212464, %v1450
      %v1460 = vor.u32 %v1458, %v1459
      %v1461 = vshll.u32 2102212464, %v1449
      %v1462 = vshrl.u32 920167782, %v1450
      %v1463 = vor.u32 %v1461, %v1462
      %v1464 = vshll.u32 920167782, %v1449
      %v1465 = vshrl.u32 1326507024, %v1450
      %v1466 = vor.u32 %v1464, %v1465
      %vm1467 = vcmp.lt.s32.totalorder %v1448, 1
      %vm1468 = vcmp.lt.s32.totalorder %v1448, 2
      %vm1469 = vcmp.lt.s32.totalorder %v1448, 3
      %vm1470 = vcmp.lt.s32.totalorder %v1448, 4
      %v1471 = vsel %vm1467, %v1451, %v1454
      %v1472 = vsel %vm1470, %v1460, 2102212464
      %v1473 = vsel %vm1469, %v1457, %v1472
      %v1474 = vsel %vm1468, %v1471, %v1473
      %v1475 = vsel %vm1467, %v1454, %v1457
      %v1476 = vsel %vm1470, %v1463, 920167782
      %v1477 = vsel %vm1469, %v1460, %v1476
      %v1478 = vsel %vm1468, %v1475, %v1477
      %v1479 = vsel %vm1467, %v1457, %v1460
      %v1480 = vsel %vm1470, %v1466, 1326507024
      %v1481 = vsel %vm1469, %v1463, %v1480
      %v1482 = vsel %vm1468, %v1479, %v1481
      %v1483 = vshll.u32 %v1443, 8
      %v1484 = vand.u32 %v1483, 65535
      %v1485 = vshrl.u32 %v1483, 16
      %v1486 = vand.u32 %v1482, 65535
      %v1487 = vshrl.u32 %v1482, 16
      %v1488 = vmul.u32 %v1484, %v1486
      %v1489 = vmul.u32 %v1484, %v1487
      %v1490 = vmul.u32 %v1485, %v1486
      %v1491 = vmul.u32 %v1485, %v1487
      %v1492 = vshll.u32 %v1489, 16
      %v1493 = vshrl.u32 %v1489, 16
      %v1494 = vshll.u32 %v1490, 16
      %v1495 = vshrl.u32 %v1490, 16
      %vm1496 = vc.u32 %v1488, %v1492
      %v1497 = vsel %vm1496, 1, 0
      %v1498 = vadd.s32 %v1488, %v1492
      %v1499 = vadd.s32 %v1491, %v1497
      %vm1500 = vc.u32 %v1498, %v1494
      %v1501 = vsel %vm1500, 1, 0
      %v1502 = vadd.s32 %v1498, %v1494
      %v1503 = vadd.s32 %v1499, %v1501
      %v1504 = vadd.s32 %v1503, %v1493
      %v1505 = vadd.s32 %v1504, %v1495
      %v1506 = vand.u32 %v1483, 65535
      %v1507 = vshrl.u32 %v1483, 16
      %v1508 = vand.u32 %v1478, 65535
      %v1509 = vshrl.u32 %v1478, 16
      %v1510 = vmul.u32 %v1506, %v1508
      %v1511 = vmul.u32 %v1506, %v1509
      %v1512 = vmul.u32 %v1507, %v1508
      %v1513 = vmul.u32 %v1507, %v1509
      %v1514 = vshll.u32 %v1511, 16
      %v1515 = vshrl.u32 %v1511, 16
      %v1516 = vshll.u32 %v1512, 16
      %v1517 = vshrl.u32 %v1512, 16
      %vm1518 = vc.u32 %v1510, %v1514
      %v1519 = vsel %vm1518, 1, 0
      %v1520 = vadd.s32 %v1510, %v1514
      %v1521 = vadd.s32 %v1513, %v1519
      %vm1522 = vc.u32 %v1520, %v1516
      %v1523 = vsel %vm1522, 1, 0
      %v1524 = vadd.s32 %v1520, %v1516
      %v1525 = vadd.s32 %v1521, %v1523
      %v1526 = vadd.s32 %v1525, %v1515
      %v1527 = vadd.s32 %v1526, %v1517
      %v1528 = vmul.u32 %v1483, %v1474
      %v1529 = vadd.s32 %v1505, %v1524
      %vm1530 = vc.u32 %v1505, %v1524
      %v1531 = vadd.s32 %v1527, 1
      %v1532 = vsel %vm1530, %v1531, %v1527
      %v1533 = vadd.s32 %v1528, %v1532
      %v1534 = vadd.s32 %v1533, 536870912
      %v1535 = vshrl.u32 %v1534, 30
      %v1536 = vshll.u32 %v1535, 30
      %v1537 = vsub.s32 %v1533, %v1536
      %vm1538 = vcmp.lt.s32.totalorder %v1537, 0
      %v1539 = vsub.s32 0, %v1537
      %v1540 = vsel %vm1538, %v1539, %v1537
      %v1541 = vclz %v1540
      %v1542 = vsub.s32 %v1541, 2
      %vm1543 = vcmp.gt.s32.totalorder 0, %v1542
      %v1544 = vsel %vm1543, 0, %v1542
      %v1545 = vsub.s32 32, %v1544
      %v1546 = vshll.u32 %v1537, %v1544
      %v1547 = vshrl.u32 %v1529, %v1545
      %v1548 = vor.u32 %v1546, %v1547
      %v1549 = vsub.s32 4294967266, %v1544
      %v1550 = vadd.s32 %v1549, 127
      %v1551 = vshll.u32 %v1550, 23
      %v1552 = vor.u32 4788187, %v1551
      %v1553 = vand.u32 2147483647, %v1552
      %v1555 = vcvt.s32.f32 %v1548
      %v1556 = vmul.f32 %v1555, %v1553
      %v1557 = vxor.u32 %v1556, 2147483648
      %v1558 = vsel %vm1437, %v1557, %v1556
      %v1559 = vsub.s32 4, %v1535
      %v1560 = vsel %vm1437, %v1559, %v1535
      %v1561 = vsel %vm1436, %v811, %v1558
      %v1562 = vsel %vm1436, 0, %v1560
      %v1563 = vmul.f32 %v1561, %v1561
      %v1564 = vmul.f32 %v1563, -0.001358992
      %v1565 = vadd.f32 %v1564, 0.041655596
      %v1566 = vmul.f32 %v1563, %v1565
      %v1567 = vadd.f32 %v1566, -0.4999988
      %v1568 = vmul.f32 %v1563, %v1567
      %v1569 = vadd.f32 1.0, %v1568
      %v1570 = vmul.f32 %v1561, %v1561
      %v1571 = vmul.f32 %v1570, -0.00019511016
      %v1572 = vadd.f32 %v1571, 0.008332121
      %v1573 = vmul.f32 %v1570, %v1572
      %v1574 = vadd.f32 %v1573, -0.16666654
      %v1575 = vmul.f32 %v1570, %v1574
      %v1576 = vadd.f32 %v1575, 1.0
      %v1577 = vmul.f32 %v1576, %v1561
      %vm1578 = vweird.f32 %v811
      %v1579 = vadd.s32 %v1562, 3
      %v1580 = vand.u32 %v1579, 3
      %vm1581 = vcmp.lt.s32.totalorder %v1580, 2
      %vm1582 = vcmp.eq.s32.totalorder %v1580, 0
      %v1583 = vxor.u32 %v1577, 2147483648
      %v1584 = vsel %vm1582, %v1569, %v1583
      %vm1585 = vcmp.eq.s32.totalorder %v1580, 2
      %v1586 = vxor.u32 %v1569, 2147483648
      %v1587 = vsel %vm1585, %v1586, %v1577
      %v1588 = vsel %vm1581, %v1584, %v1587
      %v1589 = vsel %vm1578, nan, %v1588
      %v1590 = vand.u32 2147483647, %v812
      %vm1591 = vcmp.le.f32.partialorder %v1590, 0.7853982
      %vm1592 = vcmp.lt.s32.totalorder %v812, 0
      %v1593 = vand.u32 %v812, 2139095040
      %v1594 = vshrl.u32 %v1593, 23
      %v1595 = vsub.s32 %v1594, 127
      %v1596 = vand.u32 2147483647, %v812
      %v1597 = vand.u32 %v1596, 8388607
      %v1598 = vor.u32 %v1597, 8388608
      %v1599 = vsub.s32 0, %v1598
      %v1600 = vadd.s32 %v1595, 1
      %vm1601 = vcmp.gt.s32.totalorder %v1600, 0
      %v1602 = vsel %vm1601, %v1600, 0
      %v1603 = vshrl.u32 %v1602, 5
      %v1604 = vand.u32 %v1602, 31
      %v1605 = vsub.s32 32, %v1604
      %v1606 = vshrl.u32 683565275, %v1605
      %v1607 = vshll.u32 683565275, %v1604
      %v1608 = vshrl.u32 2475754826, %v1605
      %v1609 = vor.u32 %v1607, %v1608
      %v1610 = vshll.u32 2475754826, %v1604
      %v1611 = vshrl.u32 2131351028, %v1605
      %v1612 = vor.u32 %v1610, %v1611
      %v1613 = vshll.u32 2131351028, %v1604
      %v1614 = vshrl.u32 2102212464, %v1605
      %v1615 = vor.u32 %v1613, %v1614
      %v1616 = vshll.u32 2102212464, %v1604
      %v1617 = vshrl.u32 920167782, %v1605
      %v1618 = vor.u32 %v1616, %v1617
      %v1619 = vshll.u32 920167782, %v1604
      %v1620 = vshrl.u32 1326507024, %v1605
      %v1621 = vor.u32 %v1619, %v1620
      %vm1622 = vcmp.lt.s32.totalorder %v1603, 1
      %vm1623 = vcmp.lt.s32.totalorder %v1603, 2
      %vm1624 = vcmp.lt.s32.totalorder %v1603, 3
      %vm1625 = vcmp.lt.s32.totalorder %v1603, 4
      %v1626 = vsel %vm1622, %v1606, %v1609
      %v1627 = vsel %vm1625, %v1615, 2102212464
      %v1628 = vsel %vm1624, %v1612, %v1627
      %v1629 = vsel %vm1623, %v1626, %v1628
      %v1630 = vsel %vm1622, %v1609, %v1612
      %v1631 = vsel %vm1625, %v1618, 920167782
      %v1632 = vsel %vm1624, %v1615, %v1631
      %v1633 = vsel %vm1623, %v1630, %v1632
      %v1634 = vsel %vm1622, %v1612, %v1615
      %v1635 = vsel %vm1625, %v1621, 1326507024
      %v1636 = vsel %vm1624, %v1618, %v1635
      %v1637 = vsel %vm1623, %v1634, %v1636
      %v1638 = vshll.u32 %v1598, 8
      %v1639 = vand.u32 %v1638, 65535
      %v1640 = vshrl.u32 %v1638, 16
      %v1641 = vand.u32 %v1637, 65535
      %v1642 = vshrl.u32 %v1637, 16
      %v1643 = vmul.u32 %v1639, %v1641
      %v1644 = vmul.u32 %v1639, %v1642
      %v1645 = vmul.u32 %v1640, %v1641
      %v1646 = vmul.u32 %v1640, %v1642
      %v1647 = vshll.u32 %v1644, 16
      %v1648 = vshrl.u32 %v1644, 16
      %v1649 = vshll.u32 %v1645, 16
      %v1650 = vshrl.u32 %v1645, 16
      %vm1651 = vc.u32 %v1643, %v1647
      %v1652 = vsel %vm1651, 1, 0
      %v1653 = vadd.s32 %v1643, %v1647
      %v1654 = vadd.s32 %v1646, %v1652
      %vm1655 = vc.u32 %v1653, %v1649
      %v1656 = vsel %vm1655, 1, 0
      %v1657 = vadd.s32 %v1653, %v1649
      %v1658 = vadd.s32 %v1654, %v1656
      %v1659 = vadd.s32 %v1658, %v1648
      %v1660 = vadd.s32 %v1659, %v1650
      %v1661 = vand.u32 %v1638, 65535
      %v1662 = vshrl.u32 %v1638, 16
      %v1663 = vand.u32 %v1633, 65535
      %v1664 = vshrl.u32 %v1633, 16
      %v1665 = vmul.u32 %v1661, %v1663
      %v1666 = vmul.u32 %v1661, %v1664
      %v1667 = vmul.u32 %v1662, %v1663
      %v1668 = vmul.u32 %v1662, %v1664
      %v1669 = vshll.u32 %v1666, 16
      %v1670 = vshrl.u32 %v1666, 16
      %v1671 = vshll.u32 %v1667, 16
      %v1672 = vshrl.u32 %v1667, 16
      %vm1673 = vc.u32 %v1665, %v1669
      %v1674 = vsel %vm1673, 1, 0
      %v1675 = vadd.s32 %v1665, %v1669
      %v1676 = vadd.s32 %v1668, %v1674
      %vm1677 = vc.u32 %v1675, %v1671
      %v1678 = vsel %vm1677, 1, 0
      %v1679 = vadd.s32 %v1675, %v1671
      %v1680 = vadd.s32 %v1676, %v1678
      %v1681 = vadd.s32 %v1680, %v1670
      %v1682 = vadd.s32 %v1681, %v1672
      %v1683 = vmul.u32 %v1638, %v1629
      %v1684 = vadd.s32 %v1660, %v1679
      %vm1685 = vc.u32 %v1660, %v1679
      %v1686 = vadd.s32 %v1682, 1
      %v1687 = vsel %vm1685, %v1686, %v1682
      %v1688 = vadd.s32 %v1683, %v1687
      %v1689 = vadd.s32 %v1688, 536870912
      %v1690 = vshrl.u32 %v1689, 30
      %v1691 = vshll.u32 %v1690, 30
      %v1692 = vsub.s32 %v1688, %v1691
      %vm1693 = vcmp.lt.s32.totalorder %v1692, 0
      %v1694 = vsub.s32 0, %v1692
      %v1695 = vsel %vm1693, %v1694, %v1692
      %v1696 = vclz %v1695
      %v1697 = vsub.s32 %v1696, 2
      %vm1698 = vcmp.gt.s32.totalorder 0, %v1697
      %v1699 = vsel %vm1698, 0, %v1697
      %v1700 = vsub.s32 32, %v1699
      %v1701 = vshll.u32 %v1692, %v1699
      %v1702 = vshrl.u32 %v1684, %v1700
      %v1703 = vor.u32 %v1701, %v1702
      %v1704 = vsub.s32 4294967266, %v1699
      %v1705 = vadd.s32 %v1704, 127
      %v1706 = vshll.u32 %v1705, 23
      %v1707 = vor.u32 4788187, %v1706
      %v1708 = vand.u32 2147483647, %v1707
      %v1710 = vcvt.s32.f32 %v1703
      %v1711 = vmul.f32 %v1710, %v1708
      %v1712 = vxor.u32 %v1711, 2147483648
      %v1713 = vsel %vm1592, %v1712, %v1711
      %v1714 = vsub.s32 4, %v1690
      %v1715 = vsel %vm1592, %v1714, %v1690
      %v1716 = vsel %vm1591, %v812, %v1713
      %v1717 = vsel %vm1591, 0, %v1715
      %v1718 = vmul.f32 %v1716, %v1716
      %v1719 = vmul.f32 %v1718, -0.001358992
      %v1720 = vadd.f32 %v1719, 0.041655596
      %v1721 = vmul.f32 %v1718, %v1720
      %v1722 = vadd.f32 %v1721, -0.4999988
      %v1723 = vmul.f32 %v1718, %v1722
      %v1724 = vadd.f32 1.0, %v1723
      %v1725 = vmul.f32 %v1716, %v1716
      %v1726 = vmul.f32 %v1725, -0.00019511016
      %v1727 = vadd.f32 %v1726, 0.008332121
      %v1728 = vmul.f32 %v1725, %v1727
      %v1729 = vadd.f32 %v1728, -0.16666654
      %v1730 = vmul.f32 %v1725, %v1729
      %v1731 = vadd.f32 %v1730, 1.0
      %v1732 = vmul.f32 %v1731, %v1716
      %vm1733 = vweird.f32 %v812
      %v1734 = vadd.s32 %v1717, 3
      %v1735 = vand.u32 %v1734, 3
      %vm1736 = vcmp.lt.s32.totalorder %v1735, 2
      %vm1737 = vcmp.eq.s32.totalorder %v1735, 0
      %v1738 = vxor.u32 %v1732, 2147483648
      %v1739 = vsel %vm1737, %v1724, %v1738
      %vm1740 = vcmp.eq.s32.totalorder %v1735, 2
      %v1741 = vxor.u32 %v1724, 2147483648
      %v1742 = vsel %vm1740, %v1741, %v1732
      %v1743 = vsel %vm1736, %v1739, %v1742
      %v1744 = vsel %vm1733, nan, %v1743
      %v1745 = vand.u32 2147483647, %v813
      %vm1746 = vcmp.le.f32.partialorder %v1745, 0.7853982
      %vm1747 = vcmp.lt.s32.totalorder %v813, 0
      %v1748 = vand.u32 %v813, 2139095040
      %v1749 = vshrl.u32 %v1748, 23
      %v1750 = vsub.s32 %v1749, 127
      %v1751 = vand.u32 2147483647, %v813
      %v1752 = vand.u32 %v1751, 8388607
      %v1753 = vor.u32 %v1752, 8388608
      %v1754 = vsub.s32 0, %v1753
      %v1755 = vadd.s32 %v1750, 1
      %vm1756 = vcmp.gt.s32.totalorder %v1755, 0
      %v1757 = vsel %vm1756, %v1755, 0
      %v1758 = vshrl.u32 %v1757, 5
      %v1759 = vand.u32 %v1757, 31
      %v1760 = vsub.s32 32, %v1759
      %v1761 = vshrl.u32 683565275, %v1760
      %v1762 = vshll.u32 683565275, %v1759
      %v1763 = vshrl.u32 2475754826, %v1760
      %v1764 = vor.u32 %v1762, %v1763
      %v1765 = vshll.u32 2475754826, %v1759
      %v1766 = vshrl.u32 2131351028, %v1760
      %v1767 = vor.u32 %v1765, %v1766
      %v1768 = vshll.u32 2131351028, %v1759
      %v1769 = vshrl.u32 2102212464, %v1760
      %v1770 = vor.u32 %v1768, %v1769
      %v1771 = vshll.u32 2102212464, %v1759
      %v1772 = vshrl.u32 920167782, %v1760
      %v1773 = vor.u32 %v1771, %v1772
      %v1774 = vshll.u32 920167782, %v1759
      %v1775 = vshrl.u32 1326507024, %v1760
      %v1776 = vor.u32 %v1774, %v1775
      %vm1777 = vcmp.lt.s32.totalorder %v1758, 1
      %vm1778 = vcmp.lt.s32.totalorder %v1758, 2
      %vm1779 = vcmp.lt.s32.totalorder %v1758, 3
      %vm1780 = vcmp.lt.s32.totalorder %v1758, 4
      %v1781 = vsel %vm1777, %v1761, %v1764
      %v1782 = vsel %vm1780, %v1770, 2102212464
      %v1783 = vsel %vm1779, %v1767, %v1782
      %v1784 = vsel %vm1778, %v1781, %v1783
      %v1785 = vsel %vm1777, %v1764, %v1767
      %v1786 = vsel %vm1780, %v1773, 920167782
      %v1787 = vsel %vm1779, %v1770, %v1786
      %v1788 = vsel %vm1778, %v1785, %v1787
      %v1789 = vsel %vm1777, %v1767, %v1770
      %v1790 = vsel %vm1780, %v1776, 1326507024
      %v1791 = vsel %vm1779, %v1773, %v1790
      %v1792 = vsel %vm1778, %v1789, %v1791
      %v1793 = vshll.u32 %v1753, 8
      %v1794 = vand.u32 %v1793, 65535
      %v1795 = vshrl.u32 %v1793, 16
      %v1796 = vand.u32 %v1792, 65535
      %v1797 = vshrl.u32 %v1792, 16
      %v1798 = vmul.u32 %v1794, %v1796
      %v1799 = vmul.u32 %v1794, %v1797
      %v1800 = vmul.u32 %v1795, %v1796
      %v1801 = vmul.u32 %v1795, %v1797
      %v1802 = vshll.u32 %v1799, 16
      %v1803 = vshrl.u32 %v1799, 16
      %v1804 = vshll.u32 %v1800, 16
      %v1805 = vshrl.u32 %v1800, 16
      %vm1806 = vc.u32 %v1798, %v1802
      %v1807 = vsel %vm1806, 1, 0
      %v1808 = vadd.s32 %v1798, %v1802
      %v1809 = vadd.s32 %v1801, %v1807
      %vm1810 = vc.u32 %v1808, %v1804
      %v1811 = vsel %vm1810, 1, 0
      %v1812 = vadd.s32 %v1808, %v1804
      %v1813 = vadd.s32 %v1809, %v1811
      %v1814 = vadd.s32 %v1813, %v1803
      %v1815 = vadd.s32 %v1814, %v1805
      %v1816 = vand.u32 %v1793, 65535
      %v1817 = vshrl.u32 %v1793, 16
      %v1818 = vand.u32 %v1788, 65535
      %v1819 = vshrl.u32 %v1788, 16
      %v1820 = vmul.u32 %v1816, %v1818
      %v1821 = vmul.u32 %v1816, %v1819
      %v1822 = vmul.u32 %v1817, %v1818
      %v1823 = vmul.u32 %v1817, %v1819
      %v1824 = vshll.u32 %v1821, 16
      %v1825 = vshrl.u32 %v1821, 16
      %v1826 = vshll.u32 %v1822, 16
      %v1827 = vshrl.u32 %v1822, 16
      %vm1828 = vc.u32 %v1820, %v1824
      %v1829 = vsel %vm1828, 1, 0
      %v1830 = vadd.s32 %v1820, %v1824
      %v1831 = vadd.s32 %v1823, %v1829
      %vm1832 = vc.u32 %v1830, %v1826
      %v1833 = vsel %vm1832, 1, 0
      %v1834 = vadd.s32 %v1830, %v1826
      %v1835 = vadd.s32 %v1831, %v1833
      %v1836 = vadd.s32 %v1835, %v1825
      %v1837 = vadd.s32 %v1836, %v1827
      %v1838 = vmul.u32 %v1793, %v1784
      %v1839 = vadd.s32 %v1815, %v1834
      %vm1840 = vc.u32 %v1815, %v1834
      %v1841 = vadd.s32 %v1837, 1
      %v1842 = vsel %vm1840, %v1841, %v1837
      %v1843 = vadd.s32 %v1838, %v1842
      %v1844 = vadd.s32 %v1843, 536870912
      %v1845 = vshrl.u32 %v1844, 30
      %v1846 = vshll.u32 %v1845, 30
      %v1847 = vsub.s32 %v1843, %v1846
      %vm1848 = vcmp.lt.s32.totalorder %v1847, 0
      %v1849 = vsub.s32 0, %v1847
      %v1850 = vsel %vm1848, %v1849, %v1847
      %v1851 = vclz %v1850
      %v1852 = vsub.s32 %v1851, 2
      %vm1853 = vcmp.gt.s32.totalorder 0, %v1852
      %v1854 = vsel %vm1853, 0, %v1852
      %v1855 = vsub.s32 32, %v1854
      %v1856 = vshll.u32 %v1847, %v1854
      %v1857 = vshrl.u32 %v1839, %v1855
      %v1858 = vor.u32 %v1856, %v1857
      %v1859 = vsub.s32 4294967266, %v1854
      %v1860 = vadd.s32 %v1859, 127
      %v1861 = vshll.u32 %v1860, 23
      %v1862 = vor.u32 4788187, %v1861
      %v1863 = vand.u32 2147483647, %v1862
      %v1865 = vcvt.s32.f32 %v1858
      %v1866 = vmul.f32 %v1865, %v1863
      %v1867 = vxor.u32 %v1866, 2147483648
      %v1868 = vsel %vm1747, %v1867, %v1866
      %v1869 = vsub.s32 4, %v1845
      %v1870 = vsel %vm1747, %v1869, %v1845
      %v1871 = vsel %vm1746, %v813, %v1868
      %v1872 = vsel %vm1746, 0, %v1870
      %v1873 = vmul.f32 %v1871, %v1871
      %v1874 = vmul.f32 %v1873, -0.001358992
      %v1875 = vadd.f32 %v1874, 0.041655596
      %v1876 = vmul.f32 %v1873, %v1875
      %v1877 = vadd.f32 %v1876, -0.4999988
      %v1878 = vmul.f32 %v1873, %v1877
      %v1879 = vadd.f32 1.0, %v1878
      %v1880 = vmul.f32 %v1871, %v1871
      %v1881 = vmul.f32 %v1880, -0.00019511016
      %v1882 = vadd.f32 %v1881, 0.008332121
      %v1883 = vmul.f32 %v1880, %v1882
      %v1884 = vadd.f32 %v1883, -0.16666654
      %v1885 = vmul.f32 %v1880, %v1884
      %v1886 = vadd.f32 %v1885, 1.0
      %v1887 = vmul.f32 %v1886, %v1871
      %vm1888 = vweird.f32 %v813
      %v1889 = vadd.s32 %v1872, 3
      %v1890 = vand.u32 %v1889, 3
      %vm1891 = vcmp.lt.s32.totalorder %v1890, 2
      %vm1892 = vcmp.eq.s32.totalorder %v1890, 0
      %v1893 = vxor.u32 %v1887, 2147483648
      %v1894 = vsel %vm1892, %v1879, %v1893
      %vm1895 = vcmp.eq.s32.totalorder %v1890, 2
      %v1896 = vxor.u32 %v1879, 2147483648
      %v1897 = vsel %vm1895, %v1896, %v1887
      %v1898 = vsel %vm1891, %v1894, %v1897
      %v1899 = vsel %vm1888, nan, %v1898
      %v1900 = vand.u32 2147483647, %v814
      %vm1901 = vcmp.le.f32.partialorder %v1900, 0.7853982
      %vm1902 = vcmp.lt.s32.totalorder %v814, 0
      %v1903 = vand.u32 %v814, 2139095040
      %v1904 = vshrl.u32 %v1903, 23
      %v1905 = vsub.s32 %v1904, 127
      %v1906 = vand.u32 2147483647, %v814
      %v1907 = vand.u32 %v1906, 8388607
      %v1908 = vor.u32 %v1907, 8388608
      %v1909 = vsub.s32 0, %v1908
      %v1910 = vadd.s32 %v1905, 1
      %vm1911 = vcmp.gt.s32.totalorder %v1910, 0
      %v1912 = vsel %vm1911, %v1910, 0
      %v1913 = vshrl.u32 %v1912, 5
      %v1914 = vand.u32 %v1912, 31
      %v1915 = vsub.s32 32, %v1914
      %v1916 = vshrl.u32 683565275, %v1915
      %v1917 = vshll.u32 683565275, %v1914
      %v1918 = vshrl.u32 2475754826, %v1915
      %v1919 = vor.u32 %v1917, %v1918
      %v1920 = vshll.u32 2475754826, %v1914
      %v1921 = vshrl.u32 2131351028, %v1915
      %v1922 = vor.u32 %v1920, %v1921
      %v1923 = vshll.u32 2131351028, %v1914
      %v1924 = vshrl.u32 2102212464, %v1915
      %v1925 = vor.u32 %v1923, %v1924
      %v1926 = vshll.u32 2102212464, %v1914
      %v1927 = vshrl.u32 920167782, %v1915
      %v1928 = vor.u32 %v1926, %v1927
      %v1929 = vshll.u32 920167782, %v1914
      %v1930 = vshrl.u32 1326507024, %v1915
      %v1931 = vor.u32 %v1929, %v1930
      %vm1932 = vcmp.lt.s32.totalorder %v1913, 1
      %vm1933 = vcmp.lt.s32.totalorder %v1913, 2
      %vm1934 = vcmp.lt.s32.totalorder %v1913, 3
      %vm1935 = vcmp.lt.s32.totalorder %v1913, 4
      %v1936 = vsel %vm1932, %v1916, %v1919
      %v1937 = vsel %vm1935, %v1925, 2102212464
      %v1938 = vsel %vm1934, %v1922, %v1937
      %v1939 = vsel %vm1933, %v1936, %v1938
      %v1940 = vsel %vm1932, %v1919, %v1922
      %v1941 = vsel %vm1935, %v1928, 920167782
      %v1942 = vsel %vm1934, %v1925, %v1941
      %v1943 = vsel %vm1933, %v1940, %v1942
      %v1944 = vsel %vm1932, %v1922, %v1925
      %v1945 = vsel %vm1935, %v1931, 1326507024
      %v1946 = vsel %vm1934, %v1928, %v1945
      %v1947 = vsel %vm1933, %v1944, %v1946
      %v1948 = vshll.u32 %v1908, 8
      %v1949 = vand.u32 %v1948, 65535
      %v1950 = vshrl.u32 %v1948, 16
      %v1951 = vand.u32 %v1947, 65535
      %v1952 = vshrl.u32 %v1947, 16
      %v1953 = vmul.u32 %v1949, %v1951
      %v1954 = vmul.u32 %v1949, %v1952
      %v1955 = vmul.u32 %v1950, %v1951
      %v1956 = vmul.u32 %v1950, %v1952
      %v1957 = vshll.u32 %v1954, 16
      %v1958 = vshrl.u32 %v1954, 16
      %v1959 = vshll.u32 %v1955, 16
      %v1960 = vshrl.u32 %v1955, 16
      %vm1961 = vc.u32 %v1953, %v1957
      %v1962 = vsel %vm1961, 1, 0
      %v1963 = vadd.s32 %v1953, %v1957
      %v1964 = vadd.s32 %v1956, %v1962
      %vm1965 = vc.u32 %v1963, %v1959
      %v1966 = vsel %vm1965, 1, 0
      %v1967 = vadd.s32 %v1963, %v1959
      %v1968 = vadd.s32 %v1964, %v1966
      %v1969 = vadd.s32 %v1968, %v1958
      %v1970 = vadd.s32 %v1969, %v1960
      %v1971 = vand.u32 %v1948, 65535
      %v1972 = vshrl.u32 %v1948, 16
      %v1973 = vand.u32 %v1943, 65535
      %v1974 = vshrl.u32 %v1943, 16
      %v1975 = vmul.u32 %v1971, %v1973
      %v1976 = vmul.u32 %v1971, %v1974
      %v1977 = vmul.u32 %v1972, %v1973
      %v1978 = vmul.u32 %v1972, %v1974
      %v1979 = vshll.u32 %v1976, 16
      %v1980 = vshrl.u32 %v1976, 16
      %v1981 = vshll.u32 %v1977, 16
      %v1982 = vshrl.u32 %v1977, 16
      %vm1983 = vc.u32 %v1975, %v1979
      %v1984 = vsel %vm1983, 1, 0
      %v1985 = vadd.s32 %v1975, %v1979
      %v1986 = vadd.s32 %v1978, %v1984
      %vm1987 = vc.u32 %v1985, %v1981
      %v1988 = vsel %vm1987, 1, 0
      %v1989 = vadd.s32 %v1985, %v1981
      %v1990 = vadd.s32 %v1986, %v1988
      %v1991 = vadd.s32 %v1990, %v1980
      %v1992 = vadd.s32 %v1991, %v1982
      %v1993 = vmul.u32 %v1948, %v1939
      %v1994 = vadd.s32 %v1970, %v1989
      %vm1995 = vc.u32 %v1970, %v1989
      %v1996 = vadd.s32 %v1992, 1
      %v1997 = vsel %vm1995, %v1996, %v1992
      %v1998 = vadd.s32 %v1993, %v1997
      %v1999 = vadd.s32 %v1998, 536870912
      %v2000 = vshrl.u32 %v1999, 30
      %v2001 = vshll.u32 %v2000, 30
      %v2002 = vsub.s32 %v1998, %v2001
      %vm2003 = vcmp.lt.s32.totalorder %v2002, 0
      %v2004 = vsub.s32 0, %v2002
      %v2005 = vsel %vm2003, %v2004, %v2002
      %v2006 = vclz %v2005
      %v2007 = vsub.s32 %v2006, 2
      %vm2008 = vcmp.gt.s32.totalorder 0, %v2007
      %v2009 = vsel %vm2008, 0, %v2007
      %v2010 = vsub.s32 32, %v2009
      %v2011 = vshll.u32 %v2002, %v2009
      %v2012 = vshrl.u32 %v1994, %v2010
      %v2013 = vor.u32 %v2011, %v2012
      %v2014 = vsub.s32 4294967266, %v2009
      %v2015 = vadd.s32 %v2014, 127
      %v2016 = vshll.u32 %v2015, 23
      %v2017 = vor.u32 4788187, %v2016
      %v2018 = vand.u32 2147483647, %v2017
      %v2020 = vcvt.s32.f32 %v2013
      %v2021 = vmul.f32 %v2020, %v2018
      %v2022 = vxor.u32 %v2021, 2147483648
      %v2023 = vsel %vm1902, %v2022, %v2021
      %v2024 = vsub.s32 4, %v2000
      %v2025 = vsel %vm1902, %v2024, %v2000
      %v2026 = vsel %vm1901, %v814, %v2023
      %v2027 = vsel %vm1901, 0, %v2025
      %v2028 = vmul.f32 %v2026, %v2026
      %v2029 = vmul.f32 %v2028, -0.001358992
      %v2030 = vadd.f32 %v2029, 0.041655596
      %v2031 = vmul.f32 %v2028, %v2030
      %v2032 = vadd.f32 %v2031, -0.4999988
      %v2033 = vmul.f32 %v2028, %v2032
      %v2034 = vadd.f32 1.0, %v2033
      %v2035 = vmul.f32 %v2026, %v2026
      %v2036 = vmul.f32 %v2035, -0.00019511016
      %v2037 = vadd.f32 %v2036, 0.008332121
      %v2038 = vmul.f32 %v2035, %v2037
      %v2039 = vadd.f32 %v2038, -0.16666654
      %v2040 = vmul.f32 %v2035, %v2039
      %v2041 = vadd.f32 %v2040, 1.0
      %v2042 = vmul.f32 %v2041, %v2026
      %vm2043 = vweird.f32 %v814
      %v2044 = vadd.s32 %v2027, 3
      %v2045 = vand.u32 %v2044, 3
      %vm2046 = vcmp.lt.s32.totalorder %v2045, 2
      %vm2047 = vcmp.eq.s32.totalorder %v2045, 0
      %v2048 = vxor.u32 %v2042, 2147483648
      %v2049 = vsel %vm2047, %v2034, %v2048
      %vm2050 = vcmp.eq.s32.totalorder %v2045, 2
      %v2051 = vxor.u32 %v2034, 2147483648
      %v2052 = vsel %vm2050, %v2051, %v2042
      %v2053 = vsel %vm2046, %v2049, %v2052
      %v2054 = vsel %vm2043, nan, %v2053
      %v2055 = vmul.f32 %v969, %v527
      %v2056 = vmul.f32 %v1124, %v536
      %v2057 = vmul.f32 %v1279, %v545
      %v2058 = vmul.f32 %v1434, %v554
      %v2059 = vmul.f32 %v1589, %v563
      %v2060 = vmul.f32 %v1744, %v572
      %v2061 = vmul.f32 %v1899, %v581
      %v2062 = vmul.f32 %v2054, %v590
      %v2063 = vsel %vm517, %v2055, 0.0
      %2064 = vadd.xlane.f32.xlu0 %v2063
      %v2065 = vpop.xlane.xlu0 %2064
      %v2066 = vsel %vm517, %v2056, 0.0
      %2067 = vadd.xlane.f32.xlu0 %v2066
      %v2068 = vpop.xlane.xlu0 %2067
      %v2069 = vsel %vm517, %v2057, 0.0
      %2070 = vadd.xlane.f32.xlu0 %v2069
      %v2071 = vpop.xlane.xlu0 %2070
      %v2072 = vsel %vm517, %v2058, 0.0
      %2073 = vadd.xlane.f32.xlu0 %v2072
      %v2074 = vpop.xlane.xlu0 %2073
      %v2075 = vsel %vm517, %v2059, 0.0
      %2076 = vadd.xlane.f32.xlu0 %v2075
      %v2077 = vpop.xlane.xlu0 %2076
      %v2078 = vsel %vm517, %v2060, 0.0
      %2079 = vadd.xlane.f32.xlu0 %v2078
      %v2080 = vpop.xlane.xlu0 %2079
      %v2081 = vsel %vm517, %v2061, 0.0
      %2082 = vadd.xlane.f32.xlu0 %v2081
      %v2083 = vpop.xlane.xlu0 %2082
      %v2084 = vsel %vm517, %v2062, 0.0
      %2085 = vadd.xlane.f32.xlu0 %v2084
      %v2086 = vpop.xlane.xlu0 %2085
      %v2087 = vand.u32 2147483647, %v807
      %vm2088 = vcmp.le.f32.partialorder %v2087, 0.7853982
      %vm2089 = vcmp.lt.s32.totalorder %v807, 0
      %v2090 = vand.u32 %v807, 2139095040
      %v2091 = vshrl.u32 %v2090, 23
      %v2092 = vsub.s32 %v2091, 127
      %v2093 = vand.u32 2147483647, %v807
      %v2094 = vand.u32 %v2093, 8388607
      %v2095 = vor.u32 %v2094, 8388608
      %v2096 = vsub.s32 0, %v2095
      %v2097 = vadd.s32 %v2092, 1
      %vm2098 = vcmp.gt.s32.totalorder %v2097, 0
      %v2099 = vsel %vm2098, %v2097, 0
      %v2100 = vshrl.u32 %v2099, 5
      %v2101 = vand.u32 %v2099, 31
      %v2102 = vsub.s32 32, %v2101
      %v2103 = vshrl.u32 683565275, %v2102
      %v2104 = vshll.u32 683565275, %v2101
      %v2105 = vshrl.u32 2475754826, %v2102
      %v2106 = vor.u32 %v2104, %v2105
      %v2107 = vshll.u32 2475754826, %v2101
      %v2108 = vshrl.u32 2131351028, %v2102
      %v2109 = vor.u32 %v2107, %v2108
      %v2110 = vshll.u32 2131351028, %v2101
      %v2111 = vshrl.u32 2102212464, %v2102
      %v2112 = vor.u32 %v2110, %v2111
      %v2113 = vshll.u32 2102212464, %v2101
      %v2114 = vshrl.u32 920167782, %v2102
      %v2115 = vor.u32 %v2113, %v2114
      %v2116 = vshll.u32 920167782, %v2101
      %v2117 = vshrl.u32 1326507024, %v2102
      %v2118 = vor.u32 %v2116, %v2117
      %vm2119 = vcmp.lt.s32.totalorder %v2100, 1
      %vm2120 = vcmp.lt.s32.totalorder %v2100, 2
      %vm2121 = vcmp.lt.s32.totalorder %v2100, 3
      %vm2122 = vcmp.lt.s32.totalorder %v2100, 4
      %v2123 = vsel %vm2119, %v2103, %v2106
      %v2124 = vsel %vm2122, %v2112, 2102212464
      %v2125 = vsel %vm2121, %v2109, %v2124
      %v2126 = vsel %vm2120, %v2123, %v2125
      %v2127 = vsel %vm2119, %v2106, %v2109
      %v2128 = vsel %vm2122, %v2115, 920167782
      %v2129 = vsel %vm2121, %v2112, %v2128
      %v2130 = vsel %vm2120, %v2127, %v2129
      %v2131 = vsel %vm2119, %v2109, %v2112
      %v2132 = vsel %vm2122, %v2118, 1326507024
      %v2133 = vsel %vm2121, %v2115, %v2132
      %v2134 = vsel %vm2120, %v2131, %v2133
      %v2135 = vshll.u32 %v2095, 8
      %v2136 = vand.u32 %v2135, 65535
      %v2137 = vshrl.u32 %v2135, 16
      %v2138 = vand.u32 %v2134, 65535
      %v2139 = vshrl.u32 %v2134, 16
      %v2140 = vmul.u32 %v2136, %v2138
      %v2141 = vmul.u32 %v2136, %v2139
      %v2142 = vmul.u32 %v2137, %v2138
      %v2143 = vmul.u32 %v2137, %v2139
      %v2144 = vshll.u32 %v2141, 16
      %v2145 = vshrl.u32 %v2141, 16
      %v2146 = vshll.u32 %v2142, 16
      %v2147 = vshrl.u32 %v2142, 16
      %vm2148 = vc.u32 %v2140, %v2144
      %v2149 = vsel %vm2148, 1, 0
      %v2150 = vadd.s32 %v2140, %v2144
      %v2151 = vadd.s32 %v2143, %v2149
      %vm2152 = vc.u32 %v2150, %v2146
      %v2153 = vsel %vm2152, 1, 0
      %v2154 = vadd.s32 %v2150, %v2146
      %v2155 = vadd.s32 %v2151, %v2153
      %v2156 = vadd.s32 %v2155, %v2145
      %v2157 = vadd.s32 %v2156, %v2147
      %v2158 = vand.u32 %v2135, 65535
      %v2159 = vshrl.u32 %v2135, 16
      %v2160 = vand.u32 %v2130, 65535
      %v2161 = vshrl.u32 %v2130, 16
      %v2162 = vmul.u32 %v2158, %v2160
      %v2163 = vmul.u32 %v2158, %v2161
      %v2164 = vmul.u32 %v2159, %v2160
      %v2165 = vmul.u32 %v2159, %v2161
      %v2166 = vshll.u32 %v2163, 16
      %v2167 = vshrl.u32 %v2163, 16
      %v2168 = vshll.u32 %v2164, 16
      %v2169 = vshrl.u32 %v2164, 16
      %vm2170 = vc.u32 %v2162, %v2166
      %v2171 = vsel %vm2170, 1, 0
      %v2172 = vadd.s32 %v2162, %v2166
      %v2173 = vadd.s32 %v2165, %v2171
      %vm2174 = vc.u32 %v2172, %v2168
      %v2175 = vsel %vm2174, 1, 0
      %v2176 = vadd.s32 %v2172, %v2168
      %v2177 = vadd.s32 %v2173, %v2175
      %v2178 = vadd.s32 %v2177, %v2167
      %v2179 = vadd.s32 %v2178, %v2169
      %v2180 = vmul.u32 %v2135, %v2126
      %v2181 = vadd.s32 %v2157, %v2176
      %vm2182 = vc.u32 %v2157, %v2176
      %v2183 = vadd.s32 %v2179, 1
      %v2184 = vsel %vm2182, %v2183, %v2179
      %v2185 = vadd.s32 %v2180, %v2184
      %v2186 = vadd.s32 %v2185, 536870912
      %v2187 = vshrl.u32 %v2186, 30
      %v2188 = vshll.u32 %v2187, 30
      %v2189 = vsub.s32 %v2185, %v2188
      %vm2190 = vcmp.lt.s32.totalorder %v2189, 0
      %v2191 = vsub.s32 0, %v2189
      %v2192 = vsel %vm2190, %v2191, %v2189
      %v2193 = vclz %v2192
      %v2194 = vsub.s32 %v2193, 2
      %vm2195 = vcmp.gt.s32.totalorder 0, %v2194
      %v2196 = vsel %vm2195, 0, %v2194
      %v2197 = vsub.s32 32, %v2196
      %v2198 = vshll.u32 %v2189, %v2196
      %v2199 = vshrl.u32 %v2181, %v2197
      %v2200 = vor.u32 %v2198, %v2199
      %v2201 = vsub.s32 4294967266, %v2196
      %v2202 = vadd.s32 %v2201, 127
      %v2203 = vshll.u32 %v2202, 23
      %v2204 = vor.u32 4788187, %v2203
      %v2205 = vand.u32 2147483647, %v2204
      %v2207 = vcvt.s32.f32 %v2200
      %v2208 = vmul.f32 %v2207, %v2205
      %v2209 = vxor.u32 %v2208, 2147483648
      %v2210 = vsel %vm2089, %v2209, %v2208
      %v2211 = vsub.s32 4, %v2187
      %v2212 = vsel %vm2089, %v2211, %v2187
      %v2213 = vsel %vm2088, %v807, %v2210
      %v2214 = vsel %vm2088, 0, %v2212
      %v2215 = vmul.f32 %v2213, %v2213
      %v2216 = vmul.f32 %v2215, -0.001358992
      %v2217 = vadd.f32 %v2216, 0.041655596
      %v2218 = vmul.f32 %v2215, %v2217
      %v2219 = vadd.f32 %v2218, -0.4999988
      %v2220 = vmul.f32 %v2215, %v2219
      %v2221 = vadd.f32 1.0, %v2220
      %v2222 = vmul.f32 %v2213, %v2213
      %v2223 = vmul.f32 %v2222, -0.00019511016
      %v2224 = vadd.f32 %v2223, 0.008332121
      %v2225 = vmul.f32 %v2222, %v2224
      %v2226 = vadd.f32 %v2225, -0.16666654
      %v2227 = vmul.f32 %v2222, %v2226
      %v2228 = vadd.f32 %v2227, 1.0
      %v2229 = vmul.f32 %v2228, %v2213
      %vm2230 = vweird.f32 %v807
      %v2231 = vand.u32 %v2214, 3
      %vm2232 = vcmp.lt.s32.totalorder %v2231, 2
      %vm2233 = vcmp.eq.s32.totalorder %v2231, 0
      %v2234 = vxor.u32 %v2229, 2147483648
      %v2235 = vsel %vm2233, %v2221, %v2234
      %vm2236 = vcmp.eq.s32.totalorder %v2231, 2
      %v2237 = vxor.u32 %v2221, 2147483648
      %v2238 = vsel %vm2236, %v2237, %v2229
      %v2239 = vsel %vm2232, %v2235, %v2238
      %v2240 = vsel %vm2230, nan, %v2239
      %v2241 = vand.u32 2147483647, %v808
      %vm2242 = vcmp.le.f32.partialorder %v2241, 0.7853982
      %vm2243 = vcmp.lt.s32.totalorder %v808, 0
      %v2244 = vand.u32 %v808, 2139095040
      %v2245 = vshrl.u32 %v2244, 23
      %v2246 = vsub.s32 %v2245, 127
      %v2247 = vand.u32 2147483647, %v808
      %v2248 = vand.u32 %v2247, 8388607
      %v2249 = vor.u32 %v2248, 8388608
      %v2250 = vsub.s32 0, %v2249
      %v2251 = vadd.s32 %v2246, 1
      %vm2252 = vcmp.gt.s32.totalorder %v2251, 0
      %v2253 = vsel %vm2252, %v2251, 0
      %v2254 = vshrl.u32 %v2253, 5
      %v2255 = vand.u32 %v2253, 31
      %v2256 = vsub.s32 32, %v2255
      %v2257 = vshrl.u32 683565275, %v2256
      %v2258 = vshll.u32 683565275, %v2255
      %v2259 = vshrl.u32 2475754826, %v2256
      %v2260 = vor.u32 %v2258, %v2259
      %v2261 = vshll.u32 2475754826, %v2255
      %v2262 = vshrl.u32 2131351028, %v2256
      %v2263 = vor.u32 %v2261, %v2262
      %v2264 = vshll.u32 2131351028, %v2255
      %v2265 = vshrl.u32 2102212464, %v2256
      %v2266 = vor.u32 %v2264, %v2265
      %v2267 = vshll.u32 2102212464, %v2255
      %v2268 = vshrl.u32 920167782, %v2256
      %v2269 = vor.u32 %v2267, %v2268
      %v2270 = vshll.u32 920167782, %v2255
      %v2271 = vshrl.u32 1326507024, %v2256
      %v2272 = vor.u32 %v2270, %v2271
      %vm2273 = vcmp.lt.s32.totalorder %v2254, 1
      %vm2274 = vcmp.lt.s32.totalorder %v2254, 2
      %vm2275 = vcmp.lt.s32.totalorder %v2254, 3
      %vm2276 = vcmp.lt.s32.totalorder %v2254, 4
      %v2277 = vsel %vm2273, %v2257, %v2260
      %v2278 = vsel %vm2276, %v2266, 2102212464
      %v2279 = vsel %vm2275, %v2263, %v2278
      %v2280 = vsel %vm2274, %v2277, %v2279
      %v2281 = vsel %vm2273, %v2260, %v2263
      %v2282 = vsel %vm2276, %v2269, 920167782
      %v2283 = vsel %vm2275, %v2266, %v2282
      %v2284 = vsel %vm2274, %v2281, %v2283
      %v2285 = vsel %vm2273, %v2263, %v2266
      %v2286 = vsel %vm2276, %v2272, 1326507024
      %v2287 = vsel %vm2275, %v2269, %v2286
      %v2288 = vsel %vm2274, %v2285, %v2287
      %v2289 = vshll.u32 %v2249, 8
      %v2290 = vand.u32 %v2289, 65535
      %v2291 = vshrl.u32 %v2289, 16
      %v2292 = vand.u32 %v2288, 65535
      %v2293 = vshrl.u32 %v2288, 16
      %v2294 = vmul.u32 %v2290, %v2292
      %v2295 = vmul.u32 %v2290, %v2293
      %v2296 = vmul.u32 %v2291, %v2292
      %v2297 = vmul.u32 %v2291, %v2293
      %v2298 = vshll.u32 %v2295, 16
      %v2299 = vshrl.u32 %v2295, 16
      %v2300 = vshll.u32 %v2296, 16
      %v2301 = vshrl.u32 %v2296, 16
      %vm2302 = vc.u32 %v2294, %v2298
      %v2303 = vsel %vm2302, 1, 0
      %v2304 = vadd.s32 %v2294, %v2298
      %v2305 = vadd.s32 %v2297, %v2303
      %vm2306 = vc.u32 %v2304, %v2300
      %v2307 = vsel %vm2306, 1, 0
      %v2308 = vadd.s32 %v2304, %v2300
      %v2309 = vadd.s32 %v2305, %v2307
      %v2310 = vadd.s32 %v2309, %v2299
      %v2311 = vadd.s32 %v2310, %v2301
      %v2312 = vand.u32 %v2289, 65535
      %v2313 = vshrl.u32 %v2289, 16
      %v2314 = vand.u32 %v2284, 65535
      %v2315 = vshrl.u32 %v2284, 16
      %v2316 = vmul.u32 %v2312, %v2314
      %v2317 = vmul.u32 %v2312, %v2315
      %v2318 = vmul.u32 %v2313, %v2314
      %v2319 = vmul.u32 %v2313, %v2315
      %v2320 = vshll.u32 %v2317, 16
      %v2321 = vshrl.u32 %v2317, 16
      %v2322 = vshll.u32 %v2318, 16
      %v2323 = vshrl.u32 %v2318, 16
      %vm2324 = vc.u32 %v2316, %v2320
      %v2325 = vsel %vm2324, 1, 0
      %v2326 = vadd.s32 %v2316, %v2320
      %v2327 = vadd.s32 %v2319, %v2325
      %vm2328 = vc.u32 %v2326, %v2322
      %v2329 = vsel %vm2328, 1, 0
      %v2330 = vadd.s32 %v2326, %v2322
      %v2331 = vadd.s32 %v2327, %v2329
      %v2332 = vadd.s32 %v2331, %v2321
      %v2333 = vadd.s32 %v2332, %v2323
      %v2334 = vmul.u32 %v2289, %v2280
      %v2335 = vadd.s32 %v2311, %v2330
      %vm2336 = vc.u32 %v2311, %v2330
      %v2337 = vadd.s32 %v2333, 1
      %v2338 = vsel %vm2336, %v2337, %v2333
      %v2339 = vadd.s32 %v2334, %v2338
      %v2340 = vadd.s32 %v2339, 536870912
      %v2341 = vshrl.u32 %v2340, 30
      %v2342 = vshll.u32 %v2341, 30
      %v2343 = vsub.s32 %v2339, %v2342
      %vm2344 = vcmp.lt.s32.totalorder %v2343, 0
      %v2345 = vsub.s32 0, %v2343
      %v2346 = vsel %vm2344, %v2345, %v2343
      %v2347 = vclz %v2346
      %v2348 = vsub.s32 %v2347, 2
      %vm2349 = vcmp.gt.s32.totalorder 0, %v2348
      %v2350 = vsel %vm2349, 0, %v2348
      %v2351 = vsub.s32 32, %v2350
      %v2352 = vshll.u32 %v2343, %v2350
      %v2353 = vshrl.u32 %v2335, %v2351
      %v2354 = vor.u32 %v2352, %v2353
      %v2355 = vsub.s32 4294967266, %v2350
      %v2356 = vadd.s32 %v2355, 127
      %v2357 = vshll.u32 %v2356, 23
      %v2358 = vor.u32 4788187, %v2357
      %v2359 = vand.u32 2147483647, %v2358
      %v2361 = vcvt.s32.f32 %v2354
      %v2362 = vmul.f32 %v2361, %v2359
      %v2363 = vxor.u32 %v2362, 2147483648
      %v2364 = vsel %vm2243, %v2363, %v2362
      %v2365 = vsub.s32 4, %v2341
      %v2366 = vsel %vm2243, %v2365, %v2341
      %v2367 = vsel %vm2242, %v808, %v2364
      %v2368 = vsel %vm2242, 0, %v2366
      %v2369 = vmul.f32 %v2367, %v2367
      %v2370 = vmul.f32 %v2369, -0.001358992
      %v2371 = vadd.f32 %v2370, 0.041655596
      %v2372 = vmul.f32 %v2369, %v2371
      %v2373 = vadd.f32 %v2372, -0.4999988
      %v2374 = vmul.f32 %v2369, %v2373
      %v2375 = vadd.f32 1.0, %v2374
      %v2376 = vmul.f32 %v2367, %v2367
      %v2377 = vmul.f32 %v2376, -0.00019511016
      %v2378 = vadd.f32 %v2377, 0.008332121
      %v2379 = vmul.f32 %v2376, %v2378
      %v2380 = vadd.f32 %v2379, -0.16666654
      %v2381 = vmul.f32 %v2376, %v2380
      %v2382 = vadd.f32 %v2381, 1.0
      %v2383 = vmul.f32 %v2382, %v2367
      %vm2384 = vweird.f32 %v808
      %v2385 = vand.u32 %v2368, 3
      %vm2386 = vcmp.lt.s32.totalorder %v2385, 2
      %vm2387 = vcmp.eq.s32.totalorder %v2385, 0
      %v2388 = vxor.u32 %v2383, 2147483648
      %v2389 = vsel %vm2387, %v2375, %v2388
      %vm2390 = vcmp.eq.s32.totalorder %v2385, 2
      %v2391 = vxor.u32 %v2375, 2147483648
      %v2392 = vsel %vm2390, %v2391, %v2383
      %v2393 = vsel %vm2386, %v2389, %v2392
      %v2394 = vsel %vm2384, nan, %v2393
      %v2395 = vand.u32 2147483647, %v809
      %vm2396 = vcmp.le.f32.partialorder %v2395, 0.7853982
      %vm2397 = vcmp.lt.s32.totalorder %v809, 0
      %v2398 = vand.u32 %v809, 2139095040
      %v2399 = vshrl.u32 %v2398, 23
      %v2400 = vsub.s32 %v2399, 127
      %v2401 = vand.u32 2147483647, %v809
      %v2402 = vand.u32 %v2401, 8388607
      %v2403 = vor.u32 %v2402, 8388608
      %v2404 = vsub.s32 0, %v2403
      %v2405 = vadd.s32 %v2400, 1
      %vm2406 = vcmp.gt.s32.totalorder %v2405, 0
      %v2407 = vsel %vm2406, %v2405, 0
      %v2408 = vshrl.u32 %v2407, 5
      %v2409 = vand.u32 %v2407, 31
      %v2410 = vsub.s32 32, %v2409
      %v2411 = vshrl.u32 683565275, %v2410
      %v2412 = vshll.u32 683565275, %v2409
      %v2413 = vshrl.u32 2475754826, %v2410
      %v2414 = vor.u32 %v2412, %v2413
      %v2415 = vshll.u32 2475754826, %v2409
      %v2416 = vshrl.u32 2131351028, %v2410
      %v2417 = vor.u32 %v2415, %v2416
      %v2418 = vshll.u32 2131351028, %v2409
      %v2419 = vshrl.u32 2102212464, %v2410
      %v2420 = vor.u32 %v2418, %v2419
      %v2421 = vshll.u32 2102212464, %v2409
      %v2422 = vshrl.u32 920167782, %v2410
      %v2423 = vor.u32 %v2421, %v2422
      %v2424 = vshll.u32 920167782, %v2409
      %v2425 = vshrl.u32 1326507024, %v2410
      %v2426 = vor.u32 %v2424, %v2425
      %vm2427 = vcmp.lt.s32.totalorder %v2408, 1
      %vm2428 = vcmp.lt.s32.totalorder %v2408, 2
      %vm2429 = vcmp.lt.s32.totalorder %v2408, 3
      %vm2430 = vcmp.lt.s32.totalorder %v2408, 4
      %v2431 = vsel %vm2427, %v2411, %v2414
      %v2432 = vsel %vm2430, %v2420, 2102212464
      %v2433 = vsel %vm2429, %v2417, %v2432
      %v2434 = vsel %vm2428, %v2431, %v2433
      %v2435 = vsel %vm2427, %v2414, %v2417
      %v2436 = vsel %vm2430, %v2423, 920167782
      %v2437 = vsel %vm2429, %v2420, %v2436
      %v2438 = vsel %vm2428, %v2435, %v2437
      %v2439 = vsel %vm2427, %v2417, %v2420
      %v2440 = vsel %vm2430, %v2426, 1326507024
      %v2441 = vsel %vm2429, %v2423, %v2440
      %v2442 = vsel %vm2428, %v2439, %v2441
      %v2443 = vshll.u32 %v2403, 8
      %v2444 = vand.u32 %v2443, 65535
      %v2445 = vshrl.u32 %v2443, 16
      %v2446 = vand.u32 %v2442, 65535
      %v2447 = vshrl.u32 %v2442, 16
      %v2448 = vmul.u32 %v2444, %v2446
      %v2449 = vmul.u32 %v2444, %v2447
      %v2450 = vmul.u32 %v2445, %v2446
      %v2451 = vmul.u32 %v2445, %v2447
      %v2452 = vshll.u32 %v2449, 16
      %v2453 = vshrl.u32 %v2449, 16
      %v2454 = vshll.u32 %v2450, 16
      %v2455 = vshrl.u32 %v2450, 16
      %vm2456 = vc.u32 %v2448, %v2452
      %v2457 = vsel %vm2456, 1, 0
      %v2458 = vadd.s32 %v2448, %v2452
      %v2459 = vadd.s32 %v2451, %v2457
      %vm2460 = vc.u32 %v2458, %v2454
      %v2461 = vsel %vm2460, 1, 0
      %v2462 = vadd.s32 %v2458, %v2454
      %v2463 = vadd.s32 %v2459, %v2461
      %v2464 = vadd.s32 %v2463, %v2453
      %v2465 = vadd.s32 %v2464, %v2455
      %v2466 = vand.u32 %v2443, 65535
      %v2467 = vshrl.u32 %v2443, 16
      %v2468 = vand.u32 %v2438, 65535
      %v2469 = vshrl.u32 %v2438, 16
      %v2470 = vmul.u32 %v2466, %v2468
      %v2471 = vmul.u32 %v2466, %v2469
      %v2472 = vmul.u32 %v2467, %v2468
      %v2473 = vmul.u32 %v2467, %v2469
      %v2474 = vshll.u32 %v2471, 16
      %v2475 = vshrl.u32 %v2471, 16
      %v2476 = vshll.u32 %v2472, 16
      %v2477 = vshrl.u32 %v2472, 16
      %vm2478 = vc.u32 %v2470, %v2474
      %v2479 = vsel %vm2478, 1, 0
      %v2480 = vadd.s32 %v2470, %v2474
      %v2481 = vadd.s32 %v2473, %v2479
      %vm2482 = vc.u32 %v2480, %v2476
      %v2483 = vsel %vm2482, 1, 0
      %v2484 = vadd.s32 %v2480, %v2476
      %v2485 = vadd.s32 %v2481, %v2483
      %v2486 = vadd.s32 %v2485, %v2475
      %v2487 = vadd.s32 %v2486, %v2477
      %v2488 = vmul.u32 %v2443, %v2434
      %v2489 = vadd.s32 %v2465, %v2484
      %vm2490 = vc.u32 %v2465, %v2484
      %v2491 = vadd.s32 %v2487, 1
      %v2492 = vsel %vm2490, %v2491, %v2487
      %v2493 = vadd.s32 %v2488, %v2492
      %v2494 = vadd.s32 %v2493, 536870912
      %v2495 = vshrl.u32 %v2494, 30
      %v2496 = vshll.u32 %v2495, 30
      %v2497 = vsub.s32 %v2493, %v2496
      %vm2498 = vcmp.lt.s32.totalorder %v2497, 0
      %v2499 = vsub.s32 0, %v2497
      %v2500 = vsel %vm2498, %v2499, %v2497
      %v2501 = vclz %v2500
      %v2502 = vsub.s32 %v2501, 2
      %vm2503 = vcmp.gt.s32.totalorder 0, %v2502
      %v2504 = vsel %vm2503, 0, %v2502
      %v2505 = vsub.s32 32, %v2504
      %v2506 = vshll.u32 %v2497, %v2504
      %v2507 = vshrl.u32 %v2489, %v2505
      %v2508 = vor.u32 %v2506, %v2507
      %v2509 = vsub.s32 4294967266, %v2504
      %v2510 = vadd.s32 %v2509, 127
      %v2511 = vshll.u32 %v2510, 23
      %v2512 = vor.u32 4788187, %v2511
      %v2513 = vand.u32 2147483647, %v2512
      %v2515 = vcvt.s32.f32 %v2508
      %v2516 = vmul.f32 %v2515, %v2513
      %v2517 = vxor.u32 %v2516, 2147483648
      %v2518 = vsel %vm2397, %v2517, %v2516
      %v2519 = vsub.s32 4, %v2495
      %v2520 = vsel %vm2397, %v2519, %v2495
      %v2521 = vsel %vm2396, %v809, %v2518
      %v2522 = vsel %vm2396, 0, %v2520
      %v2523 = vmul.f32 %v2521, %v2521
      %v2524 = vmul.f32 %v2523, -0.001358992
      %v2525 = vadd.f32 %v2524, 0.041655596
      %v2526 = vmul.f32 %v2523, %v2525
      %v2527 = vadd.f32 %v2526, -0.4999988
      %v2528 = vmul.f32 %v2523, %v2527
      %v2529 = vadd.f32 1.0, %v2528
      %v2530 = vmul.f32 %v2521, %v2521
      %v2531 = vmul.f32 %v2530, -0.00019511016
      %v2532 = vadd.f32 %v2531, 0.008332121
      %v2533 = vmul.f32 %v2530, %v2532
      %v2534 = vadd.f32 %v2533, -0.16666654
      %v2535 = vmul.f32 %v2530, %v2534
      %v2536 = vadd.f32 %v2535, 1.0
      %v2537 = vmul.f32 %v2536, %v2521
      %vm2538 = vweird.f32 %v809
      %v2539 = vand.u32 %v2522, 3
      %vm2540 = vcmp.lt.s32.totalorder %v2539, 2
      %vm2541 = vcmp.eq.s32.totalorder %v2539, 0
      %v2542 = vxor.u32 %v2537, 2147483648
      %v2543 = vsel %vm2541, %v2529, %v2542
      %vm2544 = vcmp.eq.s32.totalorder %v2539, 2
      %v2545 = vxor.u32 %v2529, 2147483648
      %v2546 = vsel %vm2544, %v2545, %v2537
      %v2547 = vsel %vm2540, %v2543, %v2546
      %v2548 = vsel %vm2538, nan, %v2547
      %v2549 = vand.u32 2147483647, %v810
      %vm2550 = vcmp.le.f32.partialorder %v2549, 0.7853982
      %vm2551 = vcmp.lt.s32.totalorder %v810, 0
      %v2552 = vand.u32 %v810, 2139095040
      %v2553 = vshrl.u32 %v2552, 23
      %v2554 = vsub.s32 %v2553, 127
      %v2555 = vand.u32 2147483647, %v810
      %v2556 = vand.u32 %v2555, 8388607
      %v2557 = vor.u32 %v2556, 8388608
      %v2558 = vsub.s32 0, %v2557
      %v2559 = vadd.s32 %v2554, 1
      %vm2560 = vcmp.gt.s32.totalorder %v2559, 0
      %v2561 = vsel %vm2560, %v2559, 0
      %v2562 = vshrl.u32 %v2561, 5
      %v2563 = vand.u32 %v2561, 31
      %v2564 = vsub.s32 32, %v2563
      %v2565 = vshrl.u32 683565275, %v2564
      %v2566 = vshll.u32 683565275, %v2563
      %v2567 = vshrl.u32 2475754826, %v2564
      %v2568 = vor.u32 %v2566, %v2567
      %v2569 = vshll.u32 2475754826, %v2563
      %v2570 = vshrl.u32 2131351028, %v2564
      %v2571 = vor.u32 %v2569, %v2570
      %v2572 = vshll.u32 2131351028, %v2563
      %v2573 = vshrl.u32 2102212464, %v2564
      %v2574 = vor.u32 %v2572, %v2573
      %v2575 = vshll.u32 2102212464, %v2563
      %v2576 = vshrl.u32 920167782, %v2564
      %v2577 = vor.u32 %v2575, %v2576
      %v2578 = vshll.u32 920167782, %v2563
      %v2579 = vshrl.u32 1326507024, %v2564
      %v2580 = vor.u32 %v2578, %v2579
      %vm2581 = vcmp.lt.s32.totalorder %v2562, 1
      %vm2582 = vcmp.lt.s32.totalorder %v2562, 2
      %vm2583 = vcmp.lt.s32.totalorder %v2562, 3
      %vm2584 = vcmp.lt.s32.totalorder %v2562, 4
      %v2585 = vsel %vm2581, %v2565, %v2568
      %v2586 = vsel %vm2584, %v2574, 2102212464
      %v2587 = vsel %vm2583, %v2571, %v2586
      %v2588 = vsel %vm2582, %v2585, %v2587
      %v2589 = vsel %vm2581, %v2568, %v2571
      %v2590 = vsel %vm2584, %v2577, 920167782
      %v2591 = vsel %vm2583, %v2574, %v2590
      %v2592 = vsel %vm2582, %v2589, %v2591
      %v2593 = vsel %vm2581, %v2571, %v2574
      %v2594 = vsel %vm2584, %v2580, 1326507024
      %v2595 = vsel %vm2583, %v2577, %v2594
      %v2596 = vsel %vm2582, %v2593, %v2595
      %v2597 = vshll.u32 %v2557, 8
      %v2598 = vand.u32 %v2597, 65535
      %v2599 = vshrl.u32 %v2597, 16
      %v2600 = vand.u32 %v2596, 65535
      %v2601 = vshrl.u32 %v2596, 16
      %v2602 = vmul.u32 %v2598, %v2600
      %v2603 = vmul.u32 %v2598, %v2601
      %v2604 = vmul.u32 %v2599, %v2600
      %v2605 = vmul.u32 %v2599, %v2601
      %v2606 = vshll.u32 %v2603, 16
      %v2607 = vshrl.u32 %v2603, 16
      %v2608 = vshll.u32 %v2604, 16
      %v2609 = vshrl.u32 %v2604, 16
      %vm2610 = vc.u32 %v2602, %v2606
      %v2611 = vsel %vm2610, 1, 0
      %v2612 = vadd.s32 %v2602, %v2606
      %v2613 = vadd.s32 %v2605, %v2611
      %vm2614 = vc.u32 %v2612, %v2608
      %v2615 = vsel %vm2614, 1, 0
      %v2616 = vadd.s32 %v2612, %v2608
      %v2617 = vadd.s32 %v2613, %v2615
      %v2618 = vadd.s32 %v2617, %v2607
      %v2619 = vadd.s32 %v2618, %v2609
      %v2620 = vand.u32 %v2597, 65535
      %v2621 = vshrl.u32 %v2597, 16
      %v2622 = vand.u32 %v2592, 65535
      %v2623 = vshrl.u32 %v2592, 16
      %v2624 = vmul.u32 %v2620, %v2622
      %v2625 = vmul.u32 %v2620, %v2623
      %v2626 = vmul.u32 %v2621, %v2622
      %v2627 = vmul.u32 %v2621, %v2623
      %v2628 = vshll.u32 %v2625, 16
      %v2629 = vshrl.u32 %v2625, 16
      %v2630 = vshll.u32 %v2626, 16
      %v2631 = vshrl.u32 %v2626, 16
      %vm2632 = vc.u32 %v2624, %v2628
      %v2633 = vsel %vm2632, 1, 0
      %v2634 = vadd.s32 %v2624, %v2628
      %v2635 = vadd.s32 %v2627, %v2633
      %vm2636 = vc.u32 %v2634, %v2630
      %v2637 = vsel %vm2636, 1, 0
      %v2638 = vadd.s32 %v2634, %v2630
      %v2639 = vadd.s32 %v2635, %v2637
      %v2640 = vadd.s32 %v2639, %v2629
      %v2641 = vadd.s32 %v2640, %v2631
      %v2642 = vmul.u32 %v2597, %v2588
      %v2643 = vadd.s32 %v2619, %v2638
      %vm2644 = vc.u32 %v2619, %v2638
      %v2645 = vadd.s32 %v2641, 1
      %v2646 = vsel %vm2644, %v2645, %v2641
      %v2647 = vadd.s32 %v2642, %v2646
      %v2648 = vadd.s32 %v2647, 536870912
      %v2649 = vshrl.u32 %v2648, 30
      %v2650 = vshll.u32 %v2649, 30
      %v2651 = vsub.s32 %v2647, %v2650
      %vm2652 = vcmp.lt.s32.totalorder %v2651, 0
      %v2653 = vsub.s32 0, %v2651
      %v2654 = vsel %vm2652, %v2653, %v2651
      %v2655 = vclz %v2654
      %v2656 = vsub.s32 %v2655, 2
      %vm2657 = vcmp.gt.s32.totalorder 0, %v2656
      %v2658 = vsel %vm2657, 0, %v2656
      %v2659 = vsub.s32 32, %v2658
      %v2660 = vshll.u32 %v2651, %v2658
      %v2661 = vshrl.u32 %v2643, %v2659
      %v2662 = vor.u32 %v2660, %v2661
      %v2663 = vsub.s32 4294967266, %v2658
      %v2664 = vadd.s32 %v2663, 127
      %v2665 = vshll.u32 %v2664, 23
      %v2666 = vor.u32 4788187, %v2665
      %v2667 = vand.u32 2147483647, %v2666
      %v2669 = vcvt.s32.f32 %v2662
      %v2670 = vmul.f32 %v2669, %v2667
      %v2671 = vxor.u32 %v2670, 2147483648
      %v2672 = vsel %vm2551, %v2671, %v2670
      %v2673 = vsub.s32 4, %v2649
      %v2674 = vsel %vm2551, %v2673, %v2649
      %v2675 = vsel %vm2550, %v810, %v2672
      %v2676 = vsel %vm2550, 0, %v2674
      %v2677 = vmul.f32 %v2675, %v2675
      %v2678 = vmul.f32 %v2677, -0.001358992
      %v2679 = vadd.f32 %v2678, 0.041655596
      %v2680 = vmul.f32 %v2677, %v2679
      %v2681 = vadd.f32 %v2680, -0.4999988
      %v2682 = vmul.f32 %v2677, %v2681
      %v2683 = vadd.f32 1.0, %v2682
      %v2684 = vmul.f32 %v2675, %v2675
      %v2685 = vmul.f32 %v2684, -0.00019511016
      %v2686 = vadd.f32 %v2685, 0.008332121
      %v2687 = vmul.f32 %v2684, %v2686
      %v2688 = vadd.f32 %v2687, -0.16666654
      %v2689 = vmul.f32 %v2684, %v2688
      %v2690 = vadd.f32 %v2689, 1.0
      %v2691 = vmul.f32 %v2690, %v2675
      %vm2692 = vweird.f32 %v810
      %v2693 = vand.u32 %v2676, 3
      %vm2694 = vcmp.lt.s32.totalorder %v2693, 2
      %vm2695 = vcmp.eq.s32.totalorder %v2693, 0
      %v2696 = vxor.u32 %v2691, 2147483648
      %v2697 = vsel %vm2695, %v2683, %v2696
      %vm2698 = vcmp.eq.s32.totalorder %v2693, 2
      %v2699 = vxor.u32 %v2683, 2147483648
      %v2700 = vsel %vm2698, %v2699, %v2691
      %v2701 = vsel %vm2694, %v2697, %v2700
      %v2702 = vsel %vm2692, nan, %v2701
      %v2703 = vand.u32 2147483647, %v811
      %vm2704 = vcmp.le.f32.partialorder %v2703, 0.7853982
      %vm2705 = vcmp.lt.s32.totalorder %v811, 0
      %v2706 = vand.u32 %v811, 2139095040
      %v2707 = vshrl.u32 %v2706, 23
      %v2708 = vsub.s32 %v2707, 127
      %v2709 = vand.u32 2147483647, %v811
      %v2710 = vand.u32 %v2709, 8388607
      %v2711 = vor.u32 %v2710, 8388608
      %v2712 = vsub.s32 0, %v2711
      %v2713 = vadd.s32 %v2708, 1
      %vm2714 = vcmp.gt.s32.totalorder %v2713, 0
      %v2715 = vsel %vm2714, %v2713, 0
      %v2716 = vshrl.u32 %v2715, 5
      %v2717 = vand.u32 %v2715, 31
      %v2718 = vsub.s32 32, %v2717
      %v2719 = vshrl.u32 683565275, %v2718
      %v2720 = vshll.u32 683565275, %v2717
      %v2721 = vshrl.u32 2475754826, %v2718
      %v2722 = vor.u32 %v2720, %v2721
      %v2723 = vshll.u32 2475754826, %v2717
      %v2724 = vshrl.u32 2131351028, %v2718
      %v2725 = vor.u32 %v2723, %v2724
      %v2726 = vshll.u32 2131351028, %v2717
      %v2727 = vshrl.u32 2102212464, %v2718
      %v2728 = vor.u32 %v2726, %v2727
      %v2729 = vshll.u32 2102212464, %v2717
      %v2730 = vshrl.u32 920167782, %v2718
      %v2731 = vor.u32 %v2729, %v2730
      %v2732 = vshll.u32 920167782, %v2717
      %v2733 = vshrl.u32 1326507024, %v2718
      %v2734 = vor.u32 %v2732, %v2733
      %vm2735 = vcmp.lt.s32.totalorder %v2716, 1
      %vm2736 = vcmp.lt.s32.totalorder %v2716, 2
      %vm2737 = vcmp.lt.s32.totalorder %v2716, 3
      %vm2738 = vcmp.lt.s32.totalorder %v2716, 4
      %v2739 = vsel %vm2735, %v2719, %v2722
      %v2740 = vsel %vm2738, %v2728, 2102212464
      %v2741 = vsel %vm2737, %v2725, %v2740
      %v2742 = vsel %vm2736, %v2739, %v2741
      %v2743 = vsel %vm2735, %v2722, %v2725
      %v2744 = vsel %vm2738, %v2731, 920167782
      %v2745 = vsel %vm2737, %v2728, %v2744
      %v2746 = vsel %vm2736, %v2743, %v2745
      %v2747 = vsel %vm2735, %v2725, %v2728
      %v2748 = vsel %vm2738, %v2734, 1326507024
      %v2749 = vsel %vm2737, %v2731, %v2748
      %v2750 = vsel %vm2736, %v2747, %v2749
      %v2751 = vshll.u32 %v2711, 8
      %v2752 = vand.u32 %v2751, 65535
      %v2753 = vshrl.u32 %v2751, 16
      %v2754 = vand.u32 %v2750, 65535
      %v2755 = vshrl.u32 %v2750, 16
      %v2756 = vmul.u32 %v2752, %v2754
      %v2757 = vmul.u32 %v2752, %v2755
      %v2758 = vmul.u32 %v2753, %v2754
      %v2759 = vmul.u32 %v2753, %v2755
      %v2760 = vshll.u32 %v2757, 16
      %v2761 = vshrl.u32 %v2757, 16
      %v2762 = vshll.u32 %v2758, 16
      %v2763 = vshrl.u32 %v2758, 16
      %vm2764 = vc.u32 %v2756, %v2760
      %v2765 = vsel %vm2764, 1, 0
      %v2766 = vadd.s32 %v2756, %v2760
      %v2767 = vadd.s32 %v2759, %v2765
      %vm2768 = vc.u32 %v2766, %v2762
      %v2769 = vsel %vm2768, 1, 0
      %v2770 = vadd.s32 %v2766, %v2762
      %v2771 = vadd.s32 %v2767, %v2769
      %v2772 = vadd.s32 %v2771, %v2761
      %v2773 = vadd.s32 %v2772, %v2763
      %v2774 = vand.u32 %v2751, 65535
      %v2775 = vshrl.u32 %v2751, 16
      %v2776 = vand.u32 %v2746, 65535
      %v2777 = vshrl.u32 %v2746, 16
      %v2778 = vmul.u32 %v2774, %v2776
      %v2779 = vmul.u32 %v2774, %v2777
      %v2780 = vmul.u32 %v2775, %v2776
      %v2781 = vmul.u32 %v2775, %v2777
      %v2782 = vshll.u32 %v2779, 16
      %v2783 = vshrl.u32 %v2779, 16
      %v2784 = vshll.u32 %v2780, 16
      %v2785 = vshrl.u32 %v2780, 16
      %vm2786 = vc.u32 %v2778, %v2782
      %v2787 = vsel %vm2786, 1, 0
      %v2788 = vadd.s32 %v2778, %v2782
      %v2789 = vadd.s32 %v2781, %v2787
      %vm2790 = vc.u32 %v2788, %v2784
      %v2791 = vsel %vm2790, 1, 0
      %v2792 = vadd.s32 %v2788, %v2784
      %v2793 = vadd.s32 %v2789, %v2791
      %v2794 = vadd.s32 %v2793, %v2783
      %v2795 = vadd.s32 %v2794, %v2785
      %v2796 = vmul.u32 %v2751, %v2742
      %v2797 = vadd.s32 %v2773, %v2792
      %vm2798 = vc.u32 %v2773, %v2792
      %v2799 = vadd.s32 %v2795, 1
      %v2800 = vsel %vm2798, %v2799, %v2795
      %v2801 = vadd.s32 %v2796, %v2800
      %v2802 = vadd.s32 %v2801, 536870912
      %v2803 = vshrl.u32 %v2802, 30
      %v2804 = vshll.u32 %v2803, 30
      %v2805 = vsub.s32 %v2801, %v2804
      %vm2806 = vcmp.lt.s32.totalorder %v2805, 0
      %v2807 = vsub.s32 0, %v2805
      %v2808 = vsel %vm2806, %v2807, %v2805
      %v2809 = vclz %v2808
      %v2810 = vsub.s32 %v2809, 2
      %vm2811 = vcmp.gt.s32.totalorder 0, %v2810
      %v2812 = vsel %vm2811, 0, %v2810
      %v2813 = vsub.s32 32, %v2812
      %v2814 = vshll.u32 %v2805, %v2812
      %v2815 = vshrl.u32 %v2797, %v2813
      %v2816 = vor.u32 %v2814, %v2815
      %v2817 = vsub.s32 4294967266, %v2812
      %v2818 = vadd.s32 %v2817, 127
      %v2819 = vshll.u32 %v2818, 23
      %v2820 = vor.u32 4788187, %v2819
      %v2821 = vand.u32 2147483647, %v2820
      %v2823 = vcvt.s32.f32 %v2816
      %v2824 = vmul.f32 %v2823, %v2821
      %v2825 = vxor.u32 %v2824, 2147483648
      %v2826 = vsel %vm2705, %v2825, %v2824
      %v2827 = vsub.s32 4, %v2803
      %v2828 = vsel %vm2705, %v2827, %v2803
      %v2829 = vsel %vm2704, %v811, %v2826
      %v2830 = vsel %vm2704, 0, %v2828
      %v2831 = vmul.f32 %v2829, %v2829
      %v2832 = vmul.f32 %v2831, -0.001358992
      %v2833 = vadd.f32 %v2832, 0.041655596
      %v2834 = vmul.f32 %v2831, %v2833
      %v2835 = vadd.f32 %v2834, -0.4999988
      %v2836 = vmul.f32 %v2831, %v2835
      %v2837 = vadd.f32 1.0, %v2836
      %v2838 = vmul.f32 %v2829, %v2829
      %v2839 = vmul.f32 %v2838, -0.00019511016
      %v2840 = vadd.f32 %v2839, 0.008332121
      %v2841 = vmul.f32 %v2838, %v2840
      %v2842 = vadd.f32 %v2841, -0.16666654
      %v2843 = vmul.f32 %v2838, %v2842
      %v2844 = vadd.f32 %v2843, 1.0
      %v2845 = vmul.f32 %v2844, %v2829
      %vm2846 = vweird.f32 %v811
      %v2847 = vand.u32 %v2830, 3
      %vm2848 = vcmp.lt.s32.totalorder %v2847, 2
      %vm2849 = vcmp.eq.s32.totalorder %v2847, 0
      %v2850 = vxor.u32 %v2845, 2147483648
      %v2851 = vsel %vm2849, %v2837, %v2850
      %vm2852 = vcmp.eq.s32.totalorder %v2847, 2
      %v2853 = vxor.u32 %v2837, 2147483648
      %v2854 = vsel %vm2852, %v2853, %v2845
      %v2855 = vsel %vm2848, %v2851, %v2854
      %v2856 = vsel %vm2846, nan, %v2855
      %v2857 = vand.u32 2147483647, %v812
      %vm2858 = vcmp.le.f32.partialorder %v2857, 0.7853982
      %vm2859 = vcmp.lt.s32.totalorder %v812, 0
      %v2860 = vand.u32 %v812, 2139095040
      %v2861 = vshrl.u32 %v2860, 23
      %v2862 = vsub.s32 %v2861, 127
      %v2863 = vand.u32 2147483647, %v812
      %v2864 = vand.u32 %v2863, 8388607
      %v2865 = vor.u32 %v2864, 8388608
      %v2866 = vsub.s32 0, %v2865
      %v2867 = vadd.s32 %v2862, 1
      %vm2868 = vcmp.gt.s32.totalorder %v2867, 0
      %v2869 = vsel %vm2868, %v2867, 0
      %v2870 = vshrl.u32 %v2869, 5
      %v2871 = vand.u32 %v2869, 31
      %v2872 = vsub.s32 32, %v2871
      %v2873 = vshrl.u32 683565275, %v2872
      %v2874 = vshll.u32 683565275, %v2871
      %v2875 = vshrl.u32 2475754826, %v2872
      %v2876 = vor.u32 %v2874, %v2875
      %v2877 = vshll.u32 2475754826, %v2871
      %v2878 = vshrl.u32 2131351028, %v2872
      %v2879 = vor.u32 %v2877, %v2878
      %v2880 = vshll.u32 2131351028, %v2871
      %v2881 = vshrl.u32 2102212464, %v2872
      %v2882 = vor.u32 %v2880, %v2881
      %v2883 = vshll.u32 2102212464, %v2871
      %v2884 = vshrl.u32 920167782, %v2872
      %v2885 = vor.u32 %v2883, %v2884
      %v2886 = vshll.u32 920167782, %v2871
      %v2887 = vshrl.u32 1326507024, %v2872
      %v2888 = vor.u32 %v2886, %v2887
      %vm2889 = vcmp.lt.s32.totalorder %v2870, 1
      %vm2890 = vcmp.lt.s32.totalorder %v2870, 2
      %vm2891 = vcmp.lt.s32.totalorder %v2870, 3
      %vm2892 = vcmp.lt.s32.totalorder %v2870, 4
      %v2893 = vsel %vm2889, %v2873, %v2876
      %v2894 = vsel %vm2892, %v2882, 2102212464
      %v2895 = vsel %vm2891, %v2879, %v2894
      %v2896 = vsel %vm2890, %v2893, %v2895
      %v2897 = vsel %vm2889, %v2876, %v2879
      %v2898 = vsel %vm2892, %v2885, 920167782
      %v2899 = vsel %vm2891, %v2882, %v2898
      %v2900 = vsel %vm2890, %v2897, %v2899
      %v2901 = vsel %vm2889, %v2879, %v2882
      %v2902 = vsel %vm2892, %v2888, 1326507024
      %v2903 = vsel %vm2891, %v2885, %v2902
      %v2904 = vsel %vm2890, %v2901, %v2903
      %v2905 = vshll.u32 %v2865, 8
      %v2906 = vand.u32 %v2905, 65535
      %v2907 = vshrl.u32 %v2905, 16
      %v2908 = vand.u32 %v2904, 65535
      %v2909 = vshrl.u32 %v2904, 16
      %v2910 = vmul.u32 %v2906, %v2908
      %v2911 = vmul.u32 %v2906, %v2909
      %v2912 = vmul.u32 %v2907, %v2908
      %v2913 = vmul.u32 %v2907, %v2909
      %v2914 = vshll.u32 %v2911, 16
      %v2915 = vshrl.u32 %v2911, 16
      %v2916 = vshll.u32 %v2912, 16
      %v2917 = vshrl.u32 %v2912, 16
      %vm2918 = vc.u32 %v2910, %v2914
      %v2919 = vsel %vm2918, 1, 0
      %v2920 = vadd.s32 %v2910, %v2914
      %v2921 = vadd.s32 %v2913, %v2919
      %vm2922 = vc.u32 %v2920, %v2916
      %v2923 = vsel %vm2922, 1, 0
      %v2924 = vadd.s32 %v2920, %v2916
      %v2925 = vadd.s32 %v2921, %v2923
      %v2926 = vadd.s32 %v2925, %v2915
      %v2927 = vadd.s32 %v2926, %v2917
      %v2928 = vand.u32 %v2905, 65535
      %v2929 = vshrl.u32 %v2905, 16
      %v2930 = vand.u32 %v2900, 65535
      %v2931 = vshrl.u32 %v2900, 16
      %v2932 = vmul.u32 %v2928, %v2930
      %v2933 = vmul.u32 %v2928, %v2931
      %v2934 = vmul.u32 %v2929, %v2930
      %v2935 = vmul.u32 %v2929, %v2931
      %v2936 = vshll.u32 %v2933, 16
      %v2937 = vshrl.u32 %v2933, 16
      %v2938 = vshll.u32 %v2934, 16
      %v2939 = vshrl.u32 %v2934, 16
      %vm2940 = vc.u32 %v2932, %v2936
      %v2941 = vsel %vm2940, 1, 0
      %v2942 = vadd.s32 %v2932, %v2936
      %v2943 = vadd.s32 %v2935, %v2941
      %vm2944 = vc.u32 %v2942, %v2938
      %v2945 = vsel %vm2944, 1, 0
      %v2946 = vadd.s32 %v2942, %v2938
      %v2947 = vadd.s32 %v2943, %v2945
      %v2948 = vadd.s32 %v2947, %v2937
      %v2949 = vadd.s32 %v2948, %v2939
      %v2950 = vmul.u32 %v2905, %v2896
      %v2951 = vadd.s32 %v2927, %v2946
      %vm2952 = vc.u32 %v2927, %v2946
      %v2953 = vadd.s32 %v2949, 1
      %v2954 = vsel %vm2952, %v2953, %v2949
      %v2955 = vadd.s32 %v2950, %v2954
      %v2956 = vadd.s32 %v2955, 536870912
      %v2957 = vshrl.u32 %v2956, 30
      %v2958 = vshll.u32 %v2957, 30
      %v2959 = vsub.s32 %v2955, %v2958
      %vm2960 = vcmp.lt.s32.totalorder %v2959, 0
      %v2961 = vsub.s32 0, %v2959
      %v2962 = vsel %vm2960, %v2961, %v2959
      %v2963 = vclz %v2962
      %v2964 = vsub.s32 %v2963, 2
      %vm2965 = vcmp.gt.s32.totalorder 0, %v2964
      %v2966 = vsel %vm2965, 0, %v2964
      %v2967 = vsub.s32 32, %v2966
      %v2968 = vshll.u32 %v2959, %v2966
      %v2969 = vshrl.u32 %v2951, %v2967
      %v2970 = vor.u32 %v2968, %v2969
      %v2971 = vsub.s32 4294967266, %v2966
      %v2972 = vadd.s32 %v2971, 127
      %v2973 = vshll.u32 %v2972, 23
      %v2974 = vor.u32 4788187, %v2973
      %v2975 = vand.u32 2147483647, %v2974
      %v2977 = vcvt.s32.f32 %v2970
      %v2978 = vmul.f32 %v2977, %v2975
      %v2979 = vxor.u32 %v2978, 2147483648
      %v2980 = vsel %vm2859, %v2979, %v2978
      %v2981 = vsub.s32 4, %v2957
      %v2982 = vsel %vm2859, %v2981, %v2957
      %v2983 = vsel %vm2858, %v812, %v2980
      %v2984 = vsel %vm2858, 0, %v2982
      %v2985 = vmul.f32 %v2983, %v2983
      %v2986 = vmul.f32 %v2985, -0.001358992
      %v2987 = vadd.f32 %v2986, 0.041655596
      %v2988 = vmul.f32 %v2985, %v2987
      %v2989 = vadd.f32 %v2988, -0.4999988
      %v2990 = vmul.f32 %v2985, %v2989
      %v2991 = vadd.f32 1.0, %v2990
      %v2992 = vmul.f32 %v2983, %v2983
      %v2993 = vmul.f32 %v2992, -0.00019511016
      %v2994 = vadd.f32 %v2993, 0.008332121
      %v2995 = vmul.f32 %v2992, %v2994
      %v2996 = vadd.f32 %v2995, -0.16666654
      %v2997 = vmul.f32 %v2992, %v2996
      %v2998 = vadd.f32 %v2997, 1.0
      %v2999 = vmul.f32 %v2998, %v2983
      %vm3000 = vweird.f32 %v812
      %v3001 = vand.u32 %v2984, 3
      %vm3002 = vcmp.lt.s32.totalorder %v3001, 2
      %vm3003 = vcmp.eq.s32.totalorder %v3001, 0
      %v3004 = vxor.u32 %v2999, 2147483648
      %v3005 = vsel %vm3003, %v2991, %v3004
      %vm3006 = vcmp.eq.s32.totalorder %v3001, 2
      %v3007 = vxor.u32 %v2991, 2147483648
      %v3008 = vsel %vm3006, %v3007, %v2999
      %v3009 = vsel %vm3002, %v3005, %v3008
      %v3010 = vsel %vm3000, nan, %v3009
      %v3011 = vand.u32 2147483647, %v813
      %vm3012 = vcmp.le.f32.partialorder %v3011, 0.7853982
      %vm3013 = vcmp.lt.s32.totalorder %v813, 0
      %v3014 = vand.u32 %v813, 2139095040
      %v3015 = vshrl.u32 %v3014, 23
      %v3016 = vsub.s32 %v3015, 127
      %v3017 = vand.u32 2147483647, %v813
      %v3018 = vand.u32 %v3017, 8388607
      %v3019 = vor.u32 %v3018, 8388608
      %v3020 = vsub.s32 0, %v3019
      %v3021 = vadd.s32 %v3016, 1
      %vm3022 = vcmp.gt.s32.totalorder %v3021, 0
      %v3023 = vsel %vm3022, %v3021, 0
      %v3024 = vshrl.u32 %v3023, 5
      %v3025 = vand.u32 %v3023, 31
      %v3026 = vsub.s32 32, %v3025
      %v3027 = vshrl.u32 683565275, %v3026
      %v3028 = vshll.u32 683565275, %v3025
      %v3029 = vshrl.u32 2475754826, %v3026
      %v3030 = vor.u32 %v3028, %v3029
      %v3031 = vshll.u32 2475754826, %v3025
      %v3032 = vshrl.u32 2131351028, %v3026
      %v3033 = vor.u32 %v3031, %v3032
      %v3034 = vshll.u32 2131351028, %v3025
      %v3035 = vshrl.u32 2102212464, %v3026
      %v3036 = vor.u32 %v3034, %v3035
      %v3037 = vshll.u32 2102212464, %v3025
      %v3038 = vshrl.u32 920167782, %v3026
      %v3039 = vor.u32 %v3037, %v3038
      %v3040 = vshll.u32 920167782, %v3025
      %v3041 = vshrl.u32 1326507024, %v3026
      %v3042 = vor.u32 %v3040, %v3041
      %vm3043 = vcmp.lt.s32.totalorder %v3024, 1
      %vm3044 = vcmp.lt.s32.totalorder %v3024, 2
      %vm3045 = vcmp.lt.s32.totalorder %v3024, 3
      %vm3046 = vcmp.lt.s32.totalorder %v3024, 4
      %v3047 = vsel %vm3043, %v3027, %v3030
      %v3048 = vsel %vm3046, %v3036, 2102212464
      %v3049 = vsel %vm3045, %v3033, %v3048
      %v3050 = vsel %vm3044, %v3047, %v3049
      %v3051 = vsel %vm3043, %v3030, %v3033
      %v3052 = vsel %vm3046, %v3039, 920167782
      %v3053 = vsel %vm3045, %v3036, %v3052
      %v3054 = vsel %vm3044, %v3051, %v3053
      %v3055 = vsel %vm3043, %v3033, %v3036
      %v3056 = vsel %vm3046, %v3042, 1326507024
      %v3057 = vsel %vm3045, %v3039, %v3056
      %v3058 = vsel %vm3044, %v3055, %v3057
      %v3059 = vshll.u32 %v3019, 8
      %v3060 = vand.u32 %v3059, 65535
      %v3061 = vshrl.u32 %v3059, 16
      %v3062 = vand.u32 %v3058, 65535
      %v3063 = vshrl.u32 %v3058, 16
      %v3064 = vmul.u32 %v3060, %v3062
      %v3065 = vmul.u32 %v3060, %v3063
      %v3066 = vmul.u32 %v3061, %v3062
      %v3067 = vmul.u32 %v3061, %v3063
      %v3068 = vshll.u32 %v3065, 16
      %v3069 = vshrl.u32 %v3065, 16
      %v3070 = vshll.u32 %v3066, 16
      %v3071 = vshrl.u32 %v3066, 16
      %vm3072 = vc.u32 %v3064, %v3068
      %v3073 = vsel %vm3072, 1, 0
      %v3074 = vadd.s32 %v3064, %v3068
      %v3075 = vadd.s32 %v3067, %v3073
      %vm3076 = vc.u32 %v3074, %v3070
      %v3077 = vsel %vm3076, 1, 0
      %v3078 = vadd.s32 %v3074, %v3070
      %v3079 = vadd.s32 %v3075, %v3077
      %v3080 = vadd.s32 %v3079, %v3069
      %v3081 = vadd.s32 %v3080, %v3071
      %v3082 = vand.u32 %v3059, 65535
      %v3083 = vshrl.u32 %v3059, 16
      %v3084 = vand.u32 %v3054, 65535
      %v3085 = vshrl.u32 %v3054, 16
      %v3086 = vmul.u32 %v3082, %v3084
      %v3087 = vmul.u32 %v3082, %v3085
      %v3088 = vmul.u32 %v3083, %v3084
      %v3089 = vmul.u32 %v3083, %v3085
      %v3090 = vshll.u32 %v3087, 16
      %v3091 = vshrl.u32 %v3087, 16
      %v3092 = vshll.u32 %v3088, 16
      %v3093 = vshrl.u32 %v3088, 16
      %vm3094 = vc.u32 %v3086, %v3090
      %v3095 = vsel %vm3094, 1, 0
      %v3096 = vadd.s32 %v3086, %v3090
      %v3097 = vadd.s32 %v3089, %v3095
      %vm3098 = vc.u32 %v3096, %v3092
      %v3099 = vsel %vm3098, 1, 0
      %v3100 = vadd.s32 %v3096, %v3092
      %v3101 = vadd.s32 %v3097, %v3099
      %v3102 = vadd.s32 %v3101, %v3091
      %v3103 = vadd.s32 %v3102, %v3093
      %v3104 = vmul.u32 %v3059, %v3050
      %v3105 = vadd.s32 %v3081, %v3100
      %vm3106 = vc.u32 %v3081, %v3100
      %v3107 = vadd.s32 %v3103, 1
      %v3108 = vsel %vm3106, %v3107, %v3103
      %v3109 = vadd.s32 %v3104, %v3108
      %v3110 = vadd.s32 %v3109, 536870912
      %v3111 = vshrl.u32 %v3110, 30
      %v3112 = vshll.u32 %v3111, 30
      %v3113 = vsub.s32 %v3109, %v3112
      %vm3114 = vcmp.lt.s32.totalorder %v3113, 0
      %v3115 = vsub.s32 0, %v3113
      %v3116 = vsel %vm3114, %v3115, %v3113
      %v3117 = vclz %v3116
      %v3118 = vsub.s32 %v3117, 2
      %vm3119 = vcmp.gt.s32.totalorder 0, %v3118
      %v3120 = vsel %vm3119, 0, %v3118
      %v3121 = vsub.s32 32, %v3120
      %v3122 = vshll.u32 %v3113, %v3120
      %v3123 = vshrl.u32 %v3105, %v3121
      %v3124 = vor.u32 %v3122, %v3123
      %v3125 = vsub.s32 4294967266, %v3120
      %v3126 = vadd.s32 %v3125, 127
      %v3127 = vshll.u32 %v3126, 23
      %v3128 = vor.u32 4788187, %v3127
      %v3129 = vand.u32 2147483647, %v3128
      %v3131 = vcvt.s32.f32 %v3124
      %v3132 = vmul.f32 %v3131, %v3129
      %v3133 = vxor.u32 %v3132, 2147483648
      %v3134 = vsel %vm3013, %v3133, %v3132
      %v3135 = vsub.s32 4, %v3111
      %v3136 = vsel %vm3013, %v3135, %v3111
      %v3137 = vsel %vm3012, %v813, %v3134
      %v3138 = vsel %vm3012, 0, %v3136
      %v3139 = vmul.f32 %v3137, %v3137
      %v3140 = vmul.f32 %v3139, -0.001358992
      %v3141 = vadd.f32 %v3140, 0.041655596
      %v3142 = vmul.f32 %v3139, %v3141
      %v3143 = vadd.f32 %v3142, -0.4999988
      %v3144 = vmul.f32 %v3139, %v3143
      %v3145 = vadd.f32 1.0, %v3144
      %v3146 = vmul.f32 %v3137, %v3137
      %v3147 = vmul.f32 %v3146, -0.00019511016
      %v3148 = vadd.f32 %v3147, 0.008332121
      %v3149 = vmul.f32 %v3146, %v3148
      %v3150 = vadd.f32 %v3149, -0.16666654
      %v3151 = vmul.f32 %v3146, %v3150
      %v3152 = vadd.f32 %v3151, 1.0
      %v3153 = vmul.f32 %v3152, %v3137
      %vm3154 = vweird.f32 %v813
      %v3155 = vand.u32 %v3138, 3
      %vm3156 = vcmp.lt.s32.totalorder %v3155, 2
      %vm3157 = vcmp.eq.s32.totalorder %v3155, 0
      %v3158 = vxor.u32 %v3153, 2147483648
      %v3159 = vsel %vm3157, %v3145, %v3158
      %vm3160 = vcmp.eq.s32.totalorder %v3155, 2
      %v3161 = vxor.u32 %v3145, 2147483648
      %v3162 = vsel %vm3160, %v3161, %v3153
      %v3163 = vsel %vm3156, %v3159, %v3162
      %v3164 = vsel %vm3154, nan, %v3163
      %v3165 = vand.u32 2147483647, %v814
      %vm3166 = vcmp.le.f32.partialorder %v3165, 0.7853982
      %vm3167 = vcmp.lt.s32.totalorder %v814, 0
      %v3168 = vand.u32 %v814, 2139095040
      %v3169 = vshrl.u32 %v3168, 23
      %v3170 = vsub.s32 %v3169, 127
      %v3171 = vand.u32 2147483647, %v814
      %v3172 = vand.u32 %v3171, 8388607
      %v3173 = vor.u32 %v3172, 8388608
      %v3174 = vsub.s32 0, %v3173
      %v3175 = vadd.s32 %v3170, 1
      %vm3176 = vcmp.gt.s32.totalorder %v3175, 0
      %v3177 = vsel %vm3176, %v3175, 0
      %v3178 = vshrl.u32 %v3177, 5
      %v3179 = vand.u32 %v3177, 31
      %v3180 = vsub.s32 32, %v3179
      %v3181 = vshrl.u32 683565275, %v3180
      %v3182 = vshll.u32 683565275, %v3179
      %v3183 = vshrl.u32 2475754826, %v3180
      %v3184 = vor.u32 %v3182, %v3183
      %v3185 = vshll.u32 2475754826, %v3179
      %v3186 = vshrl.u32 2131351028, %v3180
      %v3187 = vor.u32 %v3185, %v3186
      %v3188 = vshll.u32 2131351028, %v3179
      %v3189 = vshrl.u32 2102212464, %v3180
      %v3190 = vor.u32 %v3188, %v3189
      %v3191 = vshll.u32 2102212464, %v3179
      %v3192 = vshrl.u32 920167782, %v3180
      %v3193 = vor.u32 %v3191, %v3192
      %v3194 = vshll.u32 920167782, %v3179
      %v3195 = vshrl.u32 1326507024, %v3180
      %v3196 = vor.u32 %v3194, %v3195
      %vm3197 = vcmp.lt.s32.totalorder %v3178, 1
      %vm3198 = vcmp.lt.s32.totalorder %v3178, 2
      %vm3199 = vcmp.lt.s32.totalorder %v3178, 3
      %vm3200 = vcmp.lt.s32.totalorder %v3178, 4
      %v3201 = vsel %vm3197, %v3181, %v3184
      %v3202 = vsel %vm3200, %v3190, 2102212464
      %v3203 = vsel %vm3199, %v3187, %v3202
      %v3204 = vsel %vm3198, %v3201, %v3203
      %v3205 = vsel %vm3197, %v3184, %v3187
      %v3206 = vsel %vm3200, %v3193, 920167782
      %v3207 = vsel %vm3199, %v3190, %v3206
      %v3208 = vsel %vm3198, %v3205, %v3207
      %v3209 = vsel %vm3197, %v3187, %v3190
      %v3210 = vsel %vm3200, %v3196, 1326507024
      %v3211 = vsel %vm3199, %v3193, %v3210
      %v3212 = vsel %vm3198, %v3209, %v3211
      %v3213 = vshll.u32 %v3173, 8
      %v3214 = vand.u32 %v3213, 65535
      %v3215 = vshrl.u32 %v3213, 16
      %v3216 = vand.u32 %v3212, 65535
      %v3217 = vshrl.u32 %v3212, 16
      %v3218 = vmul.u32 %v3214, %v3216
      %v3219 = vmul.u32 %v3214, %v3217
      %v3220 = vmul.u32 %v3215, %v3216
      %v3221 = vmul.u32 %v3215, %v3217
      %v3222 = vshll.u32 %v3219, 16
      %v3223 = vshrl.u32 %v3219, 16
      %v3224 = vshll.u32 %v3220, 16
      %v3225 = vshrl.u32 %v3220, 16
      %vm3226 = vc.u32 %v3218, %v3222
      %v3227 = vsel %vm3226, 1, 0
      %v3228 = vadd.s32 %v3218, %v3222
      %v3229 = vadd.s32 %v3221, %v3227
      %vm3230 = vc.u32 %v3228, %v3224
      %v3231 = vsel %vm3230, 1, 0
      %v3232 = vadd.s32 %v3228, %v3224
      %v3233 = vadd.s32 %v3229, %v3231
      %v3234 = vadd.s32 %v3233, %v3223
      %v3235 = vadd.s32 %v3234, %v3225
      %v3236 = vand.u32 %v3213, 65535
      %v3237 = vshrl.u32 %v3213, 16
      %v3238 = vand.u32 %v3208, 65535
      %v3239 = vshrl.u32 %v3208, 16
      %v3240 = vmul.u32 %v3236, %v3238
      %v3241 = vmul.u32 %v3236, %v3239
      %v3242 = vmul.u32 %v3237, %v3238
      %v3243 = vmul.u32 %v3237, %v3239
      %v3244 = vshll.u32 %v3241, 16
      %v3245 = vshrl.u32 %v3241, 16
      %v3246 = vshll.u32 %v3242, 16
      %v3247 = vshrl.u32 %v3242, 16
      %vm3248 = vc.u32 %v3240, %v3244
      %v3249 = vsel %vm3248, 1, 0
      %v3250 = vadd.s32 %v3240, %v3244
      %v3251 = vadd.s32 %v3243, %v3249
      %vm3252 = vc.u32 %v3250, %v3246
      %v3253 = vsel %vm3252, 1, 0
      %v3254 = vadd.s32 %v3250, %v3246
      %v3255 = vadd.s32 %v3251, %v3253
      %v3256 = vadd.s32 %v3255, %v3245
      %v3257 = vadd.s32 %v3256, %v3247
      %v3258 = vmul.u32 %v3213, %v3204
      %v3259 = vadd.s32 %v3235, %v3254
      %vm3260 = vc.u32 %v3235, %v3254
      %v3261 = vadd.s32 %v3257, 1
      %v3262 = vsel %vm3260, %v3261, %v3257
      %v3263 = vadd.s32 %v3258, %v3262
      %v3264 = vadd.s32 %v3263, 536870912
      %v3265 = vshrl.u32 %v3264, 30
      %v3266 = vshll.u32 %v3265, 30
      %v3267 = vsub.s32 %v3263, %v3266
      %vm3268 = vcmp.lt.s32.totalorder %v3267, 0
      %v3269 = vsub.s32 0, %v3267
      %v3270 = vsel %vm3268, %v3269, %v3267
      %v3271 = vclz %v3270
      %v3272 = vsub.s32 %v3271, 2
      %vm3273 = vcmp.gt.s32.totalorder 0, %v3272
      %v3274 = vsel %vm3273, 0, %v3272
      %v3275 = vsub.s32 32, %v3274
      %v3276 = vshll.u32 %v3267, %v3274
      %v3277 = vshrl.u32 %v3259, %v3275
      %v3278 = vor.u32 %v3276, %v3277
      %v3279 = vsub.s32 4294967266, %v3274
      %v3280 = vadd.s32 %v3279, 127
      %v3281 = vshll.u32 %v3280, 23
      %v3282 = vor.u32 4788187, %v3281
      %v3283 = vand.u32 2147483647, %v3282
      %v3285 = vcvt.s32.f32 %v3278
      %v3286 = vmul.f32 %v3285, %v3283
      %v3287 = vxor.u32 %v3286, 2147483648
      %v3288 = vsel %vm3167, %v3287, %v3286
      %v3289 = vsub.s32 4, %v3265
      %v3290 = vsel %vm3167, %v3289, %v3265
      %v3291 = vsel %vm3166, %v814, %v3288
      %v3292 = vsel %vm3166, 0, %v3290
      %v3293 = vmul.f32 %v3291, %v3291
      %v3294 = vmul.f32 %v3293, -0.001358992
      %v3295 = vadd.f32 %v3294, 0.041655596
      %v3296 = vmul.f32 %v3293, %v3295
      %v3297 = vadd.f32 %v3296, -0.4999988
      %v3298 = vmul.f32 %v3293, %v3297
      %v3299 = vadd.f32 1.0, %v3298
      %v3300 = vmul.f32 %v3291, %v3291
      %v3301 = vmul.f32 %v3300, -0.00019511016
      %v3302 = vadd.f32 %v3301, 0.008332121
      %v3303 = vmul.f32 %v3300, %v3302
      %v3304 = vadd.f32 %v3303, -0.16666654
      %v3305 = vmul.f32 %v3300, %v3304
      %v3306 = vadd.f32 %v3305, 1.0
      %v3307 = vmul.f32 %v3306, %v3291
      %vm3308 = vweird.f32 %v814
      %v3309 = vand.u32 %v3292, 3
      %vm3310 = vcmp.lt.s32.totalorder %v3309, 2
      %vm3311 = vcmp.eq.s32.totalorder %v3309, 0
      %v3312 = vxor.u32 %v3307, 2147483648
      %v3313 = vsel %vm3311, %v3299, %v3312
      %vm3314 = vcmp.eq.s32.totalorder %v3309, 2
      %v3315 = vxor.u32 %v3299, 2147483648
      %v3316 = vsel %vm3314, %v3315, %v3307
      %v3317 = vsel %vm3310, %v3313, %v3316
      %v3318 = vsel %vm3308, nan, %v3317
      %v3319 = vmul.f32 %v2240, %v527
      %v3320 = vmul.f32 %v2394, %v536
      %v3321 = vmul.f32 %v2548, %v545
      %v3322 = vmul.f32 %v2702, %v554
      %v3323 = vmul.f32 %v2856, %v563
      %v3324 = vmul.f32 %v3010, %v572
      %v3325 = vmul.f32 %v3164, %v581
      %v3326 = vmul.f32 %v3318, %v590
      %v3327 = vsel %vm517, %v3319, 0.0
      %3328 = vadd.xlane.f32.xlu0 %v3327
      %v3329 = vpop.xlane.xlu0 %3328
      %v3330 = vsel %vm517, %v3320, 0.0
      %3331 = vadd.xlane.f32.xlu0 %v3330
      %v3332 = vpop.xlane.xlu0 %3331
      %v3333 = vsel %vm517, %v3321, 0.0
      %3334 = vadd.xlane.f32.xlu0 %v3333
      %v3335 = vpop.xlane.xlu0 %3334
      %v3336 = vsel %vm517, %v3322, 0.0
      %3337 = vadd.xlane.f32.xlu0 %v3336
      %v3338 = vpop.xlane.xlu0 %3337
      %v3339 = vsel %vm517, %v3323, 0.0
      %3340 = vadd.xlane.f32.xlu0 %v3339
      %v3341 = vpop.xlane.xlu0 %3340
      %v3342 = vsel %vm517, %v3324, 0.0
      %3343 = vadd.xlane.f32.xlu0 %v3342
      %v3344 = vpop.xlane.xlu0 %3343
      %v3345 = vsel %vm517, %v3325, 0.0
      %3346 = vadd.xlane.f32.xlu0 %v3345
      %v3347 = vpop.xlane.xlu0 %3346
      %v3348 = vsel %vm517, %v3326, 0.0
      %3349 = vadd.xlane.f32.xlu0 %v3348
      %v3350 = vpop.xlane.xlu0 %3349
      %v3351 = vld [vmem:[%s11] ss:$0 sm:$0xff]
      %v3352 = vld [vmem:[%s11 + $0x1] ss:$0 sm:$0xff]
      %v3353 = vld [vmem:[%s11 + $0x2] ss:$0 sm:$0xff]
      %s3354 = scalar_lea.vmem %s11, 3
      %v3355 = vld [vmem:[%s3354] ss:$8 sm:$0x3]
      %v3356 = vld [vmem:[%s11 + $0x4] ss:$0 sm:$0xff]
      %vm3357 = vcmp.gt.f32.partialorder %v685, 0.0
      %v3358 = vmax.f32 %v685, 1.0
      %v3359 = vrcp.pop %v3358
      %v3360 = vmul.f32 %v3358, %v3359
      %v3361 = vsub.f32 1.0, %v3360
      %v3362 = vmul.f32 %v3359, %v3361
      %v3363 = vadd.f32 %v3359, %v3362
      %vm3364 = vweird.f32 %v3358
      %vm3365 = vweird.f32 %v3359
      %vm3366 = vmor %vm3364, %vm3365
      %v3367 = vsel %vm3366, %v3359, %v3363
      %v3368 = vand.u32 2147483647, %v3358
      %vm3369 = vcmp.eq.f32.partialorder %v3368, 8.507059e+37
      %v3370 = vand.u32 %v3358, 2147483648
      %v3371 = vor.u32 1.1754944e-38, %v3370
      %v3372 = vsel %vm3369, %v3371, %v3367
      %v3373 = vmul.f32 1.0, %v3372
      %v3374 = vsel %vm3357, %v3373, 0.0
      %v3375 = vld [vmem:[%s4] sm:$0xff]
      %v3376 = vld [vmem:[%s5] sm:$0xff]
      %v3385 = vperm.slane %v3329, %v640
      %v3386 = vperm.slane %v3332, %v640
      %v3387 = vperm.slane %v3335, %v640
      %v3388 = vperm.slane %v3338, %v640
      %v3389 = vperm.slane %v3341, %v640
      %v3390 = vperm.slane %v3344, %v640
      %v3391 = vperm.slane %v3347, %v640
      %v3392 = vperm.slane %v3350, %v640
      %v3393 = vsel %vm667, %v3386, %v3385
      %v3394 = vsel %vm669, %v3387, %v3393
      %v3395 = vsel %vm671, %v3388, %v3394
      %v3396 = vsel %vm673, %v3389, %v3395
      %v3397 = vsel %vm675, %v3390, %v3396
      %v3398 = vsel %vm677, %v3391, %v3397
      %v3399 = vsel %vm679, %v3392, %v3398
      %vm3400 = vcmask 64512
      %v3401 = vsel %vm3400, %v3399, 0
      %3403 = vmatpush.msra.mxu0 0.0
      %3404 = vmatpush.msra.mxu0 0.0
      %3405 = vmatpush.msra.mxu0 0.0
      %3406 = vmatpush.msra.mxu0 0.0
      %3407 = vmatpush.msra.mxu0 0.0
      %3408 = vmatpush.msra.mxu0 0.0
      %3409 = vmatpush.msra.mxu0 0.0
      %3410 = vmatpush.msra.mxu0 0.0
      %3411 = vmatpush.msra.mxu0 0.0
      %3412 = vmatpush.msra.mxu0 0.0
      %3413 = vmatpush.msra.mxu0 0.0
      %3414 = vmatpush.msra.mxu0 0.0
      %3415 = vmatpush.msra.mxu0 0.0
      %3416 = vmatpush.msra.mxu0 0.0
      %3417 = vmatpush.msra.mxu0 0.0
      %3418 = vmatpush.msra.mxu0 %v3376
      %3419 = vmatmul.f32.gmra.mxu0 %v3401
      %v3420 = vpop.f32.mrf.mxu0
      %v3421 = vadd.f32 0.0, %v3420
      %3422 = vdwg.mxu0
      %v3431 = vperm.slane %v2065, %v640
      %v3432 = vperm.slane %v2068, %v640
      %v3433 = vperm.slane %v2071, %v640
      %v3434 = vperm.slane %v2074, %v640
      %v3435 = vperm.slane %v2077, %v640
      %v3436 = vperm.slane %v2080, %v640
      %v3437 = vperm.slane %v2083, %v640
      %v3438 = vperm.slane %v2086, %v640
      %v3439 = vsel %vm667, %v3432, %v3431
      %v3440 = vsel %vm669, %v3433, %v3439
      %v3441 = vsel %vm671, %v3434, %v3440
      %v3442 = vsel %vm673, %v3435, %v3441
      %v3443 = vsel %vm675, %v3436, %v3442
      %v3444 = vsel %vm677, %v3437, %v3443
      %v3445 = vsel %vm679, %v3438, %v3444
      %v3446 = vsel %vm3400, %v3445, 0
      %3448 = vmatpush.msra.mxu0 0.0
      %3449 = vmatpush.msra.mxu0 0.0
      %3450 = vmatpush.msra.mxu0 0.0
      %3451 = vmatpush.msra.mxu0 0.0
      %3452 = vmatpush.msra.mxu0 0.0
      %3453 = vmatpush.msra.mxu0 0.0
      %3454 = vmatpush.msra.mxu0 0.0
      %3455 = vmatpush.msra.mxu0 0.0
      %3456 = vmatpush.msra.mxu0 0.0
      %3457 = vmatpush.msra.mxu0 0.0
      %3458 = vmatpush.msra.mxu0 0.0
      %3459 = vmatpush.msra.mxu0 0.0
      %3460 = vmatpush.msra.mxu0 0.0
      %3461 = vmatpush.msra.mxu0 0.0
      %3462 = vmatpush.msra.mxu0 0.0
      %3463 = vmatpush.msra.mxu0 %v3375
      %3464 = vmatmul.f32.gmra.mxu0 %v3446
      %v3465 = vpop.f32.mrf.mxu0
      %v3466 = vadd.f32 %v3421, %v3465
      %3467 = vdwg.mxu0
      %v3468 = vld [vmem:[%s6] sm:$0xff]
      %v3469 = vld [vmem:[%s6 + $0x8] sm:$0x3]
      %v3470 = vsel %vm682, %v680, 0
      %vm3472 = vcmask 1041408
      %v3474 = vsel %vm3472, %v3469, 0
      %3476 = vmatpush.msra.mxu0 0.0
      %3477 = vmatpush.msra.mxu0 0.0
      %3478 = vmatpush.msra.mxu0 0.0
      %3479 = vmatpush.msra.mxu0 0.0
      %3480 = vmatpush.msra.mxu0 0.0
      %3481 = vmatpush.msra.mxu0 0.0
      %3482 = vmatpush.msra.mxu0 0.0
      %3483 = vmatpush.msra.mxu0 0.0
      %3484 = vmatpush.msra.mxu0 0.0
      %3485 = vmatpush.msra.mxu0 0.0
      %3486 = vmatpush.msra.mxu0 0.0
      %3487 = vmatpush.msra.mxu0 0.0
      %3488 = vmatpush.msra.mxu0 0.0
      %3489 = vmatpush.msra.mxu0 0.0
      %3490 = vmatpush.msra.mxu0 %v3474
      %3491 = vmatpush.msra.mxu0 %v3468
      %3492 = vmatmul.f32.gmra.mxu0 %v3470
      %v3493 = vpop.f32.mrf.mxu0
      %v3494 = vadd.f32 0.0, %v3493
      %3495 = vdwg.mxu0
      %v3496 = vadd.f32 %v3466, %v3494
      %v3497 = vmul.f32 %v776, %v3351
      %v3498 = vadd.f32 %v3496, %v3497
      %v3499 = vmul.f32 %v685, %v3352
      %v3500 = vadd.f32 %v3498, %v3499
      %v3501 = vmul.f32 %v3374, %v3500
      %v3502 = vadd.f32 %v3501, %v3353
      %v3503 = vld [vmem:[%s7] sm:$0x1f]
      %vm3504 = vcmask 39936
      %v3506 = vsel %vm3504, %v468, 0
      %vm3508 = vcmask 1044480
      %v3510 = vsel %vm3508, %v3503, 0
      %3512 = vmatpush.msra.mxu0 0.0
      %3513 = vmatpush.msra.mxu0 0.0
      %3514 = vmatpush.msra.mxu0 0.0
      %3515 = vmatpush.msra.mxu0 0.0
      %3516 = vmatpush.msra.mxu0 0.0
      %3517 = vmatpush.msra.mxu0 0.0
      %3518 = vmatpush.msra.mxu0 0.0
      %3519 = vmatpush.msra.mxu0 0.0
      %3520 = vmatpush.msra.mxu0 0.0
      %3521 = vmatpush.msra.mxu0 0.0
      %3522 = vmatpush.msra.mxu0 0.0
      %3523 = vmatpush.msra.mxu0 0.0
      %3524 = vmatpush.msra.mxu0 0.0
      %3525 = vmatpush.msra.mxu0 0.0
      %3526 = vmatpush.msra.mxu0 0.0
      %3527 = vmatpush.msra.mxu0 %v3510
      %3528 = vmatmul.f32.gmra.mxu0 %v3506
      %v3529 = vpop.f32.mrf.mxu0
      %v3530 = vadd.f32 0.0, %v3529
      %3531 = vdwg.mxu0
      %v3532 = vld [vmem:[%s8] sm:$0xff]
      %v3533 = vld [vmem:[%s8 + $0x8] sm:$0xff]
      %v3534 = vld [vmem:[%s8 + $0x10] sm:$0xff]
      %v3535 = vld [vmem:[%s8 + $0x18] sm:$0xff]
      %v3536 = vld [vmem:[%s8 + $0x20] sm:$0xff]
      %v3537 = vld [vmem:[%s8 + $0x28] sm:$0xff]
      %v3538 = vld [vmem:[%s8 + $0x30] sm:$0xff]
      %v3539 = vld [vmem:[%s8 + $0x38] sm:$0xff]
      %v3540 = vld [vmem:[%s8 + $0x40] sm:$0xff]
      %v3541 = vld [vmem:[%s8 + $0x48] sm:$0xff]
      %v3542 = vld [vmem:[%s8 + $0x50] sm:$0xff]
      %v3543 = vld [vmem:[%s8 + $0x58] sm:$0xff]
      %v3544 = vld [vmem:[%s8 + $0x60] sm:$0xff]
      %v3545 = vld [vmem:[%s8 + $0x68] sm:$0xff]
      %v3546 = vld [vmem:[%s8 + $0x70] sm:$0xff]
      %v3547 = vld [vmem:[%s8 + $0x78] sm:$0xff]
      %v3548 = vld [vmem:[%s8 + $0x80] sm:$0xff]
      %v3549 = vld [vmem:[%s8 + $0x88] sm:$0xff]
      %v3550 = vld [vmem:[%s8 + $0x90] sm:$0xff]
      %v3551 = vld [vmem:[%s8 + $0x98] sm:$0xff]
      %v3552 = vld [vmem:[%s8 + $0xa0] sm:$0xff]
      %v3553 = vld [vmem:[%s8 + $0xa8] sm:$0xff]
      %v3554 = vld [vmem:[%s8 + $0xb0] sm:$0xff]
      %v3555 = vld [vmem:[%s8 + $0xb8] sm:$0xff]
      %v3556 = vld [vmem:[%s8 + $0xc0] sm:$0xff]
      %v3557 = vld [vmem:[%s8 + $0xc8] sm:$0xff]
      %v3558 = vld [vmem:[%s8 + $0xd0] sm:$0xff]
      %v3559 = vld [vmem:[%s8 + $0xd8] sm:$0xff]
      %v3560 = vld [vmem:[%s8 + $0xe0] sm:$0xff]
      %v3561 = vld [vmem:[%s8 + $0xe8] sm:$0xff]
      %v3562 = vld [vmem:[%s8 + $0xf0] sm:$0xff]
      %v3563 = vld [vmem:[%s8 + $0xf8] sm:$0xff]
      %v3564 = vld [vmem:[%s9] sm:$0xff]
      %v3565 = vld [vmem:[%s9 + $0x8] sm:$0xff]
      %v3566 = vld [vmem:[%s9 + $0x10] sm:$0xff]
      %v3567 = vld [vmem:[%s9 + $0x18] sm:$0xff]
      %vm3568 = vcmask 130048
      %v3570 = vsel %vm3568, %v3530, 0
      %3572 = vmatpush.msra.mxu0 0.0
      %3573 = vmatpush.msra.mxu0 0.0
      %3574 = vmatpush.msra.mxu0 0.0
      %3575 = vmatpush.msra.mxu0 0.0
      %3576 = vmatpush.msra.mxu0 0.0
      %3577 = vmatpush.msra.mxu0 0.0
      %3578 = vmatpush.msra.mxu0 0.0
      %3579 = vmatpush.msra.mxu0 0.0
      %3580 = vmatpush.msra.mxu0 0.0
      %3581 = vmatpush.msra.mxu0 0.0
      %3582 = vmatpush.msra.mxu0 0.0
      %3583 = vmatpush.msra.mxu0 0.0
      %3584 = vmatpush.msra.mxu0 0.0
      %3585 = vmatpush.msra.mxu0 0.0
      %3586 = vmatpush.msra.mxu0 %v3566
      %3587 = vmatpush.msra.mxu0 %v3564
      %3588 = vmatmul.f32.gmra.mxu0 %v3570
      %v3589 = vpop.f32.mrf.mxu0
      %v3590 = vadd.f32 0.0, %v3589
      %3591 = vdwg.mxu0
      %3592 = vmatpush.msra.mxu0 0.0
      %3593 = vmatpush.msra.mxu0 0.0
      %3594 = vmatpush.msra.mxu0 0.0
      %3595 = vmatpush.msra.mxu0 0.0
      %3596 = vmatpush.msra.mxu0 0.0
      %3597 = vmatpush.msra.mxu0 0.0
      %3598 = vmatpush.msra.mxu0 0.0
      %3599 = vmatpush.msra.mxu0 0.0
      %3600 = vmatpush.msra.mxu0 0.0
      %3601 = vmatpush.msra.mxu0 0.0
      %3602 = vmatpush.msra.mxu0 0.0
      %3603 = vmatpush.msra.mxu0 0.0
      %3604 = vmatpush.msra.mxu0 0.0
      %3605 = vmatpush.msra.mxu0 0.0
      %3606 = vmatpush.msra.mxu0 %v3567
      %3607 = vmatpush.msra.mxu0 %v3565
      %3608 = vmatmul.f32.gmra.mxu0 %v3570
      %v3609 = vpop.f32.mrf.mxu0
      %v3610 = vadd.f32 0.0, %v3609
      %3611 = vdwg.mxu0
      %3612 = vmatpush.msra.mxu0 %v3562
      %3613 = vmatpush.msra.mxu0 %v3560
      %3614 = vmatpush.msra.mxu0 %v3558
      %3615 = vmatpush.msra.mxu0 %v3556
      %3616 = vmatpush.msra.mxu0 %v3554
      %3617 = vmatpush.msra.mxu0 %v3552
      %3618 = vmatpush.msra.mxu0 %v3550
      %3619 = vmatpush.msra.mxu0 %v3548
      %3620 = vmatpush.msra.mxu0 %v3546
      %3621 = vmatpush.msra.mxu0 %v3544
      %3622 = vmatpush.msra.mxu0 %v3542
      %3623 = vmatpush.msra.mxu0 %v3540
      %3624 = vmatpush.msra.mxu0 %v3538
      %3625 = vmatpush.msra.mxu0 %v3536
      %3626 = vmatpush.msra.mxu0 %v3534
      %3627 = vmatpush.msra.mxu0 %v3532
      %3628 = vmatmul.f32.gmra.mxu0 %v3502
      %v3629 = vpop.f32.mrf.mxu0
      %v3630 = vadd.f32 %v3590, %v3629
      %3631 = vdwg.mxu0
      %3632 = vmatpush.msra.mxu0 %v3563
      %3633 = vmatpush.msra.mxu0 %v3561
      %3634 = vmatpush.msra.mxu0 %v3559
      %3635 = vmatpush.msra.mxu0 %v3557
      %3636 = vmatpush.msra.mxu0 %v3555
      %3637 = vmatpush.msra.mxu0 %v3553
      %3638 = vmatpush.msra.mxu0 %v3551
      %3639 = vmatpush.msra.mxu0 %v3549
      %3640 = vmatpush.msra.mxu0 %v3547
      %3641 = vmatpush.msra.mxu0 %v3545
      %3642 = vmatpush.msra.mxu0 %v3543
      %3643 = vmatpush.msra.mxu0 %v3541
      %3644 = vmatpush.msra.mxu0 %v3539
      %3645 = vmatpush.msra.mxu0 %v3537
      %3646 = vmatpush.msra.mxu0 %v3535
      %3647 = vmatpush.msra.mxu0 %v3533
      %3648 = vmatmul.f32.gmra.mxu0 %v3502
      %v3649 = vpop.f32.mrf.mxu0
      %v3650 = vadd.f32 %v3610, %v3649
      %3651 = vdwg.mxu0
      %v3653 = vperm.slane %v3355, 0
      %v3654 = vperm.slane %v3355, 1
      %v3657 = vadd.f32 %v3630, %v3653
      %v3658 = vadd.f32 %v3650, %v3654
      %v3659 = vmax.f32 %v3657, 0.0
      %v3660 = vmax.f32 %v3658, 0.0
      %v3661 = vld [vmem:[%s10] sm:$0xff]
      %v3662 = vld [vmem:[%s10 + $0x8] sm:$0xff]
      %v3663 = vld [vmem:[%s10 + $0x10] sm:$0xff]
      %v3664 = vld [vmem:[%s10 + $0x18] sm:$0xff]
      %v3665 = vld [vmem:[%s10 + $0x20] sm:$0xff]
      %v3666 = vld [vmem:[%s10 + $0x28] sm:$0xff]
      %v3667 = vld [vmem:[%s10 + $0x30] sm:$0xff]
      %v3668 = vld [vmem:[%s10 + $0x38] sm:$0xff]
      %v3669 = vld [vmem:[%s10 + $0x40] sm:$0xff]
      %v3670 = vld [vmem:[%s10 + $0x48] sm:$0xff]
      %v3671 = vld [vmem:[%s10 + $0x50] sm:$0xff]
      %v3672 = vld [vmem:[%s10 + $0x58] sm:$0xff]
      %v3673 = vld [vmem:[%s10 + $0x60] sm:$0xff]
      %v3674 = vld [vmem:[%s10 + $0x68] sm:$0xff]
      %v3675 = vld [vmem:[%s10 + $0x70] sm:$0xff]
      %v3676 = vld [vmem:[%s10 + $0x78] sm:$0xff]
      %v3677 = vld [vmem:[%s10 + $0x80] sm:$0xff]
      %v3678 = vld [vmem:[%s10 + $0x88] sm:$0xff]
      %v3680 = vsel %vm3568, %v3660, 0
      %3682 = vmatpush.msra.mxu0 %v3676
      %3683 = vmatpush.msra.mxu0 %v3675
      %3684 = vmatpush.msra.mxu0 %v3674
      %3685 = vmatpush.msra.mxu0 %v3673
      %3686 = vmatpush.msra.mxu0 %v3672
      %3687 = vmatpush.msra.mxu0 %v3671
      %3688 = vmatpush.msra.mxu0 %v3670
      %3689 = vmatpush.msra.mxu0 %v3669
      %3690 = vmatpush.msra.mxu0 %v3668
      %3691 = vmatpush.msra.mxu0 %v3667
      %3692 = vmatpush.msra.mxu0 %v3666
      %3693 = vmatpush.msra.mxu0 %v3665
      %3694 = vmatpush.msra.mxu0 %v3664
      %3695 = vmatpush.msra.mxu0 %v3663
      %3696 = vmatpush.msra.mxu0 %v3662
      %3697 = vmatpush.msra.mxu0 %v3661
      %3698 = vmatmul.f32.gmra.mxu0 %v3659
      %v3699 = vpop.f32.mrf.mxu0
      %v3700 = vadd.f32 %v3356, %v3699
      %3701 = vdwg.mxu0
      %3702 = vmatpush.msra.mxu0 0.0
      %3703 = vmatpush.msra.mxu0 0.0
      %3704 = vmatpush.msra.mxu0 0.0
      %3705 = vmatpush.msra.mxu0 0.0
      %3706 = vmatpush.msra.mxu0 0.0
      %3707 = vmatpush.msra.mxu0 0.0
      %3708 = vmatpush.msra.mxu0 0.0
      %3709 = vmatpush.msra.mxu0 0.0
      %3710 = vmatpush.msra.mxu0 0.0
      %3711 = vmatpush.msra.mxu0 0.0
      %3712 = vmatpush.msra.mxu0 0.0
      %3713 = vmatpush.msra.mxu0 0.0
      %3714 = vmatpush.msra.mxu0 0.0
      %3715 = vmatpush.msra.mxu0 0.0
      %3716 = vmatpush.msra.mxu0 %v3678
      %3717 = vmatpush.msra.mxu0 %v3677
      %3718 = vmatmul.f32.gmra.mxu0 %v3680
      %v3719 = vpop.f32.mrf.mxu0
      %v3720 = vadd.f32 %v3700, %v3719
      %3721 = vdwg.mxu0
      %vm3722 = vcmask 15360
      %3723 = vst.msk [vmem:[%s450] sm:$0xff] %vm3722, %v3720
      %p3724 = scmp.lt.s32.totalorder %s23, 1
      %s3725 = scalar_select %p3724, %s23, 1
      %s3726 = smul.addr %s3725, 8
      %s3727 = scalar_lea.vmem %s12, %s3726
      // Predicated region
      $region69: #{tpu_custom_call.1} parent=67 // pred_check
        %p3728 = pneg %p308
      $region70: #{tpu_custom_call.1} parent=67 // pred_check_branch
        %3730 = sbr.rel (%p3728) target = $region72
      $region71: #{tpu_custom_call.1} parent=67 // pred_region
        _
      $region72: #{tpu_custom_call.1} parent=67 // pred_fallthru
        _
    $region68: #{tpu_custom_call.1} parent=5 // pred_fallthru
      _
    %p3731 = scmp.le.s32.totalorder 2, %s18
    // Predicated region
    $region73: #{tpu_custom_call.1} parent=5 // pred_check
      %p3732 = pneg %p3731
    $region74: #{tpu_custom_call.1} parent=5 // pred_check_branch
      %3734 = sbr.rel (%p3732) target = $region76
    $region75: #{tpu_custom_call.1} parent=5 // pred_region
      %s3735 = ssub.s32 %s18, 2
      // Predicated region
      $region77: #{tpu_custom_call.1} parent=75 // pred_check
        %p3736 = pneg %p314
      $region78: #{tpu_custom_call.1} parent=75 // pred_check_branch
        %3738 = sbr.rel (%p3736) target = $region80
      $region79: #{tpu_custom_call.1} parent=75 // pred_region
        %p3739 = scmp.lt.s32.totalorder %s24, 1
        %s3740 = scalar_select %p3739, %s24, 1
        %s3741 = smul.addr %s3740, 8
        %s3742 = scalar_lea.vmem %s12, %s3741
      $region80: #{tpu_custom_call.1} parent=75 // pred_fallthru
        _
    $region76: #{tpu_custom_call.1} parent=5 // pred_fallthru
      _
  $region6: #{tpu_custom_call.1} parent=0 // loop_footer
    %s22 = sadd.s32 1, %s18
  $region7: #{tpu_custom_call.1} parent=0 // loop_footer_branch
    %17 = sbr.rel target = $region3
  $region8: #{tpu_custom_call.1} parent=0 // loop_exit
    _

</llo_original>
